<compile_context>
chip_gen: v5e
topology: v5e:2x2
jax: 0.10.0
libtpu: 0.0.40
codegen_flags: <defaults>
</compile_context>

<pallas_src>
import jax
import jax.numpy as jnp
from jax.experimental import pallas as pl
from jax.experimental.pallas import tpu as pltpu

IN_FEATURES = 34 * 34 * 2          # 2312
K_PAD = 2432                       # 19 * 128 — lane/MXU-aligned contraction dim
CHANNELS = 512
HEADS_OUT = 2 * CHANNELS           # merged linear_3 | linear_4 output width
SCALE = 100.0


def _round_up(n, m):
    return ((n + m - 1) // m) * m


def _cdiv(a, b):
    return -(-a // b)


def aux_net_kernel(x_ref, w1_ref, b1_ref, w2_ref, b2_ref, w34_ref, b34_ref,
                   h1_ref, h2_ref):
    # x tile: (TB, K_PAD) bf16 (already cast in the wrapper); accumulate in f32 on MXU.
    x = x_ref[...]

    t1 = jnp.dot(x, w1_ref[...], preferred_element_type=jnp.float32) + b1_ref[...]
    t1 = jnp.maximum(t1, 0.0)

    t2 = jnp.dot(t1.astype(jnp.bfloat16), w2_ref[...],
                 preferred_element_type=jnp.float32) + b2_ref[...]
    t2 = jnp.maximum(t2, 0.0)

    # Merged heads in f32 (scale x100 already folded into w34 / b34).  Kept f32 because
    # sigmoid(100*z) is very steep near z=0 and bf16 rounding here is amplified.
    logits = jnp.dot(t2, w34_ref[...], preferred_element_type=jnp.float32) + b34_ref[...]
    heads = jax.nn.sigmoid(logits)

    # Both 512-wide slices are lane-aligned (4 x 128) -> unmasked stores.
    h1_ref[...] = heads[:, :CHANNELS]
    h2_ref[...] = heads[:, CHANNELS:]


def _resident_spec(shape):
    """BlockSpec for an operand that never changes across the batch grid."""
    kwargs = {}
    if hasattr(pl, "Buffered"):              # single-buffer constant operands
        kwargs["pipeline_mode"] = pl.Buffered(1)
    return pl.BlockSpec(shape, lambda i: (0, 0), **kwargs)


def aux_net_forward(x, p, *, block_b=512):
    """x: (B, 2312) f32. p: prepared params (see prepare_params). Returns (head1, head2)."""
    B, F = x.shape

    # Batch tiling with minimal padding: split into n near-equal tiles, each a multiple
    # of 8 sublanes (e.g. B=257 -> 1 tile of 264, not 512).
    n_tiles = _cdiv(B, block_b)
    tb = _round_up(_cdiv(B, n_tiles), 8)
    b_pad = n_tiles * tb

    # Fuse pad + cast: the x stream is DMA'd as bf16 (halves its HBM/VMEM footprint).
    xp = jnp.pad(x, ((0, b_pad - B), (0, K_PAD - F))).astype(jnp.bfloat16)

    grid = (n_tiles,)
    in_specs = [
        pl.BlockSpec((tb, K_PAD), lambda i: (i, 0)),     # x tile (pipelined, bf16)
        _resident_spec((K_PAD, CHANNELS)),               # w1 (bf16, resident)
        _resident_spec((1, CHANNELS)),                   # b1
        _resident_spec((CHANNELS, CHANNELS)),            # w2 (bf16)
        _resident_spec((1, CHANNELS)),                   # b2
        _resident_spec((CHANNELS, HEADS_OUT)),           # w34 (f32, merged heads)
        _resident_spec((1, HEADS_OUT)),                  # b34
    ]
    out_specs = [
        pl.BlockSpec((tb, CHANNELS), lambda i: (i, 0)),  # head1
        pl.BlockSpec((tb, CHANNELS), lambda i: (i, 0)),  # head2
    ]
    out_shape = [
        jax.ShapeDtypeStruct((b_pad, CHANNELS), jnp.float32),
        jax.ShapeDtypeStruct((b_pad, CHANNELS), jnp.float32),
    ]

    # Only shard the batch grid across TensorCores when there is enough work to
    # amortize the duplicated weight DMA on v7x megacore.
    dims = ("parallel",) if n_tiles >= 4 else ("arbitrary",)

    weight_bytes = sum(int(v.size) * v.dtype.itemsize for v in p.values())
    cost = pl.CostEstimate(
        flops=2 * b_pad * (K_PAD * CHANNELS + CHANNELS * CHANNELS + CHANNELS * HEADS_OUT),
        transcendentals=b_pad * HEADS_OUT,
        bytes_accessed=(weight_bytes
                        + int(xp.size) * xp.dtype.itemsize       # bf16 x stream
                        + 2 * b_pad * CHANNELS * 4),              # two f32 head outputs
    )

    h1, h2 = pl.pallas_call(
        aux_net_kernel,
        out_shape=out_shape,
        grid=grid,
        in_specs=in_specs,
        out_specs=out_specs,
        compiler_params=pltpu.CompilerParams(
            dimension_semantics=dims,
            vmem_limit_bytes=32 << 20,      # v7x-safe; usage at tb=512 is ~20 MiB
        ),
        cost_estimate=cost,
    )(xp, p["w1"], p["b1"], p["w2"], p["b2"], p["w34"], p["b34"])

    return h1[:B], h2[:B]


def init_params(key):
    """PyTorch-style uniform(-1/sqrt(fan_in), 1/sqrt(fan_in)) init.

    Weights stored transposed: (in_features, out_features), f32. Biases (1, out)."""
    def linear_init(k, fan_in, fan_out):
        kw, kb = jax.random.split(k)
        bound = 1.0 / jnp.sqrt(fan_in)
        w = jax.random.uniform(kw, (fan_in, fan_out), jnp.float32, -bound, bound)
        b = jax.random.uniform(kb, (1, fan_out), jnp.float32, -bound, bound)
        return w, b

    k1, k2, k3, k4 = jax.random.split(key, 4)
    w1, b1 = linear_init(k1, IN_FEATURES, CHANNELS)
    w2, b2 = linear_init(k2, CHANNELS, CHANNELS)
    w3, b3 = linear_init(k3, CHANNELS, CHANNELS)
    w4, b4 = linear_init(k4, CHANNELS, CHANNELS)
    return {"w1": w1, "b1": b1, "w2": w2, "b2": b2,
            "w3": w3, "b3": b3, "w4": w4, "b4": b4}


def prepare_params(p):
    """One-time host-side transform: pad K, merge heads, fold scale.

    w1/w2 -> bf16 (halves the dominant weight DMA); w34 kept f32 for the steep
    x100-scaled sigmoid heads."""
    w1 = jnp.pad(p["w1"], ((0, K_PAD - IN_FEATURES), (0, 0))).astype(jnp.bfloat16)
    w2 = p["w2"].astype(jnp.bfloat16)
    w34 = (jnp.concatenate([p["w3"], p["w4"]], axis=1) * SCALE).astype(jnp.float32)
    b34 = (jnp.concatenate([p["b3"], p["b4"]], axis=1) * SCALE).astype(jnp.float32)
    return {"w1": w1, "b1": p["b1"], "w2": w2, "b2": p["b2"],
            "w34": w34, "b34": b34}


def reference_forward(x, p):
    """Pure-JAX reference mirroring the kernel math (same dtypes, f32 accumulate)."""
    xp = jnp.pad(x, ((0, 0), (0, K_PAD - x.shape[1]))).astype(jnp.bfloat16)
    t1 = jax.nn.relu(jnp.dot(xp, p["w1"], preferred_element_type=jnp.float32) + p["b1"])
    t2 = jax.nn.relu(jnp.dot(t1.astype(jnp.bfloat16), p["w2"],
                             preferred_element_type=jnp.float32) + p["b2"])
    logits = jnp.dot(t2, p["w34"], preferred_element_type=jnp.float32) + p["b34"]
    heads = jax.nn.sigmoid(logits)
    return heads[:, :CHANNELS], heads[:, CHANNELS:]


if __name__ == "__main__":
    key = jax.random.PRNGKey(0)
    k_params, k_x = jax.random.split(key)

    params = prepare_params(init_params(k_params))

    # Small batch (single-tile path).
    B = 8
    x = jax.random.normal(k_x, (B, IN_FEATURES), dtype=jnp.float32)
    head1, head2 = aux_net_forward(x, params)
    jax.block_until_ready((head1, head2))

    ref1, ref2 = reference_forward(x, params)
    assert head1.shape == (B, CHANNELS) and head2.shape == (B, CHANNELS)
    # sigmoid(100*z) is steep near z=0; allow small slack for MXU vs XLA accumulation
    # order (layer-3 weights are f32, so this is tight).
    assert jnp.allclose(head1, ref1, atol=5e-3), float(jnp.max(jnp.abs(head1 - ref1)))
    assert jnp.allclose(head2, ref2, atol=5e-3), float(jnp.max(jnp.abs(head2 - ref2)))

    # Ragged batch exercising the multi-tile pipelined path + padding logic.
    B2 = 33
    x2 = jax.random.normal(jax.random.PRNGKey(1), (B2, IN_FEATURES), dtype=jnp.float32)
    h1b, h2b = aux_net_forward(x2, params, block_b=16)
    jax.block_until_ready((h1b, h2b))
    r1b, r2b = reference_forward(x2, params)
    assert h1b.shape == (B2, CHANNELS) and h2b.shape == (B2, CHANNELS)
    assert jnp.allclose(h1b, r1b, atol=5e-3), float(jnp.max(jnp.abs(h1b - r1b)))
    assert jnp.allclose(h2b, r2b, atol=5e-3), float(jnp.max(jnp.abs(h2b - r2b)))

    print("KERNEL_OK")
</pallas_src>

<mosaic_0001>
module attributes {stable_mosaic.version = 11 : i64} {
  func.func @aux_net_kernel(%arg0: i32, %arg1: memref<8x2432xbf16, #tpu.memory_space<vmem>>, %arg2: memref<2432x512xbf16, #tpu.memory_space<vmem>>, %arg3: memref<1x512xf32, #tpu.memory_space<vmem>>, %arg4: memref<512x512xbf16, #tpu.memory_space<vmem>>, %arg5: memref<1x512xf32, #tpu.memory_space<vmem>>, %arg6: memref<512x1024xf32, #tpu.memory_space<vmem>>, %arg7: memref<1x1024xf32, #tpu.memory_space<vmem>>, %arg8: memref<8x512xf32, #tpu.memory_space<vmem>>, %arg9: memref<8x512xf32, #tpu.memory_space<vmem>>) attributes {dimension_semantics = [#tpu.dimension_semantics<arbitrary>], iteration_bounds = array<i64: 1>, scalar_prefetch = 0 : i64, scratch_operands = 0 : i64, tpu.core_type = #tpu.core_type<tc>, window_params = [{transform_indices = @transform_0, window_bounds = array<i64: 8, 2432>}, {pipeline_mode = #tpu.pipeline_mode<synchronous>, transform_indices = @transform_1, window_bounds = array<i64: 2432, 512>}, {pipeline_mode = #tpu.pipeline_mode<synchronous>, transform_indices = @transform_2, window_bounds = array<i64: 1, 512>}, {pipeline_mode = #tpu.pipeline_mode<synchronous>, transform_indices = @transform_3, window_bounds = array<i64: 512, 512>}, {pipeline_mode = #tpu.pipeline_mode<synchronous>, transform_indices = @transform_4, window_bounds = array<i64: 1, 512>}, {pipeline_mode = #tpu.pipeline_mode<synchronous>, transform_indices = @transform_5, window_bounds = array<i64: 512, 1024>}, {pipeline_mode = #tpu.pipeline_mode<synchronous>, transform_indices = @transform_6, window_bounds = array<i64: 1, 1024>}, {transform_indices = @transform_7, window_bounds = array<i64: 8, 512>}, {transform_indices = @transform_8, window_bounds = array<i64: 8, 512>}]} {
    %c0 = arith.constant 0 : index
    %c0_0 = arith.constant 0 : index
    %0 = vector.load %arg1[%c0, %c0_0] : memref<8x2432xbf16, #tpu.memory_space<vmem>>, vector<8x2432xbf16>
    %c0_1 = arith.constant 0 : index
    %c0_2 = arith.constant 0 : index
    %1 = vector.load %arg2[%c0_1, %c0_2] : memref<2432x512xbf16, #tpu.memory_space<vmem>>, vector<2432x512xbf16>
    %cst = arith.constant dense<0.000000e+00> : vector<8x512xf32>
    %2 = tpu.matmul %0, %1, %cst {dimension_numbers = #tpu.dot_dimension_numbers<[1], [0], [0], [1], [0, 0, 1, 1], [], []>} : vector<8x2432xbf16>, vector<2432x512xbf16>, vector<8x512xf32> -> vector<8x512xf32>
    %c0_3 = arith.constant 0 : index
    %c0_4 = arith.constant 0 : index
    %3 = vector.load %arg3[%c0_3, %c0_4] : memref<1x512xf32, #tpu.memory_space<vmem>>, vector<1x512xf32>
    %4 = vector.broadcast %3 : vector<1x512xf32> to vector<8x512xf32>
    %5 = arith.addf %2, %4 : vector<8x512xf32>
    %cst_5 = arith.constant 0.000000e+00 : f32
    %6 = vector.broadcast %cst_5 : f32 to vector<8x512xf32>
    %7 = arith.maximumf %5, %6 : vector<8x512xf32>
    %8 = arith.truncf %7 : vector<8x512xf32> to vector<8x512xbf16>
    %c0_6 = arith.constant 0 : index
    %c0_7 = arith.constant 0 : index
    %9 = vector.load %arg4[%c0_6, %c0_7] : memref<512x512xbf16, #tpu.memory_space<vmem>>, vector<512x512xbf16>
    %cst_8 = arith.constant dense<0.000000e+00> : vector<8x512xf32>
    %10 = tpu.matmul %8, %9, %cst_8 {dimension_numbers = #tpu.dot_dimension_numbers<[1], [0], [0], [1], [0, 0, 1, 1], [], []>} : vector<8x512xbf16>, vector<512x512xbf16>, vector<8x512xf32> -> vector<8x512xf32>
    %c0_9 = arith.constant 0 : index
    %c0_10 = arith.constant 0 : index
    %11 = vector.load %arg5[%c0_9, %c0_10] : memref<1x512xf32, #tpu.memory_space<vmem>>, vector<1x512xf32>
    %12 = vector.broadcast %11 : vector<1x512xf32> to vector<8x512xf32>
    %13 = arith.addf %10, %12 : vector<8x512xf32>
    %cst_11 = arith.constant 0.000000e+00 : f32
    %14 = vector.broadcast %cst_11 : f32 to vector<8x512xf32>
    %15 = arith.maximumf %13, %14 : vector<8x512xf32>
    %c0_12 = arith.constant 0 : index
    %c0_13 = arith.constant 0 : index
    %16 = vector.load %arg6[%c0_12, %c0_13] : memref<512x1024xf32, #tpu.memory_space<vmem>>, vector<512x1024xf32>
    %cst_14 = arith.constant dense<0.000000e+00> : vector<8x1024xf32>
    %17 = tpu.matmul %15, %16, %cst_14 {dimension_numbers = #tpu.dot_dimension_numbers<[1], [0], [0], [1], [0, 0, 1, 1], [], []>} : vector<8x512xf32>, vector<512x1024xf32>, vector<8x1024xf32> -> vector<8x1024xf32>
    %c0_15 = arith.constant 0 : index
    %c0_16 = arith.constant 0 : index
    %18 = vector.load %arg7[%c0_15, %c0_16] : memref<1x1024xf32, #tpu.memory_space<vmem>>, vector<1x1024xf32>
    %19 = vector.broadcast %18 : vector<1x1024xf32> to vector<8x1024xf32>
    %20 = arith.addf %17, %19 : vector<8x1024xf32>
    %21 = arith.negf %20 : vector<8x1024xf32>
    %22 = math.exp %21 : vector<8x1024xf32>
    %cst_17 = arith.constant 1.000000e+00 : f32
    %23 = vector.broadcast %cst_17 : f32 to vector<8x1024xf32>
    %24 = arith.addf %23, %22 : vector<8x1024xf32>
    %25 = arith.divf %23, %24 : vector<8x1024xf32>
    %26 = vector.extract_strided_slice %25 {offsets = [0, 0], sizes = [8, 512], strides = [1, 1]} : vector<8x1024xf32> to vector<8x512xf32>
    %c0_18 = arith.constant 0 : index
    %c0_19 = arith.constant 0 : index
    %27 = vector.load %arg8[%c0_18, %c0_19] : memref<8x512xf32, #tpu.memory_space<vmem>>, vector<8x512xf32>
    tpu.vector_store %arg8[%c0_18, %c0_19], %26 {strides = array<i32>} : memref<8x512xf32, #tpu.memory_space<vmem>>, vector<8x512xf32>,
    %28 = vector.extract_strided_slice %25 {offsets = [0, 512], sizes = [8, 512], strides = [1, 1]} : vector<8x1024xf32> to vector<8x512xf32>
    %c0_20 = arith.constant 0 : index
    %c0_21 = arith.constant 0 : index
    %29 = vector.load %arg9[%c0_20, %c0_21] : memref<8x512xf32, #tpu.memory_space<vmem>>, vector<8x512xf32>
    tpu.vector_store %arg9[%c0_20, %c0_21], %28 {strides = array<i32>} : memref<8x512xf32, #tpu.memory_space<vmem>>, vector<8x512xf32>,
    return
  }
  func.func @transform_0(%arg0: i32) -> (i32, i32) {
    %c0_i32 = arith.constant 0 : i32
    %c0_i32_0 = arith.constant 0 : i32
    return %arg0, %c0_i32 : i32, i32
  }
  func.func @transform_1(%arg0: i32) -> (i32, i32) {
    %c0_i32 = arith.constant 0 : i32
    %c0_i32_0 = arith.constant 0 : i32
    %c0_i32_1 = arith.constant 0 : i32
    return %c0_i32, %c0_i32_0 : i32, i32
  }
  func.func @transform_2(%arg0: i32) -> (i32, i32) {
    %c0_i32 = arith.constant 0 : i32
    %c0_i32_0 = arith.constant 0 : i32
    %c0_i32_1 = arith.constant 0 : i32
    return %c0_i32, %c0_i32_0 : i32, i32
  }
  func.func @transform_3(%arg0: i32) -> (i32, i32) {
    %c0_i32 = arith.constant 0 : i32
    %c0_i32_0 = arith.constant 0 : i32
    %c0_i32_1 = arith.constant 0 : i32
    return %c0_i32, %c0_i32_0 : i32, i32
  }
  func.func @transform_4(%arg0: i32) -> (i32, i32) {
    %c0_i32 = arith.constant 0 : i32
    %c0_i32_0 = arith.constant 0 : i32
    %c0_i32_1 = arith.constant 0 : i32
    return %c0_i32, %c0_i32_0 : i32, i32
  }
  func.func @transform_5(%arg0: i32) -> (i32, i32) {
    %c0_i32 = arith.constant 0 : i32
    %c0_i32_0 = arith.constant 0 : i32
    %c0_i32_1 = arith.constant 0 : i32
    return %c0_i32, %c0_i32_0 : i32, i32
  }
  func.func @transform_6(%arg0: i32) -> (i32, i32) {
    %c0_i32 = arith.constant 0 : i32
    %c0_i32_0 = arith.constant 0 : i32
    %c0_i32_1 = arith.constant 0 : i32
    return %c0_i32, %c0_i32_0 : i32, i32
  }
  func.func @transform_7(%arg0: i32) -> (i32, i32) {
    %c0_i32 = arith.constant 0 : i32
    %c0_i32_0 = arith.constant 0 : i32
    return %arg0, %c0_i32 : i32, i32
  }
  func.func @transform_8(%arg0: i32) -> (i32, i32) {
    %c0_i32 = arith.constant 0 : i32
    %c0_i32_0 = arith.constant 0 : i32
    return %arg0, %c0_i32 : i32, i32
  }
}

</mosaic_0001>

<llo_original>
// kernel: tpu_custom_call.1
$region0: #{tpu_custom_call.1}
  #allocation0 [shape = 'u32[]', space=smem, size = 0x4, offset = 0x4, fixed_abs, tag = 'smem constant byte address 0x4 - core index']
  #allocation1 [shape = 'u32[72,128]{1,0:T(1,128)}', space=vmem, size = 0x9000, scoped, tag = 'internal scratch']
  %s0 = inlined_call_operand.hbm [shape: bf16[8,2432], index: 0, kind: input, shape index: {}]
  %s1 = inlined_call_operand.hbm [shape: bf16[2432,512], index: 1, kind: input, shape index: {}]
  %s2 = inlined_call_operand.hbm [shape: f32[1,512], index: 2, kind: input, shape index: {}]
  %s3 = inlined_call_operand.hbm [shape: bf16[512,512], index: 3, kind: input, shape index: {}]
  %s4 = inlined_call_operand.hbm [shape: f32[1,512], index: 4, kind: input, shape index: {}]
  %s5 = inlined_call_operand.hbm [shape: f32[512,1024], index: 5, kind: input, shape index: {}]
  %s6 = inlined_call_operand.hbm [shape: f32[1,1024], index: 6, kind: input, shape index: {}]
  %s7 = inlined_call_operand.hbm [shape: f32[8,512], index: 7, kind: output, shape index: {0}]
  %s8 = inlined_call_operand.hbm [shape: f32[8,512], index: 8, kind: output, shape index: {1}]
  %9 = xla_tuple %s7, %s8
  %s10 = sld [smem:[#allocation0]]
  $region74: #{tpu_custom_call.1} parent=0
    _
  %s12 = ssub.s32 1, %s10
  %s13 = scalar_select 0, %s12, %s10
  $region1: #{tpu_custom_call.1} parent=0
    #allocation2 [shape = 'u8[38912]{0}', space=vmem, size = 0x9800, scoped, tag = 'input window, operand 0, single buffered']
    #allocation3 [shape = 's32[1]{0}', space=sflag, size = 0x4, scoped, tag = 'scoped memory for tpu_custom_call.1']
    #allocation4 [shape = 's32[1]{0}', space=sflag, size = 0x4, scoped, tag = 'scoped memory for tpu_custom_call.1']
    #allocation5 [shape = 'u8[2490368]{0}', space=vmem, size = 0x260000, scoped, tag = 'input window, operand 1, single buffered']
    #allocation6 [shape = 's32[1]{0}', space=sflag, size = 0x4, scoped, tag = 'scoped memory for tpu_custom_call.1']
    #allocation7 [shape = 'u8[2048]{0}', space=vmem, size = 0x800, scoped, tag = 'input window, operand 2, single buffered']
    #allocation8 [shape = 'u8[524288]{0}', space=vmem, size = 0x80000, scoped, tag = 'input window, operand 3, single buffered']
    #allocation9 [shape = 's32[1]{0}', space=sflag, size = 0x4, scoped, tag = 'scoped memory for tpu_custom_call.1']
    #allocation10 [shape = 'u8[2048]{0}', space=vmem, size = 0x800, scoped, tag = 'input window, operand 4, single buffered']
    #allocation11 [shape = 'u8[2097152]{0}', space=vmem, size = 0x200000, scoped, tag = 'input window, operand 5, single buffered']
    #allocation12 [shape = 's32[1]{0}', space=sflag, size = 0x4, scoped, tag = 'scoped memory for tpu_custom_call.1']
    #allocation13 [shape = 'u8[4096]{0}', space=vmem, size = 0x1000, scoped, tag = 'input window, operand 6, single buffered']
    #allocation14 [shape = 'u8[16384]{0}', space=vmem, size = 0x4000, scoped, tag = 'output window, operand 0, single buffered']
    #allocation15 [shape = 'u8[16384]{0}', space=vmem, size = 0x4000, scoped, tag = 'output window, operand 1, single buffered']
    #allocation16 [shape = 's32[1]{0}', space=sflag, size = 0x4, scoped, tag = 'scoped memory for tpu_custom_call.1']
    %14 = vsyncpa [#allocation3], 0
    %15 = vsyncpa [#allocation6], 0
    %16 = vsyncpa [#allocation9], 0
    %17 = vsyncpa [#allocation12], 0
    %18 = vsyncpa [#allocation4], 0
    %19 = vsyncpa [#allocation16], 0
    // Predicated region
    $region2: #{tpu_custom_call.1} parent=1 // pred_check
      _
    $region3: #{tpu_custom_call.1} parent=1 // pred_check_branch
      %21 = sbr.rel (0) target = $region5
    $region4: #{tpu_custom_call.1} parent=1 // pred_region
      %23 = vsyncadd [#allocation3], 0
      %s25 = sshll.u32 %s0, 4
      %s26 = int_to_ptr.hbm [resolvable:$true] %s25
      %s27 = sshll.u32 [#allocation2], 4
      %s28 = int_to_ptr.vmem [resolvable:$true] %s27
      %30 = dma.hbm_to_vmem [thread:$0]  %s26, 1216, %s28, [#allocation3]
    $region5: #{tpu_custom_call.1} parent=1 // pred_fallthru
      _
    // Predicated region
    $region6: #{tpu_custom_call.1} parent=1 // pred_check
      _
    $region7: #{tpu_custom_call.1} parent=1 // pred_check_branch
      %32 = sbr.rel (0) target = $region9
    $region8: #{tpu_custom_call.1} parent=1 // pred_region
      %34 = vsyncadd [#allocation6], 0
      %s35 = sshll.u32 %s1, 4
      %s36 = int_to_ptr.hbm [resolvable:$true] %s35
      %s37 = sshll.u32 [#allocation5], 4
      %s38 = int_to_ptr.vmem [resolvable:$true] %s37
      %43 = dma.hbm_to_vmem [thread:$0]  %s36, 77824, %s38, [#allocation6], 256, 256, 16
    $region9: #{tpu_custom_call.1} parent=1 // pred_fallthru
      _
    // Predicated region
    $region10: #{tpu_custom_call.1} parent=1 // pred_check
      _
    $region11: #{tpu_custom_call.1} parent=1 // pred_check_branch
      %45 = sbr.rel (0) target = $region13
    $region12: #{tpu_custom_call.1} parent=1 // pred_region
      %47 = vsyncadd [#allocation6], 0
      %s49 = sshll.u32 %s2, 4
      %s50 = int_to_ptr.hbm [resolvable:$true] %s49
      %s51 = sshll.u32 [#allocation7], 4
      %s52 = int_to_ptr.vmem [resolvable:$true] %s51
      %54 = dma.hbm_to_vmem [thread:$0]  %s50, 64, %s52, [#allocation6]
    $region13: #{tpu_custom_call.1} parent=1 // pred_fallthru
      _
    // Predicated region
    $region14: #{tpu_custom_call.1} parent=1 // pred_check
      _
    $region15: #{tpu_custom_call.1} parent=1 // pred_check_branch
      %56 = sbr.rel (0) target = $region17
    $region16: #{tpu_custom_call.1} parent=1 // pred_region
      %58 = vsyncadd [#allocation9], 0
      %s59 = sshll.u32 %s3, 4
      %s60 = int_to_ptr.hbm [resolvable:$true] %s59
      %s61 = sshll.u32 [#allocation8], 4
      %s62 = int_to_ptr.vmem [resolvable:$true] %s61
      %67 = dma.hbm_to_vmem [thread:$0]  %s60, 16384, %s62, [#allocation9], 256, 256, 16
    $region17: #{tpu_custom_call.1} parent=1 // pred_fallthru
      _
    // Predicated region
    $region18: #{tpu_custom_call.1} parent=1 // pred_check
      _
    $region19: #{tpu_custom_call.1} parent=1 // pred_check_branch
      %69 = sbr.rel (0) target = $region21
    $region20: #{tpu_custom_call.1} parent=1 // pred_region
      %71 = vsyncadd [#allocation9], 0
      %s73 = sshll.u32 %s4, 4
      %s74 = int_to_ptr.hbm [resolvable:$true] %s73
      %s75 = sshll.u32 [#allocation10], 4
      %s76 = int_to_ptr.vmem [resolvable:$true] %s75
      %78 = dma.hbm_to_vmem [thread:$0]  %s74, 64, %s76, [#allocation9]
    $region21: #{tpu_custom_call.1} parent=1 // pred_fallthru
      _
    // Predicated region
    $region22: #{tpu_custom_call.1} parent=1 // pred_check
      _
    $region23: #{tpu_custom_call.1} parent=1 // pred_check_branch
      %80 = sbr.rel (0) target = $region25
    $region24: #{tpu_custom_call.1} parent=1 // pred_region
      %82 = vsyncadd [#allocation12], 0
      %s83 = sshll.u32 %s5, 4
      %s84 = int_to_ptr.hbm [resolvable:$true] %s83
      %s85 = sshll.u32 [#allocation11], 4
      %s86 = int_to_ptr.vmem [resolvable:$true] %s85
      %91 = dma.hbm_to_vmem [thread:$0]  %s84, 65536, %s86, [#allocation12], 1024, 1024, 64
    $region25: #{tpu_custom_call.1} parent=1 // pred_fallthru
      _
    // Predicated region
    $region26: #{tpu_custom_call.1} parent=1 // pred_check
      _
    $region27: #{tpu_custom_call.1} parent=1 // pred_check_branch
      %93 = sbr.rel (0) target = $region29
    $region28: #{tpu_custom_call.1} parent=1 // pred_region
      %95 = vsyncadd [#allocation12], 0
      %s97 = sshll.u32 %s6, 4
      %s98 = int_to_ptr.hbm [resolvable:$true] %s97
      %s99 = sshll.u32 [#allocation13], 4
      %s100 = int_to_ptr.vmem [resolvable:$true] %s99
      %102 = dma.hbm_to_vmem [thread:$0]  %s98, 128, %s100, [#allocation12]
    $region29: #{tpu_custom_call.1} parent=1 // pred_fallthru
      _
    // Predicated region
    $region30: #{tpu_custom_call.1} parent=1 // pred_check
      _
    $region31: #{tpu_custom_call.1} parent=1 // pred_check_branch
      %104 = sbr.rel (0) target = $region33
    $region32: #{tpu_custom_call.1} parent=1 // pred_region
      %106 = dma.done [#allocation3], 1216
    $region33: #{tpu_custom_call.1} parent=1 // pred_fallthru
      _
    // Predicated region
    $region34: #{tpu_custom_call.1} parent=1 // pred_check
      _
    $region35: #{tpu_custom_call.1} parent=1 // pred_check_branch
      %108 = sbr.rel (0) target = $region37
    $region36: #{tpu_custom_call.1} parent=1 // pred_region
      %110 = dma.done [#allocation6], 77824
    $region37: #{tpu_custom_call.1} parent=1 // pred_fallthru
      _
    // Predicated region
    $region38: #{tpu_custom_call.1} parent=1 // pred_check
      _
    $region39: #{tpu_custom_call.1} parent=1 // pred_check_branch
      %112 = sbr.rel (0) target = $region41
    $region40: #{tpu_custom_call.1} parent=1 // pred_region
      %114 = dma.done [#allocation6], 64
    $region41: #{tpu_custom_call.1} parent=1 // pred_fallthru
      _
    // Predicated region
    $region42: #{tpu_custom_call.1} parent=1 // pred_check
      _
    $region43: #{tpu_custom_call.1} parent=1 // pred_check_branch
      %116 = sbr.rel (0) target = $region45
    $region44: #{tpu_custom_call.1} parent=1 // pred_region
      %118 = dma.done [#allocation9], 16384
    $region45: #{tpu_custom_call.1} parent=1 // pred_fallthru
      _
    // Predicated region
    $region46: #{tpu_custom_call.1} parent=1 // pred_check
      _
    $region47: #{tpu_custom_call.1} parent=1 // pred_check_branch
      %120 = sbr.rel (0) target = $region49
    $region48: #{tpu_custom_call.1} parent=1 // pred_region
      %122 = dma.done [#allocation9], 64
    $region49: #{tpu_custom_call.1} parent=1 // pred_fallthru
      _
    // Predicated region
    $region50: #{tpu_custom_call.1} parent=1 // pred_check
      _
    $region51: #{tpu_custom_call.1} parent=1 // pred_check_branch
      %124 = sbr.rel (0) target = $region53
    $region52: #{tpu_custom_call.1} parent=1 // pred_region
      %126 = dma.done [#allocation12], 65536
    $region53: #{tpu_custom_call.1} parent=1 // pred_fallthru
      _
    // Predicated region
    $region54: #{tpu_custom_call.1} parent=1 // pred_check
      _
    $region55: #{tpu_custom_call.1} parent=1 // pred_check_branch
      %128 = sbr.rel (0) target = $region57
    $region56: #{tpu_custom_call.1} parent=1 // pred_region
      %130 = dma.done [#allocation12], 128
    $region57: #{tpu_custom_call.1} parent=1 // pred_fallthru
      _
    %v131 = vld [vmem:[#allocation2] sm:$0xff]
    %v132 = vld [vmem:[#allocation2 + $0x8] sm:$0xff]
    %v133 = vld [vmem:[#allocation2 + $0x10] sm:$0xff]
    %v134 = vld [vmem:[#allocation2 + $0x18] sm:$0xff]
    %v135 = vld [vmem:[#allocation2 + $0x20] sm:$0xff]
    %v136 = vld [vmem:[#allocation2 + $0x28] sm:$0xff]
    %v137 = vld [vmem:[#allocation2 + $0x30] sm:$0xff]
    %v138 = vld [vmem:[#allocation2 + $0x38] sm:$0xff]
    %v139 = vld [vmem:[#allocation2 + $0x40] sm:$0xff]
    %v140 = vld [vmem:[#allocation2 + $0x48] sm:$0xf]
    %v141 = vld [vmem:[#allocation5] sm:$0xff]
    %v142 = vld [vmem:[#allocation5 + $0x8] sm:$0xff]
    %v143 = vld [vmem:[#allocation5 + $0x10] sm:$0xff]
    %v144 = vld [vmem:[#allocation5 + $0x18] sm:$0xff]
    %v145 = vld [vmem:[#allocation5 + $0x20] sm:$0xff]
    %v146 = vld [vmem:[#allocation5 + $0x28] sm:$0xff]
    %v147 = vld [vmem:[#allocation5 + $0x30] sm:$0xff]
    %v148 = vld [vmem:[#allocation5 + $0x38] sm:$0xff]
    %v149 = vld [vmem:[#allocation5 + $0x40] sm:$0xff]
    %v150 = vld [vmem:[#allocation5 + $0x48] sm:$0xff]
    %v151 = vld [vmem:[#allocation5 + $0x50] sm:$0xff]
    %v152 = vld [vmem:[#allocation5 + $0x58] sm:$0xff]
    %v153 = vld [vmem:[#allocation5 + $0x60] sm:$0xff]
    %v154 = vld [vmem:[#allocation5 + $0x68] sm:$0xff]
    %v155 = vld [vmem:[#allocation5 + $0x70] sm:$0xff]
    %v156 = vld [vmem:[#allocation5 + $0x78] sm:$0xff]
    %v157 = vld [vmem:[#allocation5 + $0x80] sm:$0xff]
    %v158 = vld [vmem:[#allocation5 + $0x88] sm:$0xff]
    %v159 = vld [vmem:[#allocation5 + $0x90] sm:$0xff]
    %v160 = vld [vmem:[#allocation5 + $0x98] sm:$0xff]
    %v161 = vld [vmem:[#allocation5 + $0xa0] sm:$0xff]
    %v162 = vld [vmem:[#allocation5 + $0xa8] sm:$0xff]
    %v163 = vld [vmem:[#allocation5 + $0xb0] sm:$0xff]
    %v164 = vld [vmem:[#allocation5 + $0xb8] sm:$0xff]
    %v165 = vld [vmem:[#allocation5 + $0xc0] sm:$0xff]
    %v166 = vld [vmem:[#allocation5 + $0xc8] sm:$0xff]
    %v167 = vld [vmem:[#allocation5 + $0xd0] sm:$0xff]
    %v168 = vld [vmem:[#allocation5 + $0xd8] sm:$0xff]
    %v169 = vld [vmem:[#allocation5 + $0xe0] sm:$0xff]
    %v170 = vld [vmem:[#allocation5 + $0xe8] sm:$0xff]
    %v171 = vld [vmem:[#allocation5 + $0xf0] sm:$0xff]
    %v172 = vld [vmem:[#allocation5 + $0xf8] sm:$0xff]
    %v173 = vld [vmem:[#allocation5 + $0x100] sm:$0xff]
    %v174 = vld [vmem:[#allocation5 + $0x108] sm:$0xff]
    %v175 = vld [vmem:[#allocation5 + $0x110] sm:$0xff]
    %v176 = vld [vmem:[#allocation5 + $0x118] sm:$0xff]
    %v177 = vld [vmem:[#allocation5 + $0x120] sm:$0xff]
    %v178 = vld [vmem:[#allocation5 + $0x128] sm:$0xff]
    %v179 = vld [vmem:[#allocation5 + $0x130] sm:$0xff]
    %v180 = vld [vmem:[#allocation5 + $0x138] sm:$0xff]
    %v181 = vld [vmem:[#allocation5 + $0x140] sm:$0xff]
    %v182 = vld [vmem:[#allocation5 + $0x148] sm:$0xff]
    %v183 = vld [vmem:[#allocation5 + $0x150] sm:$0xff]
    %v184 = vld [vmem:[#allocation5 + $0x158] sm:$0xff]
    %v185 = vld [vmem:[#allocation5 + $0x160] sm:$0xff]
    %v186 = vld [vmem:[#allocation5 + $0x168] sm:$0xff]
    %v187 = vld [vmem:[#allocation5 + $0x170] sm:$0xff]
    %v188 = vld [vmem:[#allocation5 + $0x178] sm:$0xff]
    %v189 = vld [vmem:[#allocation5 + $0x180] sm:$0xff]
    %v190 = vld [vmem:[#allocation5 + $0x188] sm:$0xff]
    %v191 = vld [vmem:[#allocation5 + $0x190] sm:$0xff]
    %v192 = vld [vmem:[#allocation5 + $0x198] sm:$0xff]
    %v193 = vld [vmem:[#allocation5 + $0x1a0] sm:$0xff]
    %v194 = vld [vmem:[#allocation5 + $0x1a8] sm:$0xff]
    %v195 = vld [vmem:[#allocation5 + $0x1b0] sm:$0xff]
    %v196 = vld [vmem:[#allocation5 + $0x1b8] sm:$0xff]
    %v197 = vld [vmem:[#allocation5 + $0x1c0] sm:$0xff]
    %v198 = vld [vmem:[#allocation5 + $0x1c8] sm:$0xff]
    %v199 = vld [vmem:[#allocation5 + $0x1d0] sm:$0xff]
    %v200 = vld [vmem:[#allocation5 + $0x1d8] sm:$0xff]
    %v201 = vld [vmem:[#allocation5 + $0x1e0] sm:$0xff]
    %v202 = vld [vmem:[#allocation5 + $0x1e8] sm:$0xff]
    %v203 = vld [vmem:[#allocation5 + $0x1f0] sm:$0xff]
    %v204 = vld [vmem:[#allocation5 + $0x1f8] sm:$0xff]
    %v205 = vld [vmem:[#allocation5 + $0x200] sm:$0xff]
    %v206 = vld [vmem:[#allocation5 + $0x208] sm:$0xff]
    %v207 = vld [vmem:[#allocation5 + $0x210] sm:$0xff]
    %v208 = vld [vmem:[#allocation5 + $0x218] sm:$0xff]
    %v209 = vld [vmem:[#allocation5 + $0x220] sm:$0xff]
    %v210 = vld [vmem:[#allocation5 + $0x228] sm:$0xff]
    %v211 = vld [vmem:[#allocation5 + $0x230] sm:$0xff]
    %v212 = vld [vmem:[#allocation5 + $0x238] sm:$0xff]
    %v213 = vld [vmem:[#allocation5 + $0x240] sm:$0xff]
    %v214 = vld [vmem:[#allocation5 + $0x248] sm:$0xff]
    %v215 = vld [vmem:[#allocation5 + $0x250] sm:$0xff]
    %v216 = vld [vmem:[#allocation5 + $0x258] sm:$0xff]
    %v217 = vld [vmem:[#allocation5 + $0x260] sm:$0xff]
    %v218 = vld [vmem:[#allocation5 + $0x268] sm:$0xff]
    %v219 = vld [vmem:[#allocation5 + $0x270] sm:$0xff]
    %v220 = vld [vmem:[#allocation5 + $0x278] sm:$0xff]
    %v221 = vld [vmem:[#allocation5 + $0x280] sm:$0xff]
    %v222 = vld [vmem:[#allocation5 + $0x288] sm:$0xff]
    %v223 = vld [vmem:[#allocation5 + $0x290] sm:$0xff]
    %v224 = vld [vmem:[#allocation5 + $0x298] sm:$0xff]
    %v225 = vld [vmem:[#allocation5 + $0x2a0] sm:$0xff]
    %v226 = vld [vmem:[#allocation5 + $0x2a8] sm:$0xff]
    %v227 = vld [vmem:[#allocation5 + $0x2b0] sm:$0xff]
    %v228 = vld [vmem:[#allocation5 + $0x2b8] sm:$0xff]
    %v229 = vld [vmem:[#allocation5 + $0x2c0] sm:$0xff]
    %v230 = vld [vmem:[#allocation5 + $0x2c8] sm:$0xff]
    %v231 = vld [vmem:[#allocation5 + $0x2d0] sm:$0xff]
    %v232 = vld [vmem:[#allocation5 + $0x2d8] sm:$0xff]
    %v233 = vld [vmem:[#allocation5 + $0x2e0] sm:$0xff]
    %v234 = vld [vmem:[#allocation5 + $0x2e8] sm:$0xff]
    %v235 = vld [vmem:[#allocation5 + $0x2f0] sm:$0xff]
    %v236 = vld [vmem:[#allocation5 + $0x2f8] sm:$0xff]
    %v237 = vld [vmem:[#allocation5 + $0x300] sm:$0xff]
    %v238 = vld [vmem:[#allocation5 + $0x308] sm:$0xff]
    %v239 = vld [vmem:[#allocation5 + $0x310] sm:$0xff]
    %v240 = vld [vmem:[#allocation5 + $0x318] sm:$0xff]
    %v241 = vld [vmem:[#allocation5 + $0x320] sm:$0xff]
    %v242 = vld [vmem:[#allocation5 + $0x328] sm:$0xff]
    %v243 = vld [vmem:[#allocation5 + $0x330] sm:$0xff]
    %v244 = vld [vmem:[#allocation5 + $0x338] sm:$0xff]
    %v245 = vld [vmem:[#allocation5 + $0x340] sm:$0xff]
    %v246 = vld [vmem:[#allocation5 + $0x348] sm:$0xff]
    %v247 = vld [vmem:[#allocation5 + $0x350] sm:$0xff]
    %v248 = vld [vmem:[#allocation5 + $0x358] sm:$0xff]
    %v249 = vld [vmem:[#allocation5 + $0x360] sm:$0xff]
    %v250 = vld [vmem:[#allocation5 + $0x368] sm:$0xff]
    %v251 = vld [vmem:[#allocation5 + $0x370] sm:$0xff]
    %v252 = vld [vmem:[#allocation5 + $0x378] sm:$0xff]
    %v253 = vld [vmem:[#allocation5 + $0x380] sm:$0xff]
    %v254 = vld [vmem:[#allocation5 + $0x388] sm:$0xff]
    %v255 = vld [vmem:[#allocation5 + $0x390] sm:$0xff]
    %v256 = vld [vmem:[#allocation5 + $0x398] sm:$0xff]
    %v257 = vld [vmem:[#allocation5 + $0x3a0] sm:$0xff]
    %v258 = vld [vmem:[#allocation5 + $0x3a8] sm:$0xff]
    %v259 = vld [vmem:[#allocation5 + $0x3b0] sm:$0xff]
    %v260 = vld [vmem:[#allocation5 + $0x3b8] sm:$0xff]
    %v261 = vld [vmem:[#allocation5 + $0x3c0] sm:$0xff]
    %v262 = vld [vmem:[#allocation5 + $0x3c8] sm:$0xff]
    %v263 = vld [vmem:[#allocation5 + $0x3d0] sm:$0xff]
    %v264 = vld [vmem:[#allocation5 + $0x3d8] sm:$0xff]
    %v265 = vld [vmem:[#allocation5 + $0x3e0] sm:$0xff]
    %v266 = vld [vmem:[#allocation5 + $0x3e8] sm:$0xff]
    %v267 = vld [vmem:[#allocation5 + $0x3f0] sm:$0xff]
    %v268 = vld [vmem:[#allocation5 + $0x3f8] sm:$0xff]
    %v269 = vld [vmem:[#allocation5 + $0x400] sm:$0xff]
    %v270 = vld [vmem:[#allocation5 + $0x408] sm:$0xff]
    %v271 = vld [vmem:[#allocation5 + $0x410] sm:$0xff]
    %v272 = vld [vmem:[#allocation5 + $0x418] sm:$0xff]
    %v273 = vld [vmem:[#allocation5 + $0x420] sm:$0xff]
    %v274 = vld [vmem:[#allocation5 + $0x428] sm:$0xff]
    %v275 = vld [vmem:[#allocation5 + $0x430] sm:$0xff]
    %v276 = vld [vmem:[#allocation5 + $0x438] sm:$0xff]
    %v277 = vld [vmem:[#allocation5 + $0x440] sm:$0xff]
    %v278 = vld [vmem:[#allocation5 + $0x448] sm:$0xff]
    %v279 = vld [vmem:[#allocation5 + $0x450] sm:$0xff]
    %v280 = vld [vmem:[#allocation5 + $0x458] sm:$0xff]
    %v281 = vld [vmem:[#allocation5 + $0x460] sm:$0xff]
    %v282 = vld [vmem:[#allocation5 + $0x468] sm:$0xff]
    %v283 = vld [vmem:[#allocation5 + $0x470] sm:$0xff]
    %v284 = vld [vmem:[#allocation5 + $0x478] sm:$0xff]
    %v285 = vld [vmem:[#allocation5 + $0x480] sm:$0xff]
    %v286 = vld [vmem:[#allocation5 + $0x488] sm:$0xff]
    %v287 = vld [vmem:[#allocation5 + $0x490] sm:$0xff]
    %v288 = vld [vmem:[#allocation5 + $0x498] sm:$0xff]
    %v289 = vld [vmem:[#allocation5 + $0x4a0] sm:$0xff]
    %v290 = vld [vmem:[#allocation5 + $0x4a8] sm:$0xff]
    %v291 = vld [vmem:[#allocation5 + $0x4b0] sm:$0xff]
    %v292 = vld [vmem:[#allocation5 + $0x4b8] sm:$0xff]
    %v293 = vld [vmem:[#allocation5 + $0x4c0] sm:$0xff]
    %v294 = vld [vmem:[#allocation5 + $0x4c8] sm:$0xff]
    %v295 = vld [vmem:[#allocation5 + $0x4d0] sm:$0xff]
    %v296 = vld [vmem:[#allocation5 + $0x4d8] sm:$0xff]
    %v297 = vld [vmem:[#allocation5 + $0x4e0] sm:$0xff]
    %v298 = vld [vmem:[#allocation5 + $0x4e8] sm:$0xff]
    %v299 = vld [vmem:[#allocation5 + $0x4f0] sm:$0xff]
    %v300 = vld [vmem:[#allocation5 + $0x4f8] sm:$0xff]
    %v301 = vld [vmem:[#allocation5 + $0x500] sm:$0xff]
    %v302 = vld [vmem:[#allocation5 + $0x508] sm:$0xff]
    %v303 = vld [vmem:[#allocation5 + $0x510] sm:$0xff]
    %v304 = vld [vmem:[#allocation5 + $0x518] sm:$0xff]
    %v305 = vld [vmem:[#allocation5 + $0x520] sm:$0xff]
    %v306 = vld [vmem:[#allocation5 + $0x528] sm:$0xff]
    %v307 = vld [vmem:[#allocation5 + $0x530] sm:$0xff]
    %v308 = vld [vmem:[#allocation5 + $0x538] sm:$0xff]
    %v309 = vld [vmem:[#allocation5 + $0x540] sm:$0xff]
    %v310 = vld [vmem:[#allocation5 + $0x548] sm:$0xff]
    %v311 = vld [vmem:[#allocation5 + $0x550] sm:$0xff]
    %v312 = vld [vmem:[#allocation5 + $0x558] sm:$0xff]
    %v313 = vld [vmem:[#allocation5 + $0x560] sm:$0xff]
    %v314 = vld [vmem:[#allocation5 + $0x568] sm:$0xff]
    %v315 = vld [vmem:[#allocation5 + $0x570] sm:$0xff]
    %v316 = vld [vmem:[#allocation5 + $0x578] sm:$0xff]
    %v317 = vld [vmem:[#allocation5 + $0x580] sm:$0xff]
    %v318 = vld [vmem:[#allocation5 + $0x588] sm:$0xff]
    %v319 = vld [vmem:[#allocation5 + $0x590] sm:$0xff]
    %v320 = vld [vmem:[#allocation5 + $0x598] sm:$0xff]
    %v321 = vld [vmem:[#allocation5 + $0x5a0] sm:$0xff]
    %v322 = vld [vmem:[#allocation5 + $0x5a8] sm:$0xff]
    %v323 = vld [vmem:[#allocation5 + $0x5b0] sm:$0xff]
    %v324 = vld [vmem:[#allocation5 + $0x5b8] sm:$0xff]
    %v325 = vld [vmem:[#allocation5 + $0x5c0] sm:$0xff]
    %v326 = vld [vmem:[#allocation5 + $0x5c8] sm:$0xff]
    %v327 = vld [vmem:[#allocation5 + $0x5d0] sm:$0xff]
    %v328 = vld [vmem:[#allocation5 + $0x5d8] sm:$0xff]
    %v329 = vld [vmem:[#allocation5 + $0x5e0] sm:$0xff]
    %v330 = vld [vmem:[#allocation5 + $0x5e8] sm:$0xff]
    %v331 = vld [vmem:[#allocation5 + $0x5f0] sm:$0xff]
    %v332 = vld [vmem:[#allocation5 + $0x5f8] sm:$0xff]
    %v333 = vld [vmem:[#allocation5 + $0x600] sm:$0xff]
    %v334 = vld [vmem:[#allocation5 + $0x608] sm:$0xff]
    %v335 = vld [vmem:[#allocation5 + $0x610] sm:$0xff]
    %v336 = vld [vmem:[#allocation5 + $0x618] sm:$0xff]
    %v337 = vld [vmem:[#allocation5 + $0x620] sm:$0xff]
    %v338 = vld [vmem:[#allocation5 + $0x628] sm:$0xff]
    %v339 = vld [vmem:[#allocation5 + $0x630] sm:$0xff]
    %v340 = vld [vmem:[#allocation5 + $0x638] sm:$0xff]
    %v341 = vld [vmem:[#allocation5 + $0x640] sm:$0xff]
    %v342 = vld [vmem:[#allocation5 + $0x648] sm:$0xff]
    %v343 = vld [vmem:[#allocation5 + $0x650] sm:$0xff]
    %v344 = vld [vmem:[#allocation5 + $0x658] sm:$0xff]
    %v345 = vld [vmem:[#allocation5 + $0x660] sm:$0xff]
    %v346 = vld [vmem:[#allocation5 + $0x668] sm:$0xff]
    %v347 = vld [vmem:[#allocation5 + $0x670] sm:$0xff]
    %v348 = vld [vmem:[#allocation5 + $0x678] sm:$0xff]
    %v349 = vld [vmem:[#allocation5 + $0x680] sm:$0xff]
    %v350 = vld [vmem:[#allocation5 + $0x688] sm:$0xff]
    %v351 = vld [vmem:[#allocation5 + $0x690] sm:$0xff]
    %v352 = vld [vmem:[#allocation5 + $0x698] sm:$0xff]
    %v353 = vld [vmem:[#allocation5 + $0x6a0] sm:$0xff]
    %v354 = vld [vmem:[#allocation5 + $0x6a8] sm:$0xff]
    %v355 = vld [vmem:[#allocation5 + $0x6b0] sm:$0xff]
    %v356 = vld [vmem:[#allocation5 + $0x6b8] sm:$0xff]
    %v357 = vld [vmem:[#allocation5 + $0x6c0] sm:$0xff]
    %v358 = vld [vmem:[#allocation5 + $0x6c8] sm:$0xff]
    %v359 = vld [vmem:[#allocation5 + $0x6d0] sm:$0xff]
    %v360 = vld [vmem:[#allocation5 + $0x6d8] sm:$0xff]
    %v361 = vld [vmem:[#allocation5 + $0x6e0] sm:$0xff]
    %v362 = vld [vmem:[#allocation5 + $0x6e8] sm:$0xff]
    %v363 = vld [vmem:[#allocation5 + $0x6f0] sm:$0xff]
    %v364 = vld [vmem:[#allocation5 + $0x6f8] sm:$0xff]
    %v365 = vld [vmem:[#allocation5 + $0x700] sm:$0xff]
    %v366 = vld [vmem:[#allocation5 + $0x708] sm:$0xff]
    %v367 = vld [vmem:[#allocation5 + $0x710] sm:$0xff]
    %v368 = vld [vmem:[#allocation5 + $0x718] sm:$0xff]
    %v369 = vld [vmem:[#allocation5 + $0x720] sm:$0xff]
    %v370 = vld [vmem:[#allocation5 + $0x728] sm:$0xff]
    %v371 = vld [vmem:[#allocation5 + $0x730] sm:$0xff]
    %v372 = vld [vmem:[#allocation5 + $0x738] sm:$0xff]
    %v373 = vld [vmem:[#allocation5 + $0x740] sm:$0xff]
    %v374 = vld [vmem:[#allocation5 + $0x748] sm:$0xff]
    %v375 = vld [vmem:[#allocation5 + $0x750] sm:$0xff]
    %v376 = vld [vmem:[#allocation5 + $0x758] sm:$0xff]
    %v377 = vld [vmem:[#allocation5 + $0x760] sm:$0xff]
    %v378 = vld [vmem:[#allocation5 + $0x768] sm:$0xff]
    %v379 = vld [vmem:[#allocation5 + $0x770] sm:$0xff]
    %v380 = vld [vmem:[#allocation5 + $0x778] sm:$0xff]
    %v381 = vld [vmem:[#allocation5 + $0x780] sm:$0xff]
    %v382 = vld [vmem:[#allocation5 + $0x788] sm:$0xff]
    %v383 = vld [vmem:[#allocation5 + $0x790] sm:$0xff]
    %v384 = vld [vmem:[#allocation5 + $0x798] sm:$0xff]
    %v385 = vld [vmem:[#allocation5 + $0x7a0] sm:$0xff]
    %v386 = vld [vmem:[#allocation5 + $0x7a8] sm:$0xff]
    %v387 = vld [vmem:[#allocation5 + $0x7b0] sm:$0xff]
    %v388 = vld [vmem:[#allocation5 + $0x7b8] sm:$0xff]
    %v389 = vld [vmem:[#allocation5 + $0x7c0] sm:$0xff]
    %v390 = vld [vmem:[#allocation5 + $0x7c8] sm:$0xff]
    %v391 = vld [vmem:[#allocation5 + $0x7d0] sm:$0xff]
    %v392 = vld [vmem:[#allocation5 + $0x7d8] sm:$0xff]
    %v393 = vld [vmem:[#allocation5 + $0x7e0] sm:$0xff]
    %v394 = vld [vmem:[#allocation5 + $0x7e8] sm:$0xff]
    %v395 = vld [vmem:[#allocation5 + $0x7f0] sm:$0xff]
    %v396 = vld [vmem:[#allocation5 + $0x7f8] sm:$0xff]
    %v397 = vld [vmem:[#allocation5 + $0x800] sm:$0xff]
    %v398 = vld [vmem:[#allocation5 + $0x808] sm:$0xff]
    %v399 = vld [vmem:[#allocation5 + $0x810] sm:$0xff]
    %v400 = vld [vmem:[#allocation5 + $0x818] sm:$0xff]
    %v401 = vld [vmem:[#allocation5 + $0x820] sm:$0xff]
    %v402 = vld [vmem:[#allocation5 + $0x828] sm:$0xff]
    %v403 = vld [vmem:[#allocation5 + $0x830] sm:$0xff]
    %v404 = vld [vmem:[#allocation5 + $0x838] sm:$0xff]
    %v405 = vld [vmem:[#allocation5 + $0x840] sm:$0xff]
    %v406 = vld [vmem:[#allocation5 + $0x848] sm:$0xff]
    %v407 = vld [vmem:[#allocation5 + $0x850] sm:$0xff]
    %v408 = vld [vmem:[#allocation5 + $0x858] sm:$0xff]
    %v409 = vld [vmem:[#allocation5 + $0x860] sm:$0xff]
    %v410 = vld [vmem:[#allocation5 + $0x868] sm:$0xff]
    %v411 = vld [vmem:[#allocation5 + $0x870] sm:$0xff]
    %v412 = vld [vmem:[#allocation5 + $0x878] sm:$0xff]
    %v413 = vld [vmem:[#allocation5 + $0x880] sm:$0xff]
    %v414 = vld [vmem:[#allocation5 + $0x888] sm:$0xff]
    %v415 = vld [vmem:[#allocation5 + $0x890] sm:$0xff]
    %v416 = vld [vmem:[#allocation5 + $0x898] sm:$0xff]
    %v417 = vld [vmem:[#allocation5 + $0x8a0] sm:$0xff]
    %v418 = vld [vmem:[#allocation5 + $0x8a8] sm:$0xff]
    %v419 = vld [vmem:[#allocation5 + $0x8b0] sm:$0xff]
    %v420 = vld [vmem:[#allocation5 + $0x8b8] sm:$0xff]
    %v421 = vld [vmem:[#allocation5 + $0x8c0] sm:$0xff]
    %v422 = vld [vmem:[#allocation5 + $0x8c8] sm:$0xff]
    %v423 = vld [vmem:[#allocation5 + $0x8d0] sm:$0xff]
    %v424 = vld [vmem:[#allocation5 + $0x8d8] sm:$0xff]
    %v425 = vld [vmem:[#allocation5 + $0x8e0] sm:$0xff]
    %v426 = vld [vmem:[#allocation5 + $0x8e8] sm:$0xff]
    %v427 = vld [vmem:[#allocation5 + $0x8f0] sm:$0xff]
    %v428 = vld [vmem:[#allocation5 + $0x8f8] sm:$0xff]
    %v429 = vld [vmem:[#allocation5 + $0x900] sm:$0xff]
    %v430 = vld [vmem:[#allocation5 + $0x908] sm:$0xff]
    %v431 = vld [vmem:[#allocation5 + $0x910] sm:$0xff]
    %v432 = vld [vmem:[#allocation5 + $0x918] sm:$0xff]
    %v433 = vld [vmem:[#allocation5 + $0x920] sm:$0xff]
    %v434 = vld [vmem:[#allocation5 + $0x928] sm:$0xff]
    %v435 = vld [vmem:[#allocation5 + $0x930] sm:$0xff]
    %v436 = vld [vmem:[#allocation5 + $0x938] sm:$0xff]
    %v437 = vld [vmem:[#allocation5 + $0x940] sm:$0xff]
    %v438 = vld [vmem:[#allocation5 + $0x948] sm:$0xff]
    %v439 = vld [vmem:[#allocation5 + $0x950] sm:$0xff]
    %v440 = vld [vmem:[#allocation5 + $0x958] sm:$0xff]
    %v441 = vld [vmem:[#allocation5 + $0x960] sm:$0xff]
    %v442 = vld [vmem:[#allocation5 + $0x968] sm:$0xff]
    %v443 = vld [vmem:[#allocation5 + $0x970] sm:$0xff]
    %v444 = vld [vmem:[#allocation5 + $0x978] sm:$0xff]
    %v445 = vld [vmem:[#allocation5 + $0x980] sm:$0xff]
    %v446 = vld [vmem:[#allocation5 + $0x988] sm:$0xff]
    %v447 = vld [vmem:[#allocation5 + $0x990] sm:$0xff]
    %v448 = vld [vmem:[#allocation5 + $0x998] sm:$0xff]
    %v449 = vld [vmem:[#allocation5 + $0x9a0] sm:$0xff]
    %v450 = vld [vmem:[#allocation5 + $0x9a8] sm:$0xff]
    %v451 = vld [vmem:[#allocation5 + $0x9b0] sm:$0xff]
    %v452 = vld [vmem:[#allocation5 + $0x9b8] sm:$0xff]
    %v453 = vld [vmem:[#allocation5 + $0x9c0] sm:$0xff]
    %v454 = vld [vmem:[#allocation5 + $0x9c8] sm:$0xff]
    %v455 = vld [vmem:[#allocation5 + $0x9d0] sm:$0xff]
    %v456 = vld [vmem:[#allocation5 + $0x9d8] sm:$0xff]
    %v457 = vld [vmem:[#allocation5 + $0x9e0] sm:$0xff]
    %v458 = vld [vmem:[#allocation5 + $0x9e8] sm:$0xff]
    %v459 = vld [vmem:[#allocation5 + $0x9f0] sm:$0xff]
    %v460 = vld [vmem:[#allocation5 + $0x9f8] sm:$0xff]
    %v461 = vld [vmem:[#allocation5 + $0xa00] sm:$0xff]
    %v462 = vld [vmem:[#allocation5 + $0xa08] sm:$0xff]
    %v463 = vld [vmem:[#allocation5 + $0xa10] sm:$0xff]
    %v464 = vld [vmem:[#allocation5 + $0xa18] sm:$0xff]
    %v465 = vld [vmem:[#allocation5 + $0xa20] sm:$0xff]
    %v466 = vld [vmem:[#allocation5 + $0xa28] sm:$0xff]
    %v467 = vld [vmem:[#allocation5 + $0xa30] sm:$0xff]
    %v468 = vld [vmem:[#allocation5 + $0xa38] sm:$0xff]
    %v469 = vld [vmem:[#allocation5 + $0xa40] sm:$0xff]
    %v470 = vld [vmem:[#allocation5 + $0xa48] sm:$0xff]
    %v471 = vld [vmem:[#allocation5 + $0xa50] sm:$0xff]
    %v472 = vld [vmem:[#allocation5 + $0xa58] sm:$0xff]
    %v473 = vld [vmem:[#allocation5 + $0xa60] sm:$0xff]
    %v474 = vld [vmem:[#allocation5 + $0xa68] sm:$0xff]
    %v475 = vld [vmem:[#allocation5 + $0xa70] sm:$0xff]
    %v476 = vld [vmem:[#allocation5 + $0xa78] sm:$0xff]
    %v477 = vld [vmem:[#allocation5 + $0xa80] sm:$0xff]
    %v478 = vld [vmem:[#allocation5 + $0xa88] sm:$0xff]
    %v479 = vld [vmem:[#allocation5 + $0xa90] sm:$0xff]
    %v480 = vld [vmem:[#allocation5 + $0xa98] sm:$0xff]
    %v481 = vld [vmem:[#allocation5 + $0xaa0] sm:$0xff]
    %v482 = vld [vmem:[#allocation5 + $0xaa8] sm:$0xff]
    %v483 = vld [vmem:[#allocation5 + $0xab0] sm:$0xff]
    %v484 = vld [vmem:[#allocation5 + $0xab8] sm:$0xff]
    %v485 = vld [vmem:[#allocation5 + $0xac0] sm:$0xff]
    %v486 = vld [vmem:[#allocation5 + $0xac8] sm:$0xff]
    %v487 = vld [vmem:[#allocation5 + $0xad0] sm:$0xff]
    %v488 = vld [vmem:[#allocation5 + $0xad8] sm:$0xff]
    %v489 = vld [vmem:[#allocation5 + $0xae0] sm:$0xff]
    %v490 = vld [vmem:[#allocation5 + $0xae8] sm:$0xff]
    %v491 = vld [vmem:[#allocation5 + $0xaf0] sm:$0xff]
    %v492 = vld [vmem:[#allocation5 + $0xaf8] sm:$0xff]
    %v493 = vld [vmem:[#allocation5 + $0xb00] sm:$0xff]
    %v494 = vld [vmem:[#allocation5 + $0xb08] sm:$0xff]
    %v495 = vld [vmem:[#allocation5 + $0xb10] sm:$0xff]
    %v496 = vld [vmem:[#allocation5 + $0xb18] sm:$0xff]
    %v497 = vld [vmem:[#allocation5 + $0xb20] sm:$0xff]
    %v498 = vld [vmem:[#allocation5 + $0xb28] sm:$0xff]
    %v499 = vld [vmem:[#allocation5 + $0xb30] sm:$0xff]
    %v500 = vld [vmem:[#allocation5 + $0xb38] sm:$0xff]
    %v501 = vld [vmem:[#allocation5 + $0xb40] sm:$0xff]
    %v502 = vld [vmem:[#allocation5 + $0xb48] sm:$0xff]
    %v503 = vld [vmem:[#allocation5 + $0xb50] sm:$0xff]
    %v504 = vld [vmem:[#allocation5 + $0xb58] sm:$0xff]
    %v505 = vld [vmem:[#allocation5 + $0xb60] sm:$0xff]
    %v506 = vld [vmem:[#allocation5 + $0xb68] sm:$0xff]
    %v507 = vld [vmem:[#allocation5 + $0xb70] sm:$0xff]
    %v508 = vld [vmem:[#allocation5 + $0xb78] sm:$0xff]
    %v509 = vld [vmem:[#allocation5 + $0xb80] sm:$0xff]
    %v510 = vld [vmem:[#allocation5 + $0xb88] sm:$0xff]
    %v511 = vld [vmem:[#allocation5 + $0xb90] sm:$0xff]
    %v512 = vld [vmem:[#allocation5 + $0xb98] sm:$0xff]
    %v513 = vld [vmem:[#allocation5 + $0xba0] sm:$0xff]
    %v514 = vld [vmem:[#allocation5 + $0xba8] sm:$0xff]
    %v515 = vld [vmem:[#allocation5 + $0xbb0] sm:$0xff]
    %v516 = vld [vmem:[#allocation5 + $0xbb8] sm:$0xff]
    %v517 = vld [vmem:[#allocation5 + $0xbc0] sm:$0xff]
    %v518 = vld [vmem:[#allocation5 + $0xbc8] sm:$0xff]
    %v519 = vld [vmem:[#allocation5 + $0xbd0] sm:$0xff]
    %v520 = vld [vmem:[#allocation5 + $0xbd8] sm:$0xff]
    %v521 = vld [vmem:[#allocation5 + $0xbe0] sm:$0xff]
    %v522 = vld [vmem:[#allocation5 + $0xbe8] sm:$0xff]
    %v523 = vld [vmem:[#allocation5 + $0xbf0] sm:$0xff]
    %v524 = vld [vmem:[#allocation5 + $0xbf8] sm:$0xff]
    %v525 = vld [vmem:[#allocation5 + $0xc00] sm:$0xff]
    %v526 = vld [vmem:[#allocation5 + $0xc08] sm:$0xff]
    %v527 = vld [vmem:[#allocation5 + $0xc10] sm:$0xff]
    %v528 = vld [vmem:[#allocation5 + $0xc18] sm:$0xff]
    %v529 = vld [vmem:[#allocation5 + $0xc20] sm:$0xff]
    %v530 = vld [vmem:[#allocation5 + $0xc28] sm:$0xff]
    %v531 = vld [vmem:[#allocation5 + $0xc30] sm:$0xff]
    %v532 = vld [vmem:[#allocation5 + $0xc38] sm:$0xff]
    %v533 = vld [vmem:[#allocation5 + $0xc40] sm:$0xff]
    %v534 = vld [vmem:[#allocation5 + $0xc48] sm:$0xff]
    %v535 = vld [vmem:[#allocation5 + $0xc50] sm:$0xff]
    %v536 = vld [vmem:[#allocation5 + $0xc58] sm:$0xff]
    %v537 = vld [vmem:[#allocation5 + $0xc60] sm:$0xff]
    %v538 = vld [vmem:[#allocation5 + $0xc68] sm:$0xff]
    %v539 = vld [vmem:[#allocation5 + $0xc70] sm:$0xff]
    %v540 = vld [vmem:[#allocation5 + $0xc78] sm:$0xff]
    %v541 = vld [vmem:[#allocation5 + $0xc80] sm:$0xff]
    %v542 = vld [vmem:[#allocation5 + $0xc88] sm:$0xff]
    %v543 = vld [vmem:[#allocation5 + $0xc90] sm:$0xff]
    %v544 = vld [vmem:[#allocation5 + $0xc98] sm:$0xff]
    %v545 = vld [vmem:[#allocation5 + $0xca0] sm:$0xff]
    %v546 = vld [vmem:[#allocation5 + $0xca8] sm:$0xff]
    %v547 = vld [vmem:[#allocation5 + $0xcb0] sm:$0xff]
    %v548 = vld [vmem:[#allocation5 + $0xcb8] sm:$0xff]
    %v549 = vld [vmem:[#allocation5 + $0xcc0] sm:$0xff]
    %v550 = vld [vmem:[#allocation5 + $0xcc8] sm:$0xff]
    %v551 = vld [vmem:[#allocation5 + $0xcd0] sm:$0xff]
    %v552 = vld [vmem:[#allocation5 + $0xcd8] sm:$0xff]
    %v553 = vld [vmem:[#allocation5 + $0xce0] sm:$0xff]
    %v554 = vld [vmem:[#allocation5 + $0xce8] sm:$0xff]
    %v555 = vld [vmem:[#allocation5 + $0xcf0] sm:$0xff]
    %v556 = vld [vmem:[#allocation5 + $0xcf8] sm:$0xff]
    %v557 = vld [vmem:[#allocation5 + $0xd00] sm:$0xff]
    %v558 = vld [vmem:[#allocation5 + $0xd08] sm:$0xff]
    %v559 = vld [vmem:[#allocation5 + $0xd10] sm:$0xff]
    %v560 = vld [vmem:[#allocation5 + $0xd18] sm:$0xff]
    %v561 = vld [vmem:[#allocation5 + $0xd20] sm:$0xff]
    %v562 = vld [vmem:[#allocation5 + $0xd28] sm:$0xff]
    %v563 = vld [vmem:[#allocation5 + $0xd30] sm:$0xff]
    %v564 = vld [vmem:[#allocation5 + $0xd38] sm:$0xff]
    %v565 = vld [vmem:[#allocation5 + $0xd40] sm:$0xff]
    %v566 = vld [vmem:[#allocation5 + $0xd48] sm:$0xff]
    %v567 = vld [vmem:[#allocation5 + $0xd50] sm:$0xff]
    %v568 = vld [vmem:[#allocation5 + $0xd58] sm:$0xff]
    %v569 = vld [vmem:[#allocation5 + $0xd60] sm:$0xff]
    %v570 = vld [vmem:[#allocation5 + $0xd68] sm:$0xff]
    %v571 = vld [vmem:[#allocation5 + $0xd70] sm:$0xff]
    %v572 = vld [vmem:[#allocation5 + $0xd78] sm:$0xff]
    %v573 = vld [vmem:[#allocation5 + $0xd80] sm:$0xff]
    %v574 = vld [vmem:[#allocation5 + $0xd88] sm:$0xff]
    %v575 = vld [vmem:[#allocation5 + $0xd90] sm:$0xff]
    %v576 = vld [vmem:[#allocation5 + $0xd98] sm:$0xff]
    %v577 = vld [vmem:[#allocation5 + $0xda0] sm:$0xff]
    %v578 = vld [vmem:[#allocation5 + $0xda8] sm:$0xff]
    %v579 = vld [vmem:[#allocation5 + $0xdb0] sm:$0xff]
    %v580 = vld [vmem:[#allocation5 + $0xdb8] sm:$0xff]
    %v581 = vld [vmem:[#allocation5 + $0xdc0] sm:$0xff]
    %v582 = vld [vmem:[#allocation5 + $0xdc8] sm:$0xff]
    %v583 = vld [vmem:[#allocation5 + $0xdd0] sm:$0xff]
    %v584 = vld [vmem:[#allocation5 + $0xdd8] sm:$0xff]
    %v585 = vld [vmem:[#allocation5 + $0xde0] sm:$0xff]
    %v586 = vld [vmem:[#allocation5 + $0xde8] sm:$0xff]
    %v587 = vld [vmem:[#allocation5 + $0xdf0] sm:$0xff]
    %v588 = vld [vmem:[#allocation5 + $0xdf8] sm:$0xff]
    %v589 = vld [vmem:[#allocation5 + $0xe00] sm:$0xff]
    %v590 = vld [vmem:[#allocation5 + $0xe08] sm:$0xff]
    %v591 = vld [vmem:[#allocation5 + $0xe10] sm:$0xff]
    %v592 = vld [vmem:[#allocation5 + $0xe18] sm:$0xff]
    %v593 = vld [vmem:[#allocation5 + $0xe20] sm:$0xff]
    %v594 = vld [vmem:[#allocation5 + $0xe28] sm:$0xff]
    %v595 = vld [vmem:[#allocation5 + $0xe30] sm:$0xff]
    %v596 = vld [vmem:[#allocation5 + $0xe38] sm:$0xff]
    %v597 = vld [vmem:[#allocation5 + $0xe40] sm:$0xff]
    %v598 = vld [vmem:[#allocation5 + $0xe48] sm:$0xff]
    %v599 = vld [vmem:[#allocation5 + $0xe50] sm:$0xff]
    %v600 = vld [vmem:[#allocation5 + $0xe58] sm:$0xff]
    %v601 = vld [vmem:[#allocation5 + $0xe60] sm:$0xff]
    %v602 = vld [vmem:[#allocation5 + $0xe68] sm:$0xff]
    %v603 = vld [vmem:[#allocation5 + $0xe70] sm:$0xff]
    %v604 = vld [vmem:[#allocation5 + $0xe78] sm:$0xff]
    %v605 = vld [vmem:[#allocation5 + $0xe80] sm:$0xff]
    %v606 = vld [vmem:[#allocation5 + $0xe88] sm:$0xff]
    %v607 = vld [vmem:[#allocation5 + $0xe90] sm:$0xff]
    %v608 = vld [vmem:[#allocation5 + $0xe98] sm:$0xff]
    %v609 = vld [vmem:[#allocation5 + $0xea0] sm:$0xff]
    %v610 = vld [vmem:[#allocation5 + $0xea8] sm:$0xff]
    %v611 = vld [vmem:[#allocation5 + $0xeb0] sm:$0xff]
    %v612 = vld [vmem:[#allocation5 + $0xeb8] sm:$0xff]
    %v613 = vld [vmem:[#allocation5 + $0xec0] sm:$0xff]
    %v614 = vld [vmem:[#allocation5 + $0xec8] sm:$0xff]
    %v615 = vld [vmem:[#allocation5 + $0xed0] sm:$0xff]
    %v616 = vld [vmem:[#allocation5 + $0xed8] sm:$0xff]
    %v617 = vld [vmem:[#allocation5 + $0xee0] sm:$0xff]
    %v618 = vld [vmem:[#allocation5 + $0xee8] sm:$0xff]
    %v619 = vld [vmem:[#allocation5 + $0xef0] sm:$0xff]
    %v620 = vld [vmem:[#allocation5 + $0xef8] sm:$0xff]
    %v621 = vld [vmem:[#allocation5 + $0xf00] sm:$0xff]
    %v622 = vld [vmem:[#allocation5 + $0xf08] sm:$0xff]
    %v623 = vld [vmem:[#allocation5 + $0xf10] sm:$0xff]
    %v624 = vld [vmem:[#allocation5 + $0xf18] sm:$0xff]
    %v625 = vld [vmem:[#allocation5 + $0xf20] sm:$0xff]
    %v626 = vld [vmem:[#allocation5 + $0xf28] sm:$0xff]
    %v627 = vld [vmem:[#allocation5 + $0xf30] sm:$0xff]
    %v628 = vld [vmem:[#allocation5 + $0xf38] sm:$0xff]
    %v629 = vld [vmem:[#allocation5 + $0xf40] sm:$0xff]
    %v630 = vld [vmem:[#allocation5 + $0xf48] sm:$0xff]
    %v631 = vld [vmem:[#allocation5 + $0xf50] sm:$0xff]
    %v632 = vld [vmem:[#allocation5 + $0xf58] sm:$0xff]
    %v633 = vld [vmem:[#allocation5 + $0xf60] sm:$0xff]
    %v634 = vld [vmem:[#allocation5 + $0xf68] sm:$0xff]
    %v635 = vld [vmem:[#allocation5 + $0xf70] sm:$0xff]
    %v636 = vld [vmem:[#allocation5 + $0xf78] sm:$0xff]
    %v637 = vld [vmem:[#allocation5 + $0xf80] sm:$0xff]
    %v638 = vld [vmem:[#allocation5 + $0xf88] sm:$0xff]
    %v639 = vld [vmem:[#allocation5 + $0xf90] sm:$0xff]
    %v640 = vld [vmem:[#allocation5 + $0xf98] sm:$0xff]
    %v641 = vld [vmem:[#allocation5 + $0xfa0] sm:$0xff]
    %v642 = vld [vmem:[#allocation5 + $0xfa8] sm:$0xff]
    %v643 = vld [vmem:[#allocation5 + $0xfb0] sm:$0xff]
    %v644 = vld [vmem:[#allocation5 + $0xfb8] sm:$0xff]
    %v645 = vld [vmem:[#allocation5 + $0xfc0] sm:$0xff]
    %v646 = vld [vmem:[#allocation5 + $0xfc8] sm:$0xff]
    %v647 = vld [vmem:[#allocation5 + $0xfd0] sm:$0xff]
    %v648 = vld [vmem:[#allocation5 + $0xfd8] sm:$0xff]
    %v649 = vld [vmem:[#allocation5 + $0xfe0] sm:$0xff]
    %v650 = vld [vmem:[#allocation5 + $0xfe8] sm:$0xff]
    %v651 = vld [vmem:[#allocation5 + $0xff0] sm:$0xff]
    %v652 = vld [vmem:[#allocation5 + $0xff8] sm:$0xff]
    %v653 = vld [vmem:[#allocation5 + $0x1000] sm:$0xff]
    %v654 = vld [vmem:[#allocation5 + $0x1008] sm:$0xff]
    %v655 = vld [vmem:[#allocation5 + $0x1010] sm:$0xff]
    %v656 = vld [vmem:[#allocation5 + $0x1018] sm:$0xff]
    %v657 = vld [vmem:[#allocation5 + $0x1020] sm:$0xff]
    %v658 = vld [vmem:[#allocation5 + $0x1028] sm:$0xff]
    %v659 = vld [vmem:[#allocation5 + $0x1030] sm:$0xff]
    %v660 = vld [vmem:[#allocation5 + $0x1038] sm:$0xff]
    %v661 = vld [vmem:[#allocation5 + $0x1040] sm:$0xff]
    %v662 = vld [vmem:[#allocation5 + $0x1048] sm:$0xff]
    %v663 = vld [vmem:[#allocation5 + $0x1050] sm:$0xff]
    %v664 = vld [vmem:[#allocation5 + $0x1058] sm:$0xff]
    %v665 = vld [vmem:[#allocation5 + $0x1060] sm:$0xff]
    %v666 = vld [vmem:[#allocation5 + $0x1068] sm:$0xff]
    %v667 = vld [vmem:[#allocation5 + $0x1070] sm:$0xff]
    %v668 = vld [vmem:[#allocation5 + $0x1078] sm:$0xff]
    %v669 = vld [vmem:[#allocation5 + $0x1080] sm:$0xff]
    %v670 = vld [vmem:[#allocation5 + $0x1088] sm:$0xff]
    %v671 = vld [vmem:[#allocation5 + $0x1090] sm:$0xff]
    %v672 = vld [vmem:[#allocation5 + $0x1098] sm:$0xff]
    %v673 = vld [vmem:[#allocation5 + $0x10a0] sm:$0xff]
    %v674 = vld [vmem:[#allocation5 + $0x10a8] sm:$0xff]
    %v675 = vld [vmem:[#allocation5 + $0x10b0] sm:$0xff]
    %v676 = vld [vmem:[#allocation5 + $0x10b8] sm:$0xff]
    %v677 = vld [vmem:[#allocation5 + $0x10c0] sm:$0xff]
    %v678 = vld [vmem:[#allocation5 + $0x10c8] sm:$0xff]
    %v679 = vld [vmem:[#allocation5 + $0x10d0] sm:$0xff]
    %v680 = vld [vmem:[#allocation5 + $0x10d8] sm:$0xff]
    %v681 = vld [vmem:[#allocation5 + $0x10e0] sm:$0xff]
    %v682 = vld [vmem:[#allocation5 + $0x10e8] sm:$0xff]
    %v683 = vld [vmem:[#allocation5 + $0x10f0] sm:$0xff]
    %v684 = vld [vmem:[#allocation5 + $0x10f8] sm:$0xff]
    %v685 = vld [vmem:[#allocation5 + $0x1100] sm:$0xff]
    %v686 = vld [vmem:[#allocation5 + $0x1108] sm:$0xff]
    %v687 = vld [vmem:[#allocation5 + $0x1110] sm:$0xff]
    %v688 = vld [vmem:[#allocation5 + $0x1118] sm:$0xff]
    %v689 = vld [vmem:[#allocation5 + $0x1120] sm:$0xff]
    %v690 = vld [vmem:[#allocation5 + $0x1128] sm:$0xff]
    %v691 = vld [vmem:[#allocation5 + $0x1130] sm:$0xff]
    %v692 = vld [vmem:[#allocation5 + $0x1138] sm:$0xff]
    %v693 = vld [vmem:[#allocation5 + $0x1140] sm:$0xff]
    %v694 = vld [vmem:[#allocation5 + $0x1148] sm:$0xff]
    %v695 = vld [vmem:[#allocation5 + $0x1150] sm:$0xff]
    %v696 = vld [vmem:[#allocation5 + $0x1158] sm:$0xff]
    %v697 = vld [vmem:[#allocation5 + $0x1160] sm:$0xff]
    %v698 = vld [vmem:[#allocation5 + $0x1168] sm:$0xff]
    %v699 = vld [vmem:[#allocation5 + $0x1170] sm:$0xff]
    %v700 = vld [vmem:[#allocation5 + $0x1178] sm:$0xff]
    %v701 = vld [vmem:[#allocation5 + $0x1180] sm:$0xff]
    %v702 = vld [vmem:[#allocation5 + $0x1188] sm:$0xff]
    %v703 = vld [vmem:[#allocation5 + $0x1190] sm:$0xff]
    %v704 = vld [vmem:[#allocation5 + $0x1198] sm:$0xff]
    %v705 = vld [vmem:[#allocation5 + $0x11a0] sm:$0xff]
    %v706 = vld [vmem:[#allocation5 + $0x11a8] sm:$0xff]
    %v707 = vld [vmem:[#allocation5 + $0x11b0] sm:$0xff]
    %v708 = vld [vmem:[#allocation5 + $0x11b8] sm:$0xff]
    %v709 = vld [vmem:[#allocation5 + $0x11c0] sm:$0xff]
    %v710 = vld [vmem:[#allocation5 + $0x11c8] sm:$0xff]
    %v711 = vld [vmem:[#allocation5 + $0x11d0] sm:$0xff]
    %v712 = vld [vmem:[#allocation5 + $0x11d8] sm:$0xff]
    %v713 = vld [vmem:[#allocation5 + $0x11e0] sm:$0xff]
    %v714 = vld [vmem:[#allocation5 + $0x11e8] sm:$0xff]
    %v715 = vld [vmem:[#allocation5 + $0x11f0] sm:$0xff]
    %v716 = vld [vmem:[#allocation5 + $0x11f8] sm:$0xff]
    %v717 = vld [vmem:[#allocation5 + $0x1200] sm:$0xff]
    %v718 = vld [vmem:[#allocation5 + $0x1208] sm:$0xff]
    %v719 = vld [vmem:[#allocation5 + $0x1210] sm:$0xff]
    %v720 = vld [vmem:[#allocation5 + $0x1218] sm:$0xff]
    %v721 = vld [vmem:[#allocation5 + $0x1220] sm:$0xff]
    %v722 = vld [vmem:[#allocation5 + $0x1228] sm:$0xff]
    %v723 = vld [vmem:[#allocation5 + $0x1230] sm:$0xff]
    %v724 = vld [vmem:[#allocation5 + $0x1238] sm:$0xff]
    %v725 = vld [vmem:[#allocation5 + $0x1240] sm:$0xff]
    %v726 = vld [vmem:[#allocation5 + $0x1248] sm:$0xff]
    %v727 = vld [vmem:[#allocation5 + $0x1250] sm:$0xff]
    %v728 = vld [vmem:[#allocation5 + $0x1258] sm:$0xff]
    %v729 = vld [vmem:[#allocation5 + $0x1260] sm:$0xff]
    %v730 = vld [vmem:[#allocation5 + $0x1268] sm:$0xff]
    %v731 = vld [vmem:[#allocation5 + $0x1270] sm:$0xff]
    %v732 = vld [vmem:[#allocation5 + $0x1278] sm:$0xff]
    %v733 = vld [vmem:[#allocation5 + $0x1280] sm:$0xff]
    %v734 = vld [vmem:[#allocation5 + $0x1288] sm:$0xff]
    %v735 = vld [vmem:[#allocation5 + $0x1290] sm:$0xff]
    %v736 = vld [vmem:[#allocation5 + $0x1298] sm:$0xff]
    %v737 = vld [vmem:[#allocation5 + $0x12a0] sm:$0xff]
    %v738 = vld [vmem:[#allocation5 + $0x12a8] sm:$0xff]
    %v739 = vld [vmem:[#allocation5 + $0x12b0] sm:$0xff]
    %v740 = vld [vmem:[#allocation5 + $0x12b8] sm:$0xff]
    %v741 = vld [vmem:[#allocation5 + $0x12c0] sm:$0xff]
    %v742 = vld [vmem:[#allocation5 + $0x12c8] sm:$0xff]
    %v743 = vld [vmem:[#allocation5 + $0x12d0] sm:$0xff]
    %v744 = vld [vmem:[#allocation5 + $0x12d8] sm:$0xff]
    %v745 = vld [vmem:[#allocation5 + $0x12e0] sm:$0xff]
    %v746 = vld [vmem:[#allocation5 + $0x12e8] sm:$0xff]
    %v747 = vld [vmem:[#allocation5 + $0x12f0] sm:$0xff]
    %v748 = vld [vmem:[#allocation5 + $0x12f8] sm:$0xff]
    %v749 = vld [vmem:[#allocation7] sm:$0xf]
    %v751 = vperm.slane %v749, 0
    %v752 = vperm.slane %v749, 1
    %v753 = vperm.slane %v749, 2
    %v754 = vperm.slane %v749, 3
    %v769 = vunpack.c.l.b16 %v131
    %v770 = vunpack.c.h.b16 %v131
    %v771 = vunpack.c.l.b16 %v132
    %v772 = vunpack.c.h.b16 %v132
    %v773 = vunpack.c.l.b16 %v133
    %v774 = vunpack.c.h.b16 %v133
    %v775 = vunpack.c.l.b16 %v134
    %v776 = vunpack.c.h.b16 %v134
    %v777 = vunpack.c.l.b16 %v135
    %v778 = vunpack.c.h.b16 %v135
    %v779 = vunpack.c.l.b16 %v136
    %v780 = vunpack.c.h.b16 %v136
    %v781 = vunpack.c.l.b16 %v137
    %v782 = vunpack.c.h.b16 %v137
    %v783 = vunpack.c.l.b16 %v138
    %v784 = vunpack.c.h.b16 %v138
    %v785 = vunpack.c.l.b16 %v139
    %v786 = vunpack.c.h.b16 %v139
    %v787 = vunpack.c.l.b16 %v140
    %v788 = vpack.c.b16 %v769, %v769
    %v789 = vpack.c.b16 %v770, %v770
    %v790 = vpack.c.b16 %v771, %v771
    %v791 = vpack.c.b16 %v772, %v772
    %v792 = vpack.c.b16 %v773, %v773
    %v793 = vpack.c.b16 %v774, %v774
    %v794 = vpack.c.b16 %v775, %v775
    %v795 = vpack.c.b16 %v776, %v776
    %v796 = vpack.c.b16 %v777, %v777
    %v797 = vpack.c.b16 %v778, %v778
    %v798 = vpack.c.b16 %v779, %v779
    %v799 = vpack.c.b16 %v780, %v780
    %v800 = vpack.c.b16 %v781, %v781
    %v801 = vpack.c.b16 %v782, %v782
    %v802 = vpack.c.b16 %v783, %v783
    %v803 = vpack.c.b16 %v784, %v784
    %v804 = vpack.c.b16 %v785, %v785
    %v805 = vpack.c.b16 %v786, %v786
    %v806 = vpack.c.b16 %v787, %v787
    %v1434 = vunpack.c.l.b16 %v141
    %v1435 = vunpack.c.h.b16 %v141
    %v1436 = vunpack.c.l.b16 %v142
    %v1437 = vunpack.c.h.b16 %v142
    %v1438 = vunpack.c.l.b16 %v143
    %v1439 = vunpack.c.h.b16 %v143
    %v1440 = vunpack.c.l.b16 %v144
    %v1441 = vunpack.c.h.b16 %v144
    %v1442 = vunpack.c.l.b16 %v145
    %v1443 = vunpack.c.h.b16 %v145
    %v1444 = vunpack.c.l.b16 %v146
    %v1445 = vunpack.c.h.b16 %v146
    %v1446 = vunpack.c.l.b16 %v147
    %v1447 = vunpack.c.h.b16 %v147
    %v1448 = vunpack.c.l.b16 %v148
    %v1449 = vunpack.c.h.b16 %v148
    %v1450 = vunpack.c.l.b16 %v149
    %v1451 = vunpack.c.h.b16 %v149
    %v1452 = vunpack.c.l.b16 %v150
    %v1453 = vunpack.c.h.b16 %v150
    %v1454 = vunpack.c.l.b16 %v151
    %v1455 = vunpack.c.h.b16 %v151
    %v1456 = vunpack.c.l.b16 %v152
    %v1457 = vunpack.c.h.b16 %v152
    %v1458 = vunpack.c.l.b16 %v153
    %v1459 = vunpack.c.h.b16 %v153
    %v1460 = vunpack.c.l.b16 %v154
    %v1461 = vunpack.c.h.b16 %v154
    %v1462 = vunpack.c.l.b16 %v155
    %v1463 = vunpack.c.h.b16 %v155
    %v1464 = vunpack.c.l.b16 %v156
    %v1465 = vunpack.c.h.b16 %v156
    %v1466 = vunpack.c.l.b16 %v157
    %v1467 = vunpack.c.h.b16 %v157
    %v1468 = vunpack.c.l.b16 %v158
    %v1469 = vunpack.c.h.b16 %v158
    %v1470 = vunpack.c.l.b16 %v159
    %v1471 = vunpack.c.h.b16 %v159
    %v1472 = vunpack.c.l.b16 %v160
    %v1473 = vunpack.c.h.b16 %v160
    %v1474 = vunpack.c.l.b16 %v161
    %v1475 = vunpack.c.h.b16 %v161
    %v1476 = vunpack.c.l.b16 %v162
    %v1477 = vunpack.c.h.b16 %v162
    %v1478 = vunpack.c.l.b16 %v163
    %v1479 = vunpack.c.h.b16 %v163
    %v1480 = vunpack.c.l.b16 %v164
    %v1481 = vunpack.c.h.b16 %v164
    %v1482 = vunpack.c.l.b16 %v165
    %v1483 = vunpack.c.h.b16 %v165
    %v1484 = vunpack.c.l.b16 %v166
    %v1485 = vunpack.c.h.b16 %v166
    %v1486 = vunpack.c.l.b16 %v167
    %v1487 = vunpack.c.h.b16 %v167
    %v1488 = vunpack.c.l.b16 %v168
    %v1489 = vunpack.c.h.b16 %v168
    %v1490 = vunpack.c.l.b16 %v169
    %v1491 = vunpack.c.h.b16 %v169
    %v1492 = vunpack.c.l.b16 %v170
    %v1493 = vunpack.c.h.b16 %v170
    %v1494 = vunpack.c.l.b16 %v171
    %v1495 = vunpack.c.h.b16 %v171
    %v1496 = vunpack.c.l.b16 %v172
    %v1497 = vunpack.c.h.b16 %v172
    %v1498 = vunpack.c.l.b16 %v173
    %v1499 = vunpack.c.h.b16 %v173
    %v1500 = vunpack.c.l.b16 %v174
    %v1501 = vunpack.c.h.b16 %v174
    %v1502 = vunpack.c.l.b16 %v175
    %v1503 = vunpack.c.h.b16 %v175
    %v1504 = vunpack.c.l.b16 %v176
    %v1505 = vunpack.c.h.b16 %v176
    %v1506 = vunpack.c.l.b16 %v177
    %v1507 = vunpack.c.h.b16 %v177
    %v1508 = vunpack.c.l.b16 %v178
    %v1509 = vunpack.c.h.b16 %v178
    %v1510 = vunpack.c.l.b16 %v179
    %v1511 = vunpack.c.h.b16 %v179
    %v1512 = vunpack.c.l.b16 %v180
    %v1513 = vunpack.c.h.b16 %v180
    %v1514 = vunpack.c.l.b16 %v181
    %v1515 = vunpack.c.h.b16 %v181
    %v1516 = vunpack.c.l.b16 %v182
    %v1517 = vunpack.c.h.b16 %v182
    %v1518 = vunpack.c.l.b16 %v183
    %v1519 = vunpack.c.h.b16 %v183
    %v1520 = vunpack.c.l.b16 %v184
    %v1521 = vunpack.c.h.b16 %v184
    %v1522 = vunpack.c.l.b16 %v185
    %v1523 = vunpack.c.h.b16 %v185
    %v1524 = vunpack.c.l.b16 %v186
    %v1525 = vunpack.c.h.b16 %v186
    %v1526 = vunpack.c.l.b16 %v187
    %v1527 = vunpack.c.h.b16 %v187
    %v1528 = vunpack.c.l.b16 %v188
    %v1529 = vunpack.c.h.b16 %v188
    %v1530 = vunpack.c.l.b16 %v189
    %v1531 = vunpack.c.h.b16 %v189
    %v1532 = vunpack.c.l.b16 %v190
    %v1533 = vunpack.c.h.b16 %v190
    %v1534 = vunpack.c.l.b16 %v191
    %v1535 = vunpack.c.h.b16 %v191
    %v1536 = vunpack.c.l.b16 %v192
    %v1537 = vunpack.c.h.b16 %v192
    %v1538 = vunpack.c.l.b16 %v193
    %v1539 = vunpack.c.h.b16 %v193
    %v1540 = vunpack.c.l.b16 %v194
    %v1541 = vunpack.c.h.b16 %v194
    %v1542 = vunpack.c.l.b16 %v195
    %v1543 = vunpack.c.h.b16 %v195
    %v1544 = vunpack.c.l.b16 %v196
    %v1545 = vunpack.c.h.b16 %v196
    %v1546 = vunpack.c.l.b16 %v197
    %v1547 = vunpack.c.h.b16 %v197
    %v1548 = vunpack.c.l.b16 %v198
    %v1549 = vunpack.c.h.b16 %v198
    %v1550 = vunpack.c.l.b16 %v199
    %v1551 = vunpack.c.h.b16 %v199
    %v1552 = vunpack.c.l.b16 %v200
    %v1553 = vunpack.c.h.b16 %v200
    %v1554 = vunpack.c.l.b16 %v201
    %v1555 = vunpack.c.h.b16 %v201
    %v1556 = vunpack.c.l.b16 %v202
    %v1557 = vunpack.c.h.b16 %v202
    %v1558 = vunpack.c.l.b16 %v203
    %v1559 = vunpack.c.h.b16 %v203
    %v1560 = vunpack.c.l.b16 %v204
    %v1561 = vunpack.c.h.b16 %v204
    %v1562 = vunpack.c.l.b16 %v205
    %v1563 = vunpack.c.h.b16 %v205
    %v1564 = vunpack.c.l.b16 %v206
    %v1565 = vunpack.c.h.b16 %v206
    %v1566 = vunpack.c.l.b16 %v207
    %v1567 = vunpack.c.h.b16 %v207
    %v1568 = vunpack.c.l.b16 %v208
    %v1569 = vunpack.c.h.b16 %v208
    %v1570 = vunpack.c.l.b16 %v209
    %v1571 = vunpack.c.h.b16 %v209
    %v1572 = vunpack.c.l.b16 %v210
    %v1573 = vunpack.c.h.b16 %v210
    %v1574 = vunpack.c.l.b16 %v211
    %v1575 = vunpack.c.h.b16 %v211
    %v1576 = vunpack.c.l.b16 %v212
    %v1577 = vunpack.c.h.b16 %v212
    %v1578 = vunpack.c.l.b16 %v213
    %v1579 = vunpack.c.h.b16 %v213
    %v1580 = vunpack.c.l.b16 %v214
    %v1581 = vunpack.c.h.b16 %v214
    %v1582 = vunpack.c.l.b16 %v215
    %v1583 = vunpack.c.h.b16 %v215
    %v1584 = vunpack.c.l.b16 %v216
    %v1585 = vunpack.c.h.b16 %v216
    %v1586 = vunpack.c.l.b16 %v217
    %v1587 = vunpack.c.h.b16 %v217
    %v1588 = vunpack.c.l.b16 %v218
    %v1589 = vunpack.c.h.b16 %v218
    %v1590 = vunpack.c.l.b16 %v219
    %v1591 = vunpack.c.h.b16 %v219
    %v1592 = vunpack.c.l.b16 %v220
    %v1593 = vunpack.c.h.b16 %v220
    %v1594 = vunpack.c.l.b16 %v221
    %v1595 = vunpack.c.h.b16 %v221
    %v1596 = vunpack.c.l.b16 %v222
    %v1597 = vunpack.c.h.b16 %v222
    %v1598 = vunpack.c.l.b16 %v223
    %v1599 = vunpack.c.h.b16 %v223
    %v1600 = vunpack.c.l.b16 %v224
    %v1601 = vunpack.c.h.b16 %v224
    %v1602 = vunpack.c.l.b16 %v225
    %v1603 = vunpack.c.h.b16 %v225
    %v1604 = vunpack.c.l.b16 %v226
    %v1605 = vunpack.c.h.b16 %v226
    %v1606 = vunpack.c.l.b16 %v227
    %v1607 = vunpack.c.h.b16 %v227
    %v1608 = vunpack.c.l.b16 %v228
    %v1609 = vunpack.c.h.b16 %v228
    %v1610 = vunpack.c.l.b16 %v229
    %v1611 = vunpack.c.h.b16 %v229
    %v1612 = vunpack.c.l.b16 %v230
    %v1613 = vunpack.c.h.b16 %v230
    %v1614 = vunpack.c.l.b16 %v231
    %v1615 = vunpack.c.h.b16 %v231
    %v1616 = vunpack.c.l.b16 %v232
    %v1617 = vunpack.c.h.b16 %v232
    %v1618 = vunpack.c.l.b16 %v233
    %v1619 = vunpack.c.h.b16 %v233
    %v1620 = vunpack.c.l.b16 %v234
    %v1621 = vunpack.c.h.b16 %v234
    %v1622 = vunpack.c.l.b16 %v235
    %v1623 = vunpack.c.h.b16 %v235
    %v1624 = vunpack.c.l.b16 %v236
    %v1625 = vunpack.c.h.b16 %v236
    %v1626 = vunpack.c.l.b16 %v237
    %v1627 = vunpack.c.h.b16 %v237
    %v1628 = vunpack.c.l.b16 %v238
    %v1629 = vunpack.c.h.b16 %v238
    %v1630 = vunpack.c.l.b16 %v239
    %v1631 = vunpack.c.h.b16 %v239
    %v1632 = vunpack.c.l.b16 %v240
    %v1633 = vunpack.c.h.b16 %v240
    %v1634 = vunpack.c.l.b16 %v241
    %v1635 = vunpack.c.h.b16 %v241
    %v1636 = vunpack.c.l.b16 %v242
    %v1637 = vunpack.c.h.b16 %v242
    %v1638 = vunpack.c.l.b16 %v243
    %v1639 = vunpack.c.h.b16 %v243
    %v1640 = vunpack.c.l.b16 %v244
    %v1641 = vunpack.c.h.b16 %v244
    %v1642 = vunpack.c.l.b16 %v245
    %v1643 = vunpack.c.h.b16 %v245
    %v1644 = vunpack.c.l.b16 %v246
    %v1645 = vunpack.c.h.b16 %v246
    %v1646 = vunpack.c.l.b16 %v247
    %v1647 = vunpack.c.h.b16 %v247
    %v1648 = vunpack.c.l.b16 %v248
    %v1649 = vunpack.c.h.b16 %v248
    %v1650 = vunpack.c.l.b16 %v249
    %v1651 = vunpack.c.h.b16 %v249
    %v1652 = vunpack.c.l.b16 %v250
    %v1653 = vunpack.c.h.b16 %v250
    %v1654 = vunpack.c.l.b16 %v251
    %v1655 = vunpack.c.h.b16 %v251
    %v1656 = vunpack.c.l.b16 %v252
    %v1657 = vunpack.c.h.b16 %v252
    %v1658 = vunpack.c.l.b16 %v253
    %v1659 = vunpack.c.h.b16 %v253
    %v1660 = vunpack.c.l.b16 %v254
    %v1661 = vunpack.c.h.b16 %v254
    %v1662 = vunpack.c.l.b16 %v255
    %v1663 = vunpack.c.h.b16 %v255
    %v1664 = vunpack.c.l.b16 %v256
    %v1665 = vunpack.c.h.b16 %v256
    %v1666 = vunpack.c.l.b16 %v257
    %v1667 = vunpack.c.h.b16 %v257
    %v1668 = vunpack.c.l.b16 %v258
    %v1669 = vunpack.c.h.b16 %v258
    %v1670 = vunpack.c.l.b16 %v259
    %v1671 = vunpack.c.h.b16 %v259
    %v1672 = vunpack.c.l.b16 %v260
    %v1673 = vunpack.c.h.b16 %v260
    %v1674 = vunpack.c.l.b16 %v261
    %v1675 = vunpack.c.h.b16 %v261
    %v1676 = vunpack.c.l.b16 %v262
    %v1677 = vunpack.c.h.b16 %v262
    %v1678 = vunpack.c.l.b16 %v263
    %v1679 = vunpack.c.h.b16 %v263
    %v1680 = vunpack.c.l.b16 %v264
    %v1681 = vunpack.c.h.b16 %v264
    %v1682 = vunpack.c.l.b16 %v265
    %v1683 = vunpack.c.h.b16 %v265
    %v1684 = vunpack.c.l.b16 %v266
    %v1685 = vunpack.c.h.b16 %v266
    %v1686 = vunpack.c.l.b16 %v267
    %v1687 = vunpack.c.h.b16 %v267
    %v1688 = vunpack.c.l.b16 %v268
    %v1689 = vunpack.c.h.b16 %v268
    %v1690 = vunpack.c.l.b16 %v269
    %v1691 = vunpack.c.h.b16 %v269
    %v1692 = vunpack.c.l.b16 %v270
    %v1693 = vunpack.c.h.b16 %v270
    %v1694 = vunpack.c.l.b16 %v271
    %v1695 = vunpack.c.h.b16 %v271
    %v1696 = vunpack.c.l.b16 %v272
    %v1697 = vunpack.c.h.b16 %v272
    %v1698 = vunpack.c.l.b16 %v273
    %v1699 = vunpack.c.h.b16 %v273
    %v1700 = vunpack.c.l.b16 %v274
    %v1701 = vunpack.c.h.b16 %v274
    %v1702 = vunpack.c.l.b16 %v275
    %v1703 = vunpack.c.h.b16 %v275
    %v1704 = vunpack.c.l.b16 %v276
    %v1705 = vunpack.c.h.b16 %v276
    %v1706 = vunpack.c.l.b16 %v277
    %v1707 = vunpack.c.h.b16 %v277
    %v1708 = vunpack.c.l.b16 %v278
    %v1709 = vunpack.c.h.b16 %v278
    %v1710 = vunpack.c.l.b16 %v279
    %v1711 = vunpack.c.h.b16 %v279
    %v1712 = vunpack.c.l.b16 %v280
    %v1713 = vunpack.c.h.b16 %v280
    %v1714 = vunpack.c.l.b16 %v281
    %v1715 = vunpack.c.h.b16 %v281
    %v1716 = vunpack.c.l.b16 %v282
    %v1717 = vunpack.c.h.b16 %v282
    %v1718 = vunpack.c.l.b16 %v283
    %v1719 = vunpack.c.h.b16 %v283
    %v1720 = vunpack.c.l.b16 %v284
    %v1721 = vunpack.c.h.b16 %v284
    %v1722 = vunpack.c.l.b16 %v285
    %v1723 = vunpack.c.h.b16 %v285
    %v1724 = vunpack.c.l.b16 %v286
    %v1725 = vunpack.c.h.b16 %v286
    %v1726 = vunpack.c.l.b16 %v287
    %v1727 = vunpack.c.h.b16 %v287
    %v1728 = vunpack.c.l.b16 %v288
    %v1729 = vunpack.c.h.b16 %v288
    %v1730 = vunpack.c.l.b16 %v289
    %v1731 = vunpack.c.h.b16 %v289
    %v1732 = vunpack.c.l.b16 %v290
    %v1733 = vunpack.c.h.b16 %v290
    %v1734 = vunpack.c.l.b16 %v291
    %v1735 = vunpack.c.h.b16 %v291
    %v1736 = vunpack.c.l.b16 %v292
    %v1737 = vunpack.c.h.b16 %v292
    %v1738 = vunpack.c.l.b16 %v293
    %v1739 = vunpack.c.h.b16 %v293
    %v1740 = vunpack.c.l.b16 %v294
    %v1741 = vunpack.c.h.b16 %v294
    %v1742 = vunpack.c.l.b16 %v295
    %v1743 = vunpack.c.h.b16 %v295
    %v1744 = vunpack.c.l.b16 %v296
    %v1745 = vunpack.c.h.b16 %v296
    %v1746 = vunpack.c.l.b16 %v297
    %v1747 = vunpack.c.h.b16 %v297
    %v1748 = vunpack.c.l.b16 %v298
    %v1749 = vunpack.c.h.b16 %v298
    %v1750 = vunpack.c.l.b16 %v299
    %v1751 = vunpack.c.h.b16 %v299
    %v1752 = vunpack.c.l.b16 %v300
    %v1753 = vunpack.c.h.b16 %v300
    %v1754 = vunpack.c.l.b16 %v301
    %v1755 = vunpack.c.h.b16 %v301
    %v1756 = vunpack.c.l.b16 %v302
    %v1757 = vunpack.c.h.b16 %v302
    %v1758 = vunpack.c.l.b16 %v303
    %v1759 = vunpack.c.h.b16 %v303
    %v1760 = vunpack.c.l.b16 %v304
    %v1761 = vunpack.c.h.b16 %v304
    %v1762 = vunpack.c.l.b16 %v305
    %v1763 = vunpack.c.h.b16 %v305
    %v1764 = vunpack.c.l.b16 %v306
    %v1765 = vunpack.c.h.b16 %v306
    %v1766 = vunpack.c.l.b16 %v307
    %v1767 = vunpack.c.h.b16 %v307
    %v1768 = vunpack.c.l.b16 %v308
    %v1769 = vunpack.c.h.b16 %v308
    %v1770 = vunpack.c.l.b16 %v309
    %v1771 = vunpack.c.h.b16 %v309
    %v1772 = vunpack.c.l.b16 %v310
    %v1773 = vunpack.c.h.b16 %v310
    %v1774 = vunpack.c.l.b16 %v311
    %v1775 = vunpack.c.h.b16 %v311
    %v1776 = vunpack.c.l.b16 %v312
    %v1777 = vunpack.c.h.b16 %v312
    %v1778 = vunpack.c.l.b16 %v313
    %v1779 = vunpack.c.h.b16 %v313
    %v1780 = vunpack.c.l.b16 %v314
    %v1781 = vunpack.c.h.b16 %v314
    %v1782 = vunpack.c.l.b16 %v315
    %v1783 = vunpack.c.h.b16 %v315
    %v1784 = vunpack.c.l.b16 %v316
    %v1785 = vunpack.c.h.b16 %v316
    %v1786 = vunpack.c.l.b16 %v317
    %v1787 = vunpack.c.h.b16 %v317
    %v1788 = vunpack.c.l.b16 %v318
    %v1789 = vunpack.c.h.b16 %v318
    %v1790 = vunpack.c.l.b16 %v319
    %v1791 = vunpack.c.h.b16 %v319
    %v1792 = vunpack.c.l.b16 %v320
    %v1793 = vunpack.c.h.b16 %v320
    %v1794 = vunpack.c.l.b16 %v321
    %v1795 = vunpack.c.h.b16 %v321
    %v1796 = vunpack.c.l.b16 %v322
    %v1797 = vunpack.c.h.b16 %v322
    %v1798 = vunpack.c.l.b16 %v323
    %v1799 = vunpack.c.h.b16 %v323
    %v1800 = vunpack.c.l.b16 %v324
    %v1801 = vunpack.c.h.b16 %v324
    %v1802 = vunpack.c.l.b16 %v325
    %v1803 = vunpack.c.h.b16 %v325
    %v1804 = vunpack.c.l.b16 %v326
    %v1805 = vunpack.c.h.b16 %v326
    %v1806 = vunpack.c.l.b16 %v327
    %v1807 = vunpack.c.h.b16 %v327
    %v1808 = vunpack.c.l.b16 %v328
    %v1809 = vunpack.c.h.b16 %v328
    %v1810 = vunpack.c.l.b16 %v329
    %v1811 = vunpack.c.h.b16 %v329
    %v1812 = vunpack.c.l.b16 %v330
    %v1813 = vunpack.c.h.b16 %v330
    %v1814 = vunpack.c.l.b16 %v331
    %v1815 = vunpack.c.h.b16 %v331
    %v1816 = vunpack.c.l.b16 %v332
    %v1817 = vunpack.c.h.b16 %v332
    %v1818 = vunpack.c.l.b16 %v333
    %v1819 = vunpack.c.h.b16 %v333
    %v1820 = vunpack.c.l.b16 %v334
    %v1821 = vunpack.c.h.b16 %v334
    %v1822 = vunpack.c.l.b16 %v335
    %v1823 = vunpack.c.h.b16 %v335
    %v1824 = vunpack.c.l.b16 %v336
    %v1825 = vunpack.c.h.b16 %v336
    %v1826 = vunpack.c.l.b16 %v337
    %v1827 = vunpack.c.h.b16 %v337
    %v1828 = vunpack.c.l.b16 %v338
    %v1829 = vunpack.c.h.b16 %v338
    %v1830 = vunpack.c.l.b16 %v339
    %v1831 = vunpack.c.h.b16 %v339
    %v1832 = vunpack.c.l.b16 %v340
    %v1833 = vunpack.c.h.b16 %v340
    %v1834 = vunpack.c.l.b16 %v341
    %v1835 = vunpack.c.h.b16 %v341
    %v1836 = vunpack.c.l.b16 %v342
    %v1837 = vunpack.c.h.b16 %v342
    %v1838 = vunpack.c.l.b16 %v343
    %v1839 = vunpack.c.h.b16 %v343
    %v1840 = vunpack.c.l.b16 %v344
    %v1841 = vunpack.c.h.b16 %v344
    %v1842 = vunpack.c.l.b16 %v345
    %v1843 = vunpack.c.h.b16 %v345
    %v1844 = vunpack.c.l.b16 %v346
    %v1845 = vunpack.c.h.b16 %v346
    %v1846 = vunpack.c.l.b16 %v347
    %v1847 = vunpack.c.h.b16 %v347
    %v1848 = vunpack.c.l.b16 %v348
    %v1849 = vunpack.c.h.b16 %v348
    %v1850 = vunpack.c.l.b16 %v349
    %v1851 = vunpack.c.h.b16 %v349
    %v1852 = vunpack.c.l.b16 %v350
    %v1853 = vunpack.c.h.b16 %v350
    %v1854 = vunpack.c.l.b16 %v351
    %v1855 = vunpack.c.h.b16 %v351
    %v1856 = vunpack.c.l.b16 %v352
    %v1857 = vunpack.c.h.b16 %v352
    %v1858 = vunpack.c.l.b16 %v353
    %v1859 = vunpack.c.h.b16 %v353
    %v1860 = vunpack.c.l.b16 %v354
    %v1861 = vunpack.c.h.b16 %v354
    %v1862 = vunpack.c.l.b16 %v355
    %v1863 = vunpack.c.h.b16 %v355
    %v1864 = vunpack.c.l.b16 %v356
    %v1865 = vunpack.c.h.b16 %v356
    %v1866 = vunpack.c.l.b16 %v357
    %v1867 = vunpack.c.h.b16 %v357
    %v1868 = vunpack.c.l.b16 %v358
    %v1869 = vunpack.c.h.b16 %v358
    %v1870 = vunpack.c.l.b16 %v359
    %v1871 = vunpack.c.h.b16 %v359
    %v1872 = vunpack.c.l.b16 %v360
    %v1873 = vunpack.c.h.b16 %v360
    %v1874 = vunpack.c.l.b16 %v361
    %v1875 = vunpack.c.h.b16 %v361
    %v1876 = vunpack.c.l.b16 %v362
    %v1877 = vunpack.c.h.b16 %v362
    %v1878 = vunpack.c.l.b16 %v363
    %v1879 = vunpack.c.h.b16 %v363
    %v1880 = vunpack.c.l.b16 %v364
    %v1881 = vunpack.c.h.b16 %v364
    %v1882 = vunpack.c.l.b16 %v365
    %v1883 = vunpack.c.h.b16 %v365
    %v1884 = vunpack.c.l.b16 %v366
    %v1885 = vunpack.c.h.b16 %v366
    %v1886 = vunpack.c.l.b16 %v367
    %v1887 = vunpack.c.h.b16 %v367
    %v1888 = vunpack.c.l.b16 %v368
    %v1889 = vunpack.c.h.b16 %v368
    %v1890 = vunpack.c.l.b16 %v369
    %v1891 = vunpack.c.h.b16 %v369
    %v1892 = vunpack.c.l.b16 %v370
    %v1893 = vunpack.c.h.b16 %v370
    %v1894 = vunpack.c.l.b16 %v371
    %v1895 = vunpack.c.h.b16 %v371
    %v1896 = vunpack.c.l.b16 %v372
    %v1897 = vunpack.c.h.b16 %v372
    %v1898 = vunpack.c.l.b16 %v373
    %v1899 = vunpack.c.h.b16 %v373
    %v1900 = vunpack.c.l.b16 %v374
    %v1901 = vunpack.c.h.b16 %v374
    %v1902 = vunpack.c.l.b16 %v375
    %v1903 = vunpack.c.h.b16 %v375
    %v1904 = vunpack.c.l.b16 %v376
    %v1905 = vunpack.c.h.b16 %v376
    %v1906 = vunpack.c.l.b16 %v377
    %v1907 = vunpack.c.h.b16 %v377
    %v1908 = vunpack.c.l.b16 %v378
    %v1909 = vunpack.c.h.b16 %v378
    %v1910 = vunpack.c.l.b16 %v379
    %v1911 = vunpack.c.h.b16 %v379
    %v1912 = vunpack.c.l.b16 %v380
    %v1913 = vunpack.c.h.b16 %v380
    %v1914 = vunpack.c.l.b16 %v381
    %v1915 = vunpack.c.h.b16 %v381
    %v1916 = vunpack.c.l.b16 %v382
    %v1917 = vunpack.c.h.b16 %v382
    %v1918 = vunpack.c.l.b16 %v383
    %v1919 = vunpack.c.h.b16 %v383
    %v1920 = vunpack.c.l.b16 %v384
    %v1921 = vunpack.c.h.b16 %v384
    %v1922 = vunpack.c.l.b16 %v385
    %v1923 = vunpack.c.h.b16 %v385
    %v1924 = vunpack.c.l.b16 %v386
    %v1925 = vunpack.c.h.b16 %v386
    %v1926 = vunpack.c.l.b16 %v387
    %v1927 = vunpack.c.h.b16 %v387
    %v1928 = vunpack.c.l.b16 %v388
    %v1929 = vunpack.c.h.b16 %v388
    %v1930 = vunpack.c.l.b16 %v389
    %v1931 = vunpack.c.h.b16 %v389
    %v1932 = vunpack.c.l.b16 %v390
    %v1933 = vunpack.c.h.b16 %v390
    %v1934 = vunpack.c.l.b16 %v391
    %v1935 = vunpack.c.h.b16 %v391
    %v1936 = vunpack.c.l.b16 %v392
    %v1937 = vunpack.c.h.b16 %v392
    %v1938 = vunpack.c.l.b16 %v393
    %v1939 = vunpack.c.h.b16 %v393
    %v1940 = vunpack.c.l.b16 %v394
    %v1941 = vunpack.c.h.b16 %v394
    %v1942 = vunpack.c.l.b16 %v395
    %v1943 = vunpack.c.h.b16 %v395
    %v1944 = vunpack.c.l.b16 %v396
    %v1945 = vunpack.c.h.b16 %v396
    %v1946 = vunpack.c.l.b16 %v397
    %v1947 = vunpack.c.h.b16 %v397
    %v1948 = vunpack.c.l.b16 %v398
    %v1949 = vunpack.c.h.b16 %v398
    %v1950 = vunpack.c.l.b16 %v399
    %v1951 = vunpack.c.h.b16 %v399
    %v1952 = vunpack.c.l.b16 %v400
    %v1953 = vunpack.c.h.b16 %v400
    %v1954 = vunpack.c.l.b16 %v401
    %v1955 = vunpack.c.h.b16 %v401
    %v1956 = vunpack.c.l.b16 %v402
    %v1957 = vunpack.c.h.b16 %v402
    %v1958 = vunpack.c.l.b16 %v403
    %v1959 = vunpack.c.h.b16 %v403
    %v1960 = vunpack.c.l.b16 %v404
    %v1961 = vunpack.c.h.b16 %v404
    %v1962 = vunpack.c.l.b16 %v405
    %v1963 = vunpack.c.h.b16 %v405
    %v1964 = vunpack.c.l.b16 %v406
    %v1965 = vunpack.c.h.b16 %v406
    %v1966 = vunpack.c.l.b16 %v407
    %v1967 = vunpack.c.h.b16 %v407
    %v1968 = vunpack.c.l.b16 %v408
    %v1969 = vunpack.c.h.b16 %v408
    %v1970 = vunpack.c.l.b16 %v409
    %v1971 = vunpack.c.h.b16 %v409
    %v1972 = vunpack.c.l.b16 %v410
    %v1973 = vunpack.c.h.b16 %v410
    %v1974 = vunpack.c.l.b16 %v411
    %v1975 = vunpack.c.h.b16 %v411
    %v1976 = vunpack.c.l.b16 %v412
    %v1977 = vunpack.c.h.b16 %v412
    %v1978 = vunpack.c.l.b16 %v413
    %v1979 = vunpack.c.h.b16 %v413
    %v1980 = vunpack.c.l.b16 %v414
    %v1981 = vunpack.c.h.b16 %v414
    %v1982 = vunpack.c.l.b16 %v415
    %v1983 = vunpack.c.h.b16 %v415
    %v1984 = vunpack.c.l.b16 %v416
    %v1985 = vunpack.c.h.b16 %v416
    %v1986 = vunpack.c.l.b16 %v417
    %v1987 = vunpack.c.h.b16 %v417
    %v1988 = vunpack.c.l.b16 %v418
    %v1989 = vunpack.c.h.b16 %v418
    %v1990 = vunpack.c.l.b16 %v419
    %v1991 = vunpack.c.h.b16 %v419
    %v1992 = vunpack.c.l.b16 %v420
    %v1993 = vunpack.c.h.b16 %v420
    %v1994 = vunpack.c.l.b16 %v421
    %v1995 = vunpack.c.h.b16 %v421
    %v1996 = vunpack.c.l.b16 %v422
    %v1997 = vunpack.c.h.b16 %v422
    %v1998 = vunpack.c.l.b16 %v423
    %v1999 = vunpack.c.h.b16 %v423
    %v2000 = vunpack.c.l.b16 %v424
    %v2001 = vunpack.c.h.b16 %v424
    %v2002 = vunpack.c.l.b16 %v425
    %v2003 = vunpack.c.h.b16 %v425
    %v2004 = vunpack.c.l.b16 %v426
    %v2005 = vunpack.c.h.b16 %v426
    %v2006 = vunpack.c.l.b16 %v427
    %v2007 = vunpack.c.h.b16 %v427
    %v2008 = vunpack.c.l.b16 %v428
    %v2009 = vunpack.c.h.b16 %v428
    %v2010 = vunpack.c.l.b16 %v429
    %v2011 = vunpack.c.h.b16 %v429
    %v2012 = vunpack.c.l.b16 %v430
    %v2013 = vunpack.c.h.b16 %v430
    %v2014 = vunpack.c.l.b16 %v431
    %v2015 = vunpack.c.h.b16 %v431
    %v2016 = vunpack.c.l.b16 %v432
    %v2017 = vunpack.c.h.b16 %v432
    %v2018 = vunpack.c.l.b16 %v433
    %v2019 = vunpack.c.h.b16 %v433
    %v2020 = vunpack.c.l.b16 %v434
    %v2021 = vunpack.c.h.b16 %v434
    %v2022 = vunpack.c.l.b16 %v435
    %v2023 = vunpack.c.h.b16 %v435
    %v2024 = vunpack.c.l.b16 %v436
    %v2025 = vunpack.c.h.b16 %v436
    %v2026 = vunpack.c.l.b16 %v437
    %v2027 = vunpack.c.h.b16 %v437
    %v2028 = vunpack.c.l.b16 %v438
    %v2029 = vunpack.c.h.b16 %v438
    %v2030 = vunpack.c.l.b16 %v439
    %v2031 = vunpack.c.h.b16 %v439
    %v2032 = vunpack.c.l.b16 %v440
    %v2033 = vunpack.c.h.b16 %v440
    %v2034 = vunpack.c.l.b16 %v441
    %v2035 = vunpack.c.h.b16 %v441
    %v2036 = vunpack.c.l.b16 %v442
    %v2037 = vunpack.c.h.b16 %v442
    %v2038 = vunpack.c.l.b16 %v443
    %v2039 = vunpack.c.h.b16 %v443
    %v2040 = vunpack.c.l.b16 %v444
    %v2041 = vunpack.c.h.b16 %v444
    %v2042 = vunpack.c.l.b16 %v445
    %v2043 = vunpack.c.h.b16 %v445
    %v2044 = vunpack.c.l.b16 %v446
    %v2045 = vunpack.c.h.b16 %v446
    %v2046 = vunpack.c.l.b16 %v447
    %v2047 = vunpack.c.h.b16 %v447
    %v2048 = vunpack.c.l.b16 %v448
    %v2049 = vunpack.c.h.b16 %v448
    %v2050 = vunpack.c.l.b16 %v449
    %v2051 = vunpack.c.h.b16 %v449
    %v2052 = vunpack.c.l.b16 %v450
    %v2053 = vunpack.c.h.b16 %v450
    %v2054 = vunpack.c.l.b16 %v451
    %v2055 = vunpack.c.h.b16 %v451
    %v2056 = vunpack.c.l.b16 %v452
    %v2057 = vunpack.c.h.b16 %v452
    %v2058 = vunpack.c.l.b16 %v453
    %v2059 = vunpack.c.h.b16 %v453
    %v2060 = vunpack.c.l.b16 %v454
    %v2061 = vunpack.c.h.b16 %v454
    %v2062 = vunpack.c.l.b16 %v455
    %v2063 = vunpack.c.h.b16 %v455
    %v2064 = vunpack.c.l.b16 %v456
    %v2065 = vunpack.c.h.b16 %v456
    %v2066 = vunpack.c.l.b16 %v457
    %v2067 = vunpack.c.h.b16 %v457
    %v2068 = vunpack.c.l.b16 %v458
    %v2069 = vunpack.c.h.b16 %v458
    %v2070 = vunpack.c.l.b16 %v459
    %v2071 = vunpack.c.h.b16 %v459
    %v2072 = vunpack.c.l.b16 %v460
    %v2073 = vunpack.c.h.b16 %v460
    %v2074 = vunpack.c.l.b16 %v461
    %v2075 = vunpack.c.h.b16 %v461
    %v2076 = vunpack.c.l.b16 %v462
    %v2077 = vunpack.c.h.b16 %v462
    %v2078 = vunpack.c.l.b16 %v463
    %v2079 = vunpack.c.h.b16 %v463
    %v2080 = vunpack.c.l.b16 %v464
    %v2081 = vunpack.c.h.b16 %v464
    %v2082 = vunpack.c.l.b16 %v465
    %v2083 = vunpack.c.h.b16 %v465
    %v2084 = vunpack.c.l.b16 %v466
    %v2085 = vunpack.c.h.b16 %v466
    %v2086 = vunpack.c.l.b16 %v467
    %v2087 = vunpack.c.h.b16 %v467
    %v2088 = vunpack.c.l.b16 %v468
    %v2089 = vunpack.c.h.b16 %v468
    %v2090 = vunpack.c.l.b16 %v469
    %v2091 = vunpack.c.h.b16 %v469
    %v2092 = vunpack.c.l.b16 %v470
    %v2093 = vunpack.c.h.b16 %v470
    %v2094 = vunpack.c.l.b16 %v471
    %v2095 = vunpack.c.h.b16 %v471
    %v2096 = vunpack.c.l.b16 %v472
    %v2097 = vunpack.c.h.b16 %v472
    %v2098 = vunpack.c.l.b16 %v473
    %v2099 = vunpack.c.h.b16 %v473
    %v2100 = vunpack.c.l.b16 %v474
    %v2101 = vunpack.c.h.b16 %v474
    %v2102 = vunpack.c.l.b16 %v475
    %v2103 = vunpack.c.h.b16 %v475
    %v2104 = vunpack.c.l.b16 %v476
    %v2105 = vunpack.c.h.b16 %v476
    %v2106 = vunpack.c.l.b16 %v477
    %v2107 = vunpack.c.h.b16 %v477
    %v2108 = vunpack.c.l.b16 %v478
    %v2109 = vunpack.c.h.b16 %v478
    %v2110 = vunpack.c.l.b16 %v479
    %v2111 = vunpack.c.h.b16 %v479
    %v2112 = vunpack.c.l.b16 %v480
    %v2113 = vunpack.c.h.b16 %v480
    %v2114 = vunpack.c.l.b16 %v481
    %v2115 = vunpack.c.h.b16 %v481
    %v2116 = vunpack.c.l.b16 %v482
    %v2117 = vunpack.c.h.b16 %v482
    %v2118 = vunpack.c.l.b16 %v483
    %v2119 = vunpack.c.h.b16 %v483
    %v2120 = vunpack.c.l.b16 %v484
    %v2121 = vunpack.c.h.b16 %v484
    %v2122 = vunpack.c.l.b16 %v485
    %v2123 = vunpack.c.h.b16 %v485
    %v2124 = vunpack.c.l.b16 %v486
    %v2125 = vunpack.c.h.b16 %v486
    %v2126 = vunpack.c.l.b16 %v487
    %v2127 = vunpack.c.h.b16 %v487
    %v2128 = vunpack.c.l.b16 %v488
    %v2129 = vunpack.c.h.b16 %v488
    %v2130 = vunpack.c.l.b16 %v489
    %v2131 = vunpack.c.h.b16 %v489
    %v2132 = vunpack.c.l.b16 %v490
    %v2133 = vunpack.c.h.b16 %v490
    %v2134 = vunpack.c.l.b16 %v491
    %v2135 = vunpack.c.h.b16 %v491
    %v2136 = vunpack.c.l.b16 %v492
    %v2137 = vunpack.c.h.b16 %v492
    %v2138 = vunpack.c.l.b16 %v493
    %v2139 = vunpack.c.h.b16 %v493
    %v2140 = vunpack.c.l.b16 %v494
    %v2141 = vunpack.c.h.b16 %v494
    %v2142 = vunpack.c.l.b16 %v495
    %v2143 = vunpack.c.h.b16 %v495
    %v2144 = vunpack.c.l.b16 %v496
    %v2145 = vunpack.c.h.b16 %v496
    %v2146 = vunpack.c.l.b16 %v497
    %v2147 = vunpack.c.h.b16 %v497
    %v2148 = vunpack.c.l.b16 %v498
    %v2149 = vunpack.c.h.b16 %v498
    %v2150 = vunpack.c.l.b16 %v499
    %v2151 = vunpack.c.h.b16 %v499
    %v2152 = vunpack.c.l.b16 %v500
    %v2153 = vunpack.c.h.b16 %v500
    %v2154 = vunpack.c.l.b16 %v501
    %v2155 = vunpack.c.h.b16 %v501
    %v2156 = vunpack.c.l.b16 %v502
    %v2157 = vunpack.c.h.b16 %v502
    %v2158 = vunpack.c.l.b16 %v503
    %v2159 = vunpack.c.h.b16 %v503
    %v2160 = vunpack.c.l.b16 %v504
    %v2161 = vunpack.c.h.b16 %v504
    %v2162 = vunpack.c.l.b16 %v505
    %v2163 = vunpack.c.h.b16 %v505
    %v2164 = vunpack.c.l.b16 %v506
    %v2165 = vunpack.c.h.b16 %v506
    %v2166 = vunpack.c.l.b16 %v507
    %v2167 = vunpack.c.h.b16 %v507
    %v2168 = vunpack.c.l.b16 %v508
    %v2169 = vunpack.c.h.b16 %v508
    %v2170 = vunpack.c.l.b16 %v509
    %v2171 = vunpack.c.h.b16 %v509
    %v2172 = vunpack.c.l.b16 %v510
    %v2173 = vunpack.c.h.b16 %v510
    %v2174 = vunpack.c.l.b16 %v511
    %v2175 = vunpack.c.h.b16 %v511
    %v2176 = vunpack.c.l.b16 %v512
    %v2177 = vunpack.c.h.b16 %v512
    %v2178 = vunpack.c.l.b16 %v513
    %v2179 = vunpack.c.h.b16 %v513
    %v2180 = vunpack.c.l.b16 %v514
    %v2181 = vunpack.c.h.b16 %v514
    %v2182 = vunpack.c.l.b16 %v515
    %v2183 = vunpack.c.h.b16 %v515
    %v2184 = vunpack.c.l.b16 %v516
    %v2185 = vunpack.c.h.b16 %v516
    %v2186 = vunpack.c.l.b16 %v517
    %v2187 = vunpack.c.h.b16 %v517
    %v2188 = vunpack.c.l.b16 %v518
    %v2189 = vunpack.c.h.b16 %v518
    %v2190 = vunpack.c.l.b16 %v519
    %v2191 = vunpack.c.h.b16 %v519
    %v2192 = vunpack.c.l.b16 %v520
    %v2193 = vunpack.c.h.b16 %v520
    %v2194 = vunpack.c.l.b16 %v521
    %v2195 = vunpack.c.h.b16 %v521
    %v2196 = vunpack.c.l.b16 %v522
    %v2197 = vunpack.c.h.b16 %v522
    %v2198 = vunpack.c.l.b16 %v523
    %v2199 = vunpack.c.h.b16 %v523
    %v2200 = vunpack.c.l.b16 %v524
    %v2201 = vunpack.c.h.b16 %v524
    %v2202 = vunpack.c.l.b16 %v525
    %v2203 = vunpack.c.h.b16 %v525
    %v2204 = vunpack.c.l.b16 %v526
    %v2205 = vunpack.c.h.b16 %v526
    %v2206 = vunpack.c.l.b16 %v527
    %v2207 = vunpack.c.h.b16 %v527
    %v2208 = vunpack.c.l.b16 %v528
    %v2209 = vunpack.c.h.b16 %v528
    %v2210 = vunpack.c.l.b16 %v529
    %v2211 = vunpack.c.h.b16 %v529
    %v2212 = vunpack.c.l.b16 %v530
    %v2213 = vunpack.c.h.b16 %v530
    %v2214 = vunpack.c.l.b16 %v531
    %v2215 = vunpack.c.h.b16 %v531
    %v2216 = vunpack.c.l.b16 %v532
    %v2217 = vunpack.c.h.b16 %v532
    %v2218 = vunpack.c.l.b16 %v533
    %v2219 = vunpack.c.h.b16 %v533
    %v2220 = vunpack.c.l.b16 %v534
    %v2221 = vunpack.c.h.b16 %v534
    %v2222 = vunpack.c.l.b16 %v535
    %v2223 = vunpack.c.h.b16 %v535
    %v2224 = vunpack.c.l.b16 %v536
    %v2225 = vunpack.c.h.b16 %v536
    %v2226 = vunpack.c.l.b16 %v537
    %v2227 = vunpack.c.h.b16 %v537
    %v2228 = vunpack.c.l.b16 %v538
    %v2229 = vunpack.c.h.b16 %v538
    %v2230 = vunpack.c.l.b16 %v539
    %v2231 = vunpack.c.h.b16 %v539
    %v2232 = vunpack.c.l.b16 %v540
    %v2233 = vunpack.c.h.b16 %v540
    %v2234 = vunpack.c.l.b16 %v541
    %v2235 = vunpack.c.h.b16 %v541
    %v2236 = vunpack.c.l.b16 %v542
    %v2237 = vunpack.c.h.b16 %v542
    %v2238 = vunpack.c.l.b16 %v543
    %v2239 = vunpack.c.h.b16 %v543
    %v2240 = vunpack.c.l.b16 %v544
    %v2241 = vunpack.c.h.b16 %v544
    %v2242 = vunpack.c.l.b16 %v545
    %v2243 = vunpack.c.h.b16 %v545
    %v2244 = vunpack.c.l.b16 %v546
    %v2245 = vunpack.c.h.b16 %v546
    %v2246 = vunpack.c.l.b16 %v547
    %v2247 = vunpack.c.h.b16 %v547
    %v2248 = vunpack.c.l.b16 %v548
    %v2249 = vunpack.c.h.b16 %v548
    %v2250 = vunpack.c.l.b16 %v549
    %v2251 = vunpack.c.h.b16 %v549
    %v2252 = vunpack.c.l.b16 %v550
    %v2253 = vunpack.c.h.b16 %v550
    %v2254 = vunpack.c.l.b16 %v551
    %v2255 = vunpack.c.h.b16 %v551
    %v2256 = vunpack.c.l.b16 %v552
    %v2257 = vunpack.c.h.b16 %v552
    %v2258 = vunpack.c.l.b16 %v553
    %v2259 = vunpack.c.h.b16 %v553
    %v2260 = vunpack.c.l.b16 %v554
    %v2261 = vunpack.c.h.b16 %v554
    %v2262 = vunpack.c.l.b16 %v555
    %v2263 = vunpack.c.h.b16 %v555
    %v2264 = vunpack.c.l.b16 %v556
    %v2265 = vunpack.c.h.b16 %v556
    %v2266 = vunpack.c.l.b16 %v557
    %v2267 = vunpack.c.h.b16 %v557
    %v2268 = vunpack.c.l.b16 %v558
    %v2269 = vunpack.c.h.b16 %v558
    %v2270 = vunpack.c.l.b16 %v559
    %v2271 = vunpack.c.h.b16 %v559
    %v2272 = vunpack.c.l.b16 %v560
    %v2273 = vunpack.c.h.b16 %v560
    %v2274 = vunpack.c.l.b16 %v561
    %v2275 = vunpack.c.h.b16 %v561
    %v2276 = vunpack.c.l.b16 %v562
    %v2277 = vunpack.c.h.b16 %v562
    %v2278 = vunpack.c.l.b16 %v563
    %v2279 = vunpack.c.h.b16 %v563
    %v2280 = vunpack.c.l.b16 %v564
    %v2281 = vunpack.c.h.b16 %v564
    %v2282 = vunpack.c.l.b16 %v565
    %v2283 = vunpack.c.h.b16 %v565
    %v2284 = vunpack.c.l.b16 %v566
    %v2285 = vunpack.c.h.b16 %v566
    %v2286 = vunpack.c.l.b16 %v567
    %v2287 = vunpack.c.h.b16 %v567
    %v2288 = vunpack.c.l.b16 %v568
    %v2289 = vunpack.c.h.b16 %v568
    %v2290 = vunpack.c.l.b16 %v569
    %v2291 = vunpack.c.h.b16 %v569
    %v2292 = vunpack.c.l.b16 %v570
    %v2293 = vunpack.c.h.b16 %v570
    %v2294 = vunpack.c.l.b16 %v571
    %v2295 = vunpack.c.h.b16 %v571
    %v2296 = vunpack.c.l.b16 %v572
    %v2297 = vunpack.c.h.b16 %v572
    %v2298 = vunpack.c.l.b16 %v573
    %v2299 = vunpack.c.h.b16 %v573
    %v2300 = vunpack.c.l.b16 %v574
    %v2301 = vunpack.c.h.b16 %v574
    %v2302 = vunpack.c.l.b16 %v575
    %v2303 = vunpack.c.h.b16 %v575
    %v2304 = vunpack.c.l.b16 %v576
    %v2305 = vunpack.c.h.b16 %v576
    %v2306 = vunpack.c.l.b16 %v577
    %v2307 = vunpack.c.h.b16 %v577
    %v2308 = vunpack.c.l.b16 %v578
    %v2309 = vunpack.c.h.b16 %v578
    %v2310 = vunpack.c.l.b16 %v579
    %v2311 = vunpack.c.h.b16 %v579
    %v2312 = vunpack.c.l.b16 %v580
    %v2313 = vunpack.c.h.b16 %v580
    %v2314 = vunpack.c.l.b16 %v581
    %v2315 = vunpack.c.h.b16 %v581
    %v2316 = vunpack.c.l.b16 %v582
    %v2317 = vunpack.c.h.b16 %v582
    %v2318 = vunpack.c.l.b16 %v583
    %v2319 = vunpack.c.h.b16 %v583
    %v2320 = vunpack.c.l.b16 %v584
    %v2321 = vunpack.c.h.b16 %v584
    %v2322 = vunpack.c.l.b16 %v585
    %v2323 = vunpack.c.h.b16 %v585
    %v2324 = vunpack.c.l.b16 %v586
    %v2325 = vunpack.c.h.b16 %v586
    %v2326 = vunpack.c.l.b16 %v587
    %v2327 = vunpack.c.h.b16 %v587
    %v2328 = vunpack.c.l.b16 %v588
    %v2329 = vunpack.c.h.b16 %v588
    %v2330 = vunpack.c.l.b16 %v589
    %v2331 = vunpack.c.h.b16 %v589
    %v2332 = vunpack.c.l.b16 %v590
    %v2333 = vunpack.c.h.b16 %v590
    %v2334 = vunpack.c.l.b16 %v591
    %v2335 = vunpack.c.h.b16 %v591
    %v2336 = vunpack.c.l.b16 %v592
    %v2337 = vunpack.c.h.b16 %v592
    %v2338 = vunpack.c.l.b16 %v593
    %v2339 = vunpack.c.h.b16 %v593
    %v2340 = vunpack.c.l.b16 %v594
    %v2341 = vunpack.c.h.b16 %v594
    %v2342 = vunpack.c.l.b16 %v595
    %v2343 = vunpack.c.h.b16 %v595
    %v2344 = vunpack.c.l.b16 %v596
    %v2345 = vunpack.c.h.b16 %v596
    %v2346 = vunpack.c.l.b16 %v597
    %v2347 = vunpack.c.h.b16 %v597
    %v2348 = vunpack.c.l.b16 %v598
    %v2349 = vunpack.c.h.b16 %v598
    %v2350 = vunpack.c.l.b16 %v599
    %v2351 = vunpack.c.h.b16 %v599
    %v2352 = vunpack.c.l.b16 %v600
    %v2353 = vunpack.c.h.b16 %v600
    %v2354 = vunpack.c.l.b16 %v601
    %v2355 = vunpack.c.h.b16 %v601
    %v2356 = vunpack.c.l.b16 %v602
    %v2357 = vunpack.c.h.b16 %v602
    %v2358 = vunpack.c.l.b16 %v603
    %v2359 = vunpack.c.h.b16 %v603
    %v2360 = vunpack.c.l.b16 %v604
    %v2361 = vunpack.c.h.b16 %v604
    %v2362 = vunpack.c.l.b16 %v605
    %v2363 = vunpack.c.h.b16 %v605
    %v2364 = vunpack.c.l.b16 %v606
    %v2365 = vunpack.c.h.b16 %v606
    %v2366 = vunpack.c.l.b16 %v607
    %v2367 = vunpack.c.h.b16 %v607
    %v2368 = vunpack.c.l.b16 %v608
    %v2369 = vunpack.c.h.b16 %v608
    %v2370 = vunpack.c.l.b16 %v609
    %v2371 = vunpack.c.h.b16 %v609
    %v2372 = vunpack.c.l.b16 %v610
    %v2373 = vunpack.c.h.b16 %v610
    %v2374 = vunpack.c.l.b16 %v611
    %v2375 = vunpack.c.h.b16 %v611
    %v2376 = vunpack.c.l.b16 %v612
    %v2377 = vunpack.c.h.b16 %v612
    %v2378 = vunpack.c.l.b16 %v613
    %v2379 = vunpack.c.h.b16 %v613
    %v2380 = vunpack.c.l.b16 %v614
    %v2381 = vunpack.c.h.b16 %v614
    %v2382 = vunpack.c.l.b16 %v615
    %v2383 = vunpack.c.h.b16 %v615
    %v2384 = vunpack.c.l.b16 %v616
    %v2385 = vunpack.c.h.b16 %v616
    %v2386 = vunpack.c.l.b16 %v617
    %v2387 = vunpack.c.h.b16 %v617
    %v2388 = vunpack.c.l.b16 %v618
    %v2389 = vunpack.c.h.b16 %v618
    %v2390 = vunpack.c.l.b16 %v619
    %v2391 = vunpack.c.h.b16 %v619
    %v2392 = vunpack.c.l.b16 %v620
    %v2393 = vunpack.c.h.b16 %v620
    %v2394 = vunpack.c.l.b16 %v621
    %v2395 = vunpack.c.h.b16 %v621
    %v2396 = vunpack.c.l.b16 %v622
    %v2397 = vunpack.c.h.b16 %v622
    %v2398 = vunpack.c.l.b16 %v623
    %v2399 = vunpack.c.h.b16 %v623
    %v2400 = vunpack.c.l.b16 %v624
    %v2401 = vunpack.c.h.b16 %v624
    %v2402 = vunpack.c.l.b16 %v625
    %v2403 = vunpack.c.h.b16 %v625
    %v2404 = vunpack.c.l.b16 %v626
    %v2405 = vunpack.c.h.b16 %v626
    %v2406 = vunpack.c.l.b16 %v627
    %v2407 = vunpack.c.h.b16 %v627
    %v2408 = vunpack.c.l.b16 %v628
    %v2409 = vunpack.c.h.b16 %v628
    %v2410 = vunpack.c.l.b16 %v629
    %v2411 = vunpack.c.h.b16 %v629
    %v2412 = vunpack.c.l.b16 %v630
    %v2413 = vunpack.c.h.b16 %v630
    %v2414 = vunpack.c.l.b16 %v631
    %v2415 = vunpack.c.h.b16 %v631
    %v2416 = vunpack.c.l.b16 %v632
    %v2417 = vunpack.c.h.b16 %v632
    %v2418 = vunpack.c.l.b16 %v633
    %v2419 = vunpack.c.h.b16 %v633
    %v2420 = vunpack.c.l.b16 %v634
    %v2421 = vunpack.c.h.b16 %v634
    %v2422 = vunpack.c.l.b16 %v635
    %v2423 = vunpack.c.h.b16 %v635
    %v2424 = vunpack.c.l.b16 %v636
    %v2425 = vunpack.c.h.b16 %v636
    %v2426 = vunpack.c.l.b16 %v637
    %v2427 = vunpack.c.h.b16 %v637
    %v2428 = vunpack.c.l.b16 %v638
    %v2429 = vunpack.c.h.b16 %v638
    %v2430 = vunpack.c.l.b16 %v639
    %v2431 = vunpack.c.h.b16 %v639
    %v2432 = vunpack.c.l.b16 %v640
    %v2433 = vunpack.c.h.b16 %v640
    %v2434 = vunpack.c.l.b16 %v641
    %v2435 = vunpack.c.h.b16 %v641
    %v2436 = vunpack.c.l.b16 %v642
    %v2437 = vunpack.c.h.b16 %v642
    %v2438 = vunpack.c.l.b16 %v643
    %v2439 = vunpack.c.h.b16 %v643
    %v2440 = vunpack.c.l.b16 %v644
    %v2441 = vunpack.c.h.b16 %v644
    %v2442 = vunpack.c.l.b16 %v645
    %v2443 = vunpack.c.h.b16 %v645
    %v2444 = vunpack.c.l.b16 %v646
    %v2445 = vunpack.c.h.b16 %v646
    %v2446 = vunpack.c.l.b16 %v647
    %v2447 = vunpack.c.h.b16 %v647
    %v2448 = vunpack.c.l.b16 %v648
    %v2449 = vunpack.c.h.b16 %v648
    %v2450 = vunpack.c.l.b16 %v649
    %v2451 = vunpack.c.h.b16 %v649
    %v2452 = vunpack.c.l.b16 %v650
    %v2453 = vunpack.c.h.b16 %v650
    %v2454 = vunpack.c.l.b16 %v651
    %v2455 = vunpack.c.h.b16 %v651
    %v2456 = vunpack.c.l.b16 %v652
    %v2457 = vunpack.c.h.b16 %v652
    %v2458 = vunpack.c.l.b16 %v653
    %v2459 = vunpack.c.h.b16 %v653
    %v2460 = vunpack.c.l.b16 %v654
    %v2461 = vunpack.c.h.b16 %v654
    %v2462 = vunpack.c.l.b16 %v655
    %v2463 = vunpack.c.h.b16 %v655
    %v2464 = vunpack.c.l.b16 %v656
    %v2465 = vunpack.c.h.b16 %v656
    %v2466 = vunpack.c.l.b16 %v657
    %v2467 = vunpack.c.h.b16 %v657
    %v2468 = vunpack.c.l.b16 %v658
    %v2469 = vunpack.c.h.b16 %v658
    %v2470 = vunpack.c.l.b16 %v659
    %v2471 = vunpack.c.h.b16 %v659
    %v2472 = vunpack.c.l.b16 %v660
    %v2473 = vunpack.c.h.b16 %v660
    %v2474 = vunpack.c.l.b16 %v661
    %v2475 = vunpack.c.h.b16 %v661
    %v2476 = vunpack.c.l.b16 %v662
    %v2477 = vunpack.c.h.b16 %v662
    %v2478 = vunpack.c.l.b16 %v663
    %v2479 = vunpack.c.h.b16 %v663
    %v2480 = vunpack.c.l.b16 %v664
    %v2481 = vunpack.c.h.b16 %v664
    %v2482 = vunpack.c.l.b16 %v665
    %v2483 = vunpack.c.h.b16 %v665
    %v2484 = vunpack.c.l.b16 %v666
    %v2485 = vunpack.c.h.b16 %v666
    %v2486 = vunpack.c.l.b16 %v667
    %v2487 = vunpack.c.h.b16 %v667
    %v2488 = vunpack.c.l.b16 %v668
    %v2489 = vunpack.c.h.b16 %v668
    %v2490 = vunpack.c.l.b16 %v669
    %v2491 = vunpack.c.h.b16 %v669
    %v2492 = vunpack.c.l.b16 %v670
    %v2493 = vunpack.c.h.b16 %v670
    %v2494 = vunpack.c.l.b16 %v671
    %v2495 = vunpack.c.h.b16 %v671
    %v2496 = vunpack.c.l.b16 %v672
    %v2497 = vunpack.c.h.b16 %v672
    %v2498 = vunpack.c.l.b16 %v673
    %v2499 = vunpack.c.h.b16 %v673
    %v2500 = vunpack.c.l.b16 %v674
    %v2501 = vunpack.c.h.b16 %v674
    %v2502 = vunpack.c.l.b16 %v675
    %v2503 = vunpack.c.h.b16 %v675
    %v2504 = vunpack.c.l.b16 %v676
    %v2505 = vunpack.c.h.b16 %v676
    %v2506 = vunpack.c.l.b16 %v677
    %v2507 = vunpack.c.h.b16 %v677
    %v2508 = vunpack.c.l.b16 %v678
    %v2509 = vunpack.c.h.b16 %v678
    %v2510 = vunpack.c.l.b16 %v679
    %v2511 = vunpack.c.h.b16 %v679
    %v2512 = vunpack.c.l.b16 %v680
    %v2513 = vunpack.c.h.b16 %v680
    %v2514 = vunpack.c.l.b16 %v681
    %v2515 = vunpack.c.h.b16 %v681
    %v2516 = vunpack.c.l.b16 %v682
    %v2517 = vunpack.c.h.b16 %v682
    %v2518 = vunpack.c.l.b16 %v683
    %v2519 = vunpack.c.h.b16 %v683
    %v2520 = vunpack.c.l.b16 %v684
    %v2521 = vunpack.c.h.b16 %v684
    %v2522 = vunpack.c.l.b16 %v685
    %v2523 = vunpack.c.h.b16 %v685
    %v2524 = vunpack.c.l.b16 %v686
    %v2525 = vunpack.c.h.b16 %v686
    %v2526 = vunpack.c.l.b16 %v687
    %v2527 = vunpack.c.h.b16 %v687
    %v2528 = vunpack.c.l.b16 %v688
    %v2529 = vunpack.c.h.b16 %v688
    %v2530 = vunpack.c.l.b16 %v689
    %v2531 = vunpack.c.h.b16 %v689
    %v2532 = vunpack.c.l.b16 %v690
    %v2533 = vunpack.c.h.b16 %v690
    %v2534 = vunpack.c.l.b16 %v691
    %v2535 = vunpack.c.h.b16 %v691
    %v2536 = vunpack.c.l.b16 %v692
    %v2537 = vunpack.c.h.b16 %v692
    %v2538 = vunpack.c.l.b16 %v693
    %v2539 = vunpack.c.h.b16 %v693
    %v2540 = vunpack.c.l.b16 %v694
    %v2541 = vunpack.c.h.b16 %v694
    %v2542 = vunpack.c.l.b16 %v695
    %v2543 = vunpack.c.h.b16 %v695
    %v2544 = vunpack.c.l.b16 %v696
    %v2545 = vunpack.c.h.b16 %v696
    %v2546 = vunpack.c.l.b16 %v697
    %v2547 = vunpack.c.h.b16 %v697
    %v2548 = vunpack.c.l.b16 %v698
    %v2549 = vunpack.c.h.b16 %v698
    %v2550 = vunpack.c.l.b16 %v699
    %v2551 = vunpack.c.h.b16 %v699
    %v2552 = vunpack.c.l.b16 %v700
    %v2553 = vunpack.c.h.b16 %v700
    %v2554 = vunpack.c.l.b16 %v701
    %v2555 = vunpack.c.h.b16 %v701
    %v2556 = vunpack.c.l.b16 %v702
    %v2557 = vunpack.c.h.b16 %v702
    %v2558 = vunpack.c.l.b16 %v703
    %v2559 = vunpack.c.h.b16 %v703
    %v2560 = vunpack.c.l.b16 %v704
    %v2561 = vunpack.c.h.b16 %v704
    %v2562 = vunpack.c.l.b16 %v705
    %v2563 = vunpack.c.h.b16 %v705
    %v2564 = vunpack.c.l.b16 %v706
    %v2565 = vunpack.c.h.b16 %v706
    %v2566 = vunpack.c.l.b16 %v707
    %v2567 = vunpack.c.h.b16 %v707
    %v2568 = vunpack.c.l.b16 %v708
    %v2569 = vunpack.c.h.b16 %v708
    %v2570 = vunpack.c.l.b16 %v709
    %v2571 = vunpack.c.h.b16 %v709
    %v2572 = vunpack.c.l.b16 %v710
    %v2573 = vunpack.c.h.b16 %v710
    %v2574 = vunpack.c.l.b16 %v711
    %v2575 = vunpack.c.h.b16 %v711
    %v2576 = vunpack.c.l.b16 %v712
    %v2577 = vunpack.c.h.b16 %v712
    %v2578 = vunpack.c.l.b16 %v713
    %v2579 = vunpack.c.h.b16 %v713
    %v2580 = vunpack.c.l.b16 %v714
    %v2581 = vunpack.c.h.b16 %v714
    %v2582 = vunpack.c.l.b16 %v715
    %v2583 = vunpack.c.h.b16 %v715
    %v2584 = vunpack.c.l.b16 %v716
    %v2585 = vunpack.c.h.b16 %v716
    %v2586 = vunpack.c.l.b16 %v717
    %v2587 = vunpack.c.h.b16 %v717
    %v2588 = vunpack.c.l.b16 %v718
    %v2589 = vunpack.c.h.b16 %v718
    %v2590 = vunpack.c.l.b16 %v719
    %v2591 = vunpack.c.h.b16 %v719
    %v2592 = vunpack.c.l.b16 %v720
    %v2593 = vunpack.c.h.b16 %v720
    %v2594 = vunpack.c.l.b16 %v721
    %v2595 = vunpack.c.h.b16 %v721
    %v2596 = vunpack.c.l.b16 %v722
    %v2597 = vunpack.c.h.b16 %v722
    %v2598 = vunpack.c.l.b16 %v723
    %v2599 = vunpack.c.h.b16 %v723
    %v2600 = vunpack.c.l.b16 %v724
    %v2601 = vunpack.c.h.b16 %v724
    %v2602 = vunpack.c.l.b16 %v725
    %v2603 = vunpack.c.h.b16 %v725
    %v2604 = vunpack.c.l.b16 %v726
    %v2605 = vunpack.c.h.b16 %v726
    %v2606 = vunpack.c.l.b16 %v727
    %v2607 = vunpack.c.h.b16 %v727
    %v2608 = vunpack.c.l.b16 %v728
    %v2609 = vunpack.c.h.b16 %v728
    %v2610 = vunpack.c.l.b16 %v729
    %v2611 = vunpack.c.h.b16 %v729
    %v2612 = vunpack.c.l.b16 %v730
    %v2613 = vunpack.c.h.b16 %v730
    %v2614 = vunpack.c.l.b16 %v731
    %v2615 = vunpack.c.h.b16 %v731
    %v2616 = vunpack.c.l.b16 %v732
    %v2617 = vunpack.c.h.b16 %v732
    %v2618 = vunpack.c.l.b16 %v733
    %v2619 = vunpack.c.h.b16 %v733
    %v2620 = vunpack.c.l.b16 %v734
    %v2621 = vunpack.c.h.b16 %v734
    %v2622 = vunpack.c.l.b16 %v735
    %v2623 = vunpack.c.h.b16 %v735
    %v2624 = vunpack.c.l.b16 %v736
    %v2625 = vunpack.c.h.b16 %v736
    %v2626 = vunpack.c.l.b16 %v737
    %v2627 = vunpack.c.h.b16 %v737
    %v2628 = vunpack.c.l.b16 %v738
    %v2629 = vunpack.c.h.b16 %v738
    %v2630 = vunpack.c.l.b16 %v739
    %v2631 = vunpack.c.h.b16 %v739
    %v2632 = vunpack.c.l.b16 %v740
    %v2633 = vunpack.c.h.b16 %v740
    %v2634 = vunpack.c.l.b16 %v741
    %v2635 = vunpack.c.h.b16 %v741
    %v2636 = vunpack.c.l.b16 %v742
    %v2637 = vunpack.c.h.b16 %v742
    %v2638 = vunpack.c.l.b16 %v743
    %v2639 = vunpack.c.h.b16 %v743
    %v2640 = vunpack.c.l.b16 %v744
    %v2641 = vunpack.c.h.b16 %v744
    %v2642 = vunpack.c.l.b16 %v745
    %v2643 = vunpack.c.h.b16 %v745
    %v2644 = vunpack.c.l.b16 %v746
    %v2645 = vunpack.c.h.b16 %v746
    %v2646 = vunpack.c.l.b16 %v747
    %v2647 = vunpack.c.h.b16 %v747
    %v2648 = vunpack.c.l.b16 %v748
    %v2649 = vunpack.c.h.b16 %v748
    %v2650 = vpack.c.b16 %v1438, %v1434
    %v2651 = vpack.c.b16 %v1439, %v1435
    %v2652 = vpack.c.b16 %v1440, %v1436
    %v2653 = vpack.c.b16 %v1441, %v1437
    %v2654 = vpack.c.b16 %v1446, %v1442
    %v2655 = vpack.c.b16 %v1447, %v1443
    %v2656 = vpack.c.b16 %v1448, %v1444
    %v2657 = vpack.c.b16 %v1449, %v1445
    %v2658 = vpack.c.b16 %v1454, %v1450
    %v2659 = vpack.c.b16 %v1455, %v1451
    %v2660 = vpack.c.b16 %v1456, %v1452
    %v2661 = vpack.c.b16 %v1457, %v1453
    %v2662 = vpack.c.b16 %v1462, %v1458
    %v2663 = vpack.c.b16 %v1463, %v1459
    %v2664 = vpack.c.b16 %v1464, %v1460
    %v2665 = vpack.c.b16 %v1465, %v1461
    %v2666 = vpack.c.b16 %v1470, %v1466
    %v2667 = vpack.c.b16 %v1471, %v1467
    %v2668 = vpack.c.b16 %v1472, %v1468
    %v2669 = vpack.c.b16 %v1473, %v1469
    %v2670 = vpack.c.b16 %v1478, %v1474
    %v2671 = vpack.c.b16 %v1479, %v1475
    %v2672 = vpack.c.b16 %v1480, %v1476
    %v2673 = vpack.c.b16 %v1481, %v1477
    %v2674 = vpack.c.b16 %v1486, %v1482
    %v2675 = vpack.c.b16 %v1487, %v1483
    %v2676 = vpack.c.b16 %v1488, %v1484
    %v2677 = vpack.c.b16 %v1489, %v1485
    %v2678 = vpack.c.b16 %v1494, %v1490
    %v2679 = vpack.c.b16 %v1495, %v1491
    %v2680 = vpack.c.b16 %v1496, %v1492
    %v2681 = vpack.c.b16 %v1497, %v1493
    %v2682 = vpack.c.b16 %v1502, %v1498
    %v2683 = vpack.c.b16 %v1503, %v1499
    %v2684 = vpack.c.b16 %v1504, %v1500
    %v2685 = vpack.c.b16 %v1505, %v1501
    %v2686 = vpack.c.b16 %v1510, %v1506
    %v2687 = vpack.c.b16 %v1511, %v1507
    %v2688 = vpack.c.b16 %v1512, %v1508
    %v2689 = vpack.c.b16 %v1513, %v1509
    %v2690 = vpack.c.b16 %v1518, %v1514
    %v2691 = vpack.c.b16 %v1519, %v1515
    %v2692 = vpack.c.b16 %v1520, %v1516
    %v2693 = vpack.c.b16 %v1521, %v1517
    %v2694 = vpack.c.b16 %v1526, %v1522
    %v2695 = vpack.c.b16 %v1527, %v1523
    %v2696 = vpack.c.b16 %v1528, %v1524
    %v2697 = vpack.c.b16 %v1529, %v1525
    %v2698 = vpack.c.b16 %v1534, %v1530
    %v2699 = vpack.c.b16 %v1535, %v1531
    %v2700 = vpack.c.b16 %v1536, %v1532
    %v2701 = vpack.c.b16 %v1537, %v1533
    %v2702 = vpack.c.b16 %v1542, %v1538
    %v2703 = vpack.c.b16 %v1543, %v1539
    %v2704 = vpack.c.b16 %v1544, %v1540
    %v2705 = vpack.c.b16 %v1545, %v1541
    %v2706 = vpack.c.b16 %v1550, %v1546
    %v2707 = vpack.c.b16 %v1551, %v1547
    %v2708 = vpack.c.b16 %v1552, %v1548
    %v2709 = vpack.c.b16 %v1553, %v1549
    %v2710 = vpack.c.b16 %v1558, %v1554
    %v2711 = vpack.c.b16 %v1559, %v1555
    %v2712 = vpack.c.b16 %v1560, %v1556
    %v2713 = vpack.c.b16 %v1561, %v1557
    %v2714 = vpack.c.b16 %v1566, %v1562
    %v2715 = vpack.c.b16 %v1567, %v1563
    %v2716 = vpack.c.b16 %v1568, %v1564
    %v2717 = vpack.c.b16 %v1569, %v1565
    %v2718 = vpack.c.b16 %v1574, %v1570
    %v2719 = vpack.c.b16 %v1575, %v1571
    %v2720 = vpack.c.b16 %v1576, %v1572
    %v2721 = vpack.c.b16 %v1577, %v1573
    %v2722 = vpack.c.b16 %v1582, %v1578
    %v2723 = vpack.c.b16 %v1583, %v1579
    %v2724 = vpack.c.b16 %v1584, %v1580
    %v2725 = vpack.c.b16 %v1585, %v1581
    %v2726 = vpack.c.b16 %v1590, %v1586
    %v2727 = vpack.c.b16 %v1591, %v1587
    %v2728 = vpack.c.b16 %v1592, %v1588
    %v2729 = vpack.c.b16 %v1593, %v1589
    %v2730 = vpack.c.b16 %v1598, %v1594
    %v2731 = vpack.c.b16 %v1599, %v1595
    %v2732 = vpack.c.b16 %v1600, %v1596
    %v2733 = vpack.c.b16 %v1601, %v1597
    %v2734 = vpack.c.b16 %v1606, %v1602
    %v2735 = vpack.c.b16 %v1607, %v1603
    %v2736 = vpack.c.b16 %v1608, %v1604
    %v2737 = vpack.c.b16 %v1609, %v1605
    %v2738 = vpack.c.b16 %v1614, %v1610
    %v2739 = vpack.c.b16 %v1615, %v1611
    %v2740 = vpack.c.b16 %v1616, %v1612
    %v2741 = vpack.c.b16 %v1617, %v1613
    %v2742 = vpack.c.b16 %v1622, %v1618
    %v2743 = vpack.c.b16 %v1623, %v1619
    %v2744 = vpack.c.b16 %v1624, %v1620
    %v2745 = vpack.c.b16 %v1625, %v1621
    %v2746 = vpack.c.b16 %v1630, %v1626
    %v2747 = vpack.c.b16 %v1631, %v1627
    %v2748 = vpack.c.b16 %v1632, %v1628
    %v2749 = vpack.c.b16 %v1633, %v1629
    %v2750 = vpack.c.b16 %v1638, %v1634
    %v2751 = vpack.c.b16 %v1639, %v1635
    %v2752 = vpack.c.b16 %v1640, %v1636
    %v2753 = vpack.c.b16 %v1641, %v1637
    %v2754 = vpack.c.b16 %v1646, %v1642
    %v2755 = vpack.c.b16 %v1647, %v1643
    %v2756 = vpack.c.b16 %v1648, %v1644
    %v2757 = vpack.c.b16 %v1649, %v1645
    %v2758 = vpack.c.b16 %v1654, %v1650
    %v2759 = vpack.c.b16 %v1655, %v1651
    %v2760 = vpack.c.b16 %v1656, %v1652
    %v2761 = vpack.c.b16 %v1657, %v1653
    %v2762 = vpack.c.b16 %v1662, %v1658
    %v2763 = vpack.c.b16 %v1663, %v1659
    %v2764 = vpack.c.b16 %v1664, %v1660
    %v2765 = vpack.c.b16 %v1665, %v1661
    %v2766 = vpack.c.b16 %v1670, %v1666
    %v2767 = vpack.c.b16 %v1671, %v1667
    %v2768 = vpack.c.b16 %v1672, %v1668
    %v2769 = vpack.c.b16 %v1673, %v1669
    %v2770 = vpack.c.b16 %v1678, %v1674
    %v2771 = vpack.c.b16 %v1679, %v1675
    %v2772 = vpack.c.b16 %v1680, %v1676
    %v2773 = vpack.c.b16 %v1681, %v1677
    %v2774 = vpack.c.b16 %v1686, %v1682
    %v2775 = vpack.c.b16 %v1687, %v1683
    %v2776 = vpack.c.b16 %v1688, %v1684
    %v2777 = vpack.c.b16 %v1689, %v1685
    %v2778 = vpack.c.b16 %v1694, %v1690
    %v2779 = vpack.c.b16 %v1695, %v1691
    %v2780 = vpack.c.b16 %v1696, %v1692
    %v2781 = vpack.c.b16 %v1697, %v1693
    %v2782 = vpack.c.b16 %v1702, %v1698
    %v2783 = vpack.c.b16 %v1703, %v1699
    %v2784 = vpack.c.b16 %v1704, %v1700
    %v2785 = vpack.c.b16 %v1705, %v1701
    %v2786 = vpack.c.b16 %v1710, %v1706
    %v2787 = vpack.c.b16 %v1711, %v1707
    %v2788 = vpack.c.b16 %v1712, %v1708
    %v2789 = vpack.c.b16 %v1713, %v1709
    %v2790 = vpack.c.b16 %v1718, %v1714
    %v2791 = vpack.c.b16 %v1719, %v1715
    %v2792 = vpack.c.b16 %v1720, %v1716
    %v2793 = vpack.c.b16 %v1721, %v1717
    %v2794 = vpack.c.b16 %v1726, %v1722
    %v2795 = vpack.c.b16 %v1727, %v1723
    %v2796 = vpack.c.b16 %v1728, %v1724
    %v2797 = vpack.c.b16 %v1729, %v1725
    %v2798 = vpack.c.b16 %v1734, %v1730
    %v2799 = vpack.c.b16 %v1735, %v1731
    %v2800 = vpack.c.b16 %v1736, %v1732
    %v2801 = vpack.c.b16 %v1737, %v1733
    %v2802 = vpack.c.b16 %v1742, %v1738
    %v2803 = vpack.c.b16 %v1743, %v1739
    %v2804 = vpack.c.b16 %v1744, %v1740
    %v2805 = vpack.c.b16 %v1745, %v1741
    %v2806 = vpack.c.b16 %v1750, %v1746
    %v2807 = vpack.c.b16 %v1751, %v1747
    %v2808 = vpack.c.b16 %v1752, %v1748
    %v2809 = vpack.c.b16 %v1753, %v1749
    %v2810 = vpack.c.b16 %v1758, %v1754
    %v2811 = vpack.c.b16 %v1759, %v1755
    %v2812 = vpack.c.b16 %v1760, %v1756
    %v2813 = vpack.c.b16 %v1761, %v1757
    %v2814 = vpack.c.b16 %v1766, %v1762
    %v2815 = vpack.c.b16 %v1767, %v1763
    %v2816 = vpack.c.b16 %v1768, %v1764
    %v2817 = vpack.c.b16 %v1769, %v1765
    %v2818 = vpack.c.b16 %v1774, %v1770
    %v2819 = vpack.c.b16 %v1775, %v1771
    %v2820 = vpack.c.b16 %v1776, %v1772
    %v2821 = vpack.c.b16 %v1777, %v1773
    %v2822 = vpack.c.b16 %v1782, %v1778
    %v2823 = vpack.c.b16 %v1783, %v1779
    %v2824 = vpack.c.b16 %v1784, %v1780
    %v2825 = vpack.c.b16 %v1785, %v1781
    %v2826 = vpack.c.b16 %v1790, %v1786
    %v2827 = vpack.c.b16 %v1791, %v1787
    %v2828 = vpack.c.b16 %v1792, %v1788
    %v2829 = vpack.c.b16 %v1793, %v1789
    %v2830 = vpack.c.b16 %v1798, %v1794
    %v2831 = vpack.c.b16 %v1799, %v1795
    %v2832 = vpack.c.b16 %v1800, %v1796
    %v2833 = vpack.c.b16 %v1801, %v1797
    %v2834 = vpack.c.b16 %v1806, %v1802
    %v2835 = vpack.c.b16 %v1807, %v1803
    %v2836 = vpack.c.b16 %v1808, %v1804
    %v2837 = vpack.c.b16 %v1809, %v1805
    %v2838 = vpack.c.b16 %v1814, %v1810
    %v2839 = vpack.c.b16 %v1815, %v1811
    %v2840 = vpack.c.b16 %v1816, %v1812
    %v2841 = vpack.c.b16 %v1817, %v1813
    %v2842 = vpack.c.b16 %v1822, %v1818
    %v2843 = vpack.c.b16 %v1823, %v1819
    %v2844 = vpack.c.b16 %v1824, %v1820
    %v2845 = vpack.c.b16 %v1825, %v1821
    %v2846 = vpack.c.b16 %v1830, %v1826
    %v2847 = vpack.c.b16 %v1831, %v1827
    %v2848 = vpack.c.b16 %v1832, %v1828
    %v2849 = vpack.c.b16 %v1833, %v1829
    %v2850 = vpack.c.b16 %v1838, %v1834
    %v2851 = vpack.c.b16 %v1839, %v1835
    %v2852 = vpack.c.b16 %v1840, %v1836
    %v2853 = vpack.c.b16 %v1841, %v1837
    %v2854 = vpack.c.b16 %v1846, %v1842
    %v2855 = vpack.c.b16 %v1847, %v1843
    %v2856 = vpack.c.b16 %v1848, %v1844
    %v2857 = vpack.c.b16 %v1849, %v1845
    %v2858 = vpack.c.b16 %v1854, %v1850
    %v2859 = vpack.c.b16 %v1855, %v1851
    %v2860 = vpack.c.b16 %v1856, %v1852
    %v2861 = vpack.c.b16 %v1857, %v1853
    %v2862 = vpack.c.b16 %v1862, %v1858
    %v2863 = vpack.c.b16 %v1863, %v1859
    %v2864 = vpack.c.b16 %v1864, %v1860
    %v2865 = vpack.c.b16 %v1865, %v1861
    %v2866 = vpack.c.b16 %v1870, %v1866
    %v2867 = vpack.c.b16 %v1871, %v1867
    %v2868 = vpack.c.b16 %v1872, %v1868
    %v2869 = vpack.c.b16 %v1873, %v1869
    %v2870 = vpack.c.b16 %v1878, %v1874
    %v2871 = vpack.c.b16 %v1879, %v1875
    %v2872 = vpack.c.b16 %v1880, %v1876
    %v2873 = vpack.c.b16 %v1881, %v1877
    %v2874 = vpack.c.b16 %v1886, %v1882
    %v2875 = vpack.c.b16 %v1887, %v1883
    %v2876 = vpack.c.b16 %v1888, %v1884
    %v2877 = vpack.c.b16 %v1889, %v1885
    %v2878 = vpack.c.b16 %v1894, %v1890
    %v2879 = vpack.c.b16 %v1895, %v1891
    %v2880 = vpack.c.b16 %v1896, %v1892
    %v2881 = vpack.c.b16 %v1897, %v1893
    %v2882 = vpack.c.b16 %v1902, %v1898
    %v2883 = vpack.c.b16 %v1903, %v1899
    %v2884 = vpack.c.b16 %v1904, %v1900
    %v2885 = vpack.c.b16 %v1905, %v1901
    %v2886 = vpack.c.b16 %v1910, %v1906
    %v2887 = vpack.c.b16 %v1911, %v1907
    %v2888 = vpack.c.b16 %v1912, %v1908
    %v2889 = vpack.c.b16 %v1913, %v1909
    %v2890 = vpack.c.b16 %v1918, %v1914
    %v2891 = vpack.c.b16 %v1919, %v1915
    %v2892 = vpack.c.b16 %v1920, %v1916
    %v2893 = vpack.c.b16 %v1921, %v1917
    %v2894 = vpack.c.b16 %v1926, %v1922
    %v2895 = vpack.c.b16 %v1927, %v1923
    %v2896 = vpack.c.b16 %v1928, %v1924
    %v2897 = vpack.c.b16 %v1929, %v1925
    %v2898 = vpack.c.b16 %v1934, %v1930
    %v2899 = vpack.c.b16 %v1935, %v1931
    %v2900 = vpack.c.b16 %v1936, %v1932
    %v2901 = vpack.c.b16 %v1937, %v1933
    %v2902 = vpack.c.b16 %v1942, %v1938
    %v2903 = vpack.c.b16 %v1943, %v1939
    %v2904 = vpack.c.b16 %v1944, %v1940
    %v2905 = vpack.c.b16 %v1945, %v1941
    %v2906 = vpack.c.b16 %v1950, %v1946
    %v2907 = vpack.c.b16 %v1951, %v1947
    %v2908 = vpack.c.b16 %v1952, %v1948
    %v2909 = vpack.c.b16 %v1953, %v1949
    %v2910 = vpack.c.b16 %v1958, %v1954
    %v2911 = vpack.c.b16 %v1959, %v1955
    %v2912 = vpack.c.b16 %v1960, %v1956
    %v2913 = vpack.c.b16 %v1961, %v1957
    %v2914 = vpack.c.b16 %v1966, %v1962
    %v2915 = vpack.c.b16 %v1967, %v1963
    %v2916 = vpack.c.b16 %v1968, %v1964
    %v2917 = vpack.c.b16 %v1969, %v1965
    %v2918 = vpack.c.b16 %v1974, %v1970
    %v2919 = vpack.c.b16 %v1975, %v1971
    %v2920 = vpack.c.b16 %v1976, %v1972
    %v2921 = vpack.c.b16 %v1977, %v1973
    %v2922 = vpack.c.b16 %v1982, %v1978
    %v2923 = vpack.c.b16 %v1983, %v1979
    %v2924 = vpack.c.b16 %v1984, %v1980
    %v2925 = vpack.c.b16 %v1985, %v1981
    %v2926 = vpack.c.b16 %v1990, %v1986
    %v2927 = vpack.c.b16 %v1991, %v1987
    %v2928 = vpack.c.b16 %v1992, %v1988
    %v2929 = vpack.c.b16 %v1993, %v1989
    %v2930 = vpack.c.b16 %v1998, %v1994
    %v2931 = vpack.c.b16 %v1999, %v1995
    %v2932 = vpack.c.b16 %v2000, %v1996
    %v2933 = vpack.c.b16 %v2001, %v1997
    %v2934 = vpack.c.b16 %v2006, %v2002
    %v2935 = vpack.c.b16 %v2007, %v2003
    %v2936 = vpack.c.b16 %v2008, %v2004
    %v2937 = vpack.c.b16 %v2009, %v2005
    %v2938 = vpack.c.b16 %v2014, %v2010
    %v2939 = vpack.c.b16 %v2015, %v2011
    %v2940 = vpack.c.b16 %v2016, %v2012
    %v2941 = vpack.c.b16 %v2017, %v2013
    %v2942 = vpack.c.b16 %v2022, %v2018
    %v2943 = vpack.c.b16 %v2023, %v2019
    %v2944 = vpack.c.b16 %v2024, %v2020
    %v2945 = vpack.c.b16 %v2025, %v2021
    %v2946 = vpack.c.b16 %v2030, %v2026
    %v2947 = vpack.c.b16 %v2031, %v2027
    %v2948 = vpack.c.b16 %v2032, %v2028
    %v2949 = vpack.c.b16 %v2033, %v2029
    %v2950 = vpack.c.b16 %v2038, %v2034
    %v2951 = vpack.c.b16 %v2039, %v2035
    %v2952 = vpack.c.b16 %v2040, %v2036
    %v2953 = vpack.c.b16 %v2041, %v2037
    %v2954 = vpack.c.b16 %v2046, %v2042
    %v2955 = vpack.c.b16 %v2047, %v2043
    %v2956 = vpack.c.b16 %v2048, %v2044
    %v2957 = vpack.c.b16 %v2049, %v2045
    %v2958 = vpack.c.b16 %v2054, %v2050
    %v2959 = vpack.c.b16 %v2055, %v2051
    %v2960 = vpack.c.b16 %v2056, %v2052
    %v2961 = vpack.c.b16 %v2057, %v2053
    %v2962 = vpack.c.b16 %v2062, %v2058
    %v2963 = vpack.c.b16 %v2063, %v2059
    %v2964 = vpack.c.b16 %v2064, %v2060
    %v2965 = vpack.c.b16 %v2065, %v2061
    %v2966 = vpack.c.b16 %v2070, %v2066
    %v2967 = vpack.c.b16 %v2071, %v2067
    %v2968 = vpack.c.b16 %v2072, %v2068
    %v2969 = vpack.c.b16 %v2073, %v2069
    %v2970 = vpack.c.b16 %v2078, %v2074
    %v2971 = vpack.c.b16 %v2079, %v2075
    %v2972 = vpack.c.b16 %v2080, %v2076
    %v2973 = vpack.c.b16 %v2081, %v2077
    %v2974 = vpack.c.b16 %v2086, %v2082
    %v2975 = vpack.c.b16 %v2087, %v2083
    %v2976 = vpack.c.b16 %v2088, %v2084
    %v2977 = vpack.c.b16 %v2089, %v2085
    %v2978 = vpack.c.b16 %v2094, %v2090
    %v2979 = vpack.c.b16 %v2095, %v2091
    %v2980 = vpack.c.b16 %v2096, %v2092
    %v2981 = vpack.c.b16 %v2097, %v2093
    %v2982 = vpack.c.b16 %v2102, %v2098
    %v2983 = vpack.c.b16 %v2103, %v2099
    %v2984 = vpack.c.b16 %v2104, %v2100
    %v2985 = vpack.c.b16 %v2105, %v2101
    %v2986 = vpack.c.b16 %v2110, %v2106
    %v2987 = vpack.c.b16 %v2111, %v2107
    %v2988 = vpack.c.b16 %v2112, %v2108
    %v2989 = vpack.c.b16 %v2113, %v2109
    %v2990 = vpack.c.b16 %v2118, %v2114
    %v2991 = vpack.c.b16 %v2119, %v2115
    %v2992 = vpack.c.b16 %v2120, %v2116
    %v2993 = vpack.c.b16 %v2121, %v2117
    %v2994 = vpack.c.b16 %v2126, %v2122
    %v2995 = vpack.c.b16 %v2127, %v2123
    %v2996 = vpack.c.b16 %v2128, %v2124
    %v2997 = vpack.c.b16 %v2129, %v2125
    %v2998 = vpack.c.b16 %v2134, %v2130
    %v2999 = vpack.c.b16 %v2135, %v2131
    %v3000 = vpack.c.b16 %v2136, %v2132
    %v3001 = vpack.c.b16 %v2137, %v2133
    %v3002 = vpack.c.b16 %v2142, %v2138
    %v3003 = vpack.c.b16 %v2143, %v2139
    %v3004 = vpack.c.b16 %v2144, %v2140
    %v3005 = vpack.c.b16 %v2145, %v2141
    %v3006 = vpack.c.b16 %v2150, %v2146
    %v3007 = vpack.c.b16 %v2151, %v2147
    %v3008 = vpack.c.b16 %v2152, %v2148
    %v3009 = vpack.c.b16 %v2153, %v2149
    %v3010 = vpack.c.b16 %v2158, %v2154
    %v3011 = vpack.c.b16 %v2159, %v2155
    %v3012 = vpack.c.b16 %v2160, %v2156
    %v3013 = vpack.c.b16 %v2161, %v2157
    %v3014 = vpack.c.b16 %v2166, %v2162
    %v3015 = vpack.c.b16 %v2167, %v2163
    %v3016 = vpack.c.b16 %v2168, %v2164
    %v3017 = vpack.c.b16 %v2169, %v2165
    %v3018 = vpack.c.b16 %v2174, %v2170
    %v3019 = vpack.c.b16 %v2175, %v2171
    %v3020 = vpack.c.b16 %v2176, %v2172
    %v3021 = vpack.c.b16 %v2177, %v2173
    %v3022 = vpack.c.b16 %v2182, %v2178
    %v3023 = vpack.c.b16 %v2183, %v2179
    %v3024 = vpack.c.b16 %v2184, %v2180
    %v3025 = vpack.c.b16 %v2185, %v2181
    %v3026 = vpack.c.b16 %v2190, %v2186
    %v3027 = vpack.c.b16 %v2191, %v2187
    %v3028 = vpack.c.b16 %v2192, %v2188
    %v3029 = vpack.c.b16 %v2193, %v2189
    %v3030 = vpack.c.b16 %v2198, %v2194
    %v3031 = vpack.c.b16 %v2199, %v2195
    %v3032 = vpack.c.b16 %v2200, %v2196
    %v3033 = vpack.c.b16 %v2201, %v2197
    %v3034 = vpack.c.b16 %v2206, %v2202
    %v3035 = vpack.c.b16 %v2207, %v2203
    %v3036 = vpack.c.b16 %v2208, %v2204
    %v3037 = vpack.c.b16 %v2209, %v2205
    %v3038 = vpack.c.b16 %v2214, %v2210
    %v3039 = vpack.c.b16 %v2215, %v2211
    %v3040 = vpack.c.b16 %v2216, %v2212
    %v3041 = vpack.c.b16 %v2217, %v2213
    %v3042 = vpack.c.b16 %v2222, %v2218
    %v3043 = vpack.c.b16 %v2223, %v2219
    %v3044 = vpack.c.b16 %v2224, %v2220
    %v3045 = vpack.c.b16 %v2225, %v2221
    %v3046 = vpack.c.b16 %v2230, %v2226
    %v3047 = vpack.c.b16 %v2231, %v2227
    %v3048 = vpack.c.b16 %v2232, %v2228
    %v3049 = vpack.c.b16 %v2233, %v2229
    %v3050 = vpack.c.b16 %v2238, %v2234
    %v3051 = vpack.c.b16 %v2239, %v2235
    %v3052 = vpack.c.b16 %v2240, %v2236
    %v3053 = vpack.c.b16 %v2241, %v2237
    %v3054 = vpack.c.b16 %v2246, %v2242
    %v3055 = vpack.c.b16 %v2247, %v2243
    %v3056 = vpack.c.b16 %v2248, %v2244
    %v3057 = vpack.c.b16 %v2249, %v2245
    %v3058 = vpack.c.b16 %v2254, %v2250
    %v3059 = vpack.c.b16 %v2255, %v2251
    %v3060 = vpack.c.b16 %v2256, %v2252
    %v3061 = vpack.c.b16 %v2257, %v2253
    %v3062 = vpack.c.b16 %v2262, %v2258
    %v3063 = vpack.c.b16 %v2263, %v2259
    %v3064 = vpack.c.b16 %v2264, %v2260
    %v3065 = vpack.c.b16 %v2265, %v2261
    %v3066 = vpack.c.b16 %v2270, %v2266
    %v3067 = vpack.c.b16 %v2271, %v2267
    %v3068 = vpack.c.b16 %v2272, %v2268
    %v3069 = vpack.c.b16 %v2273, %v2269
    %v3070 = vpack.c.b16 %v2278, %v2274
    %v3071 = vpack.c.b16 %v2279, %v2275
    %v3072 = vpack.c.b16 %v2280, %v2276
    %v3073 = vpack.c.b16 %v2281, %v2277
    %v3074 = vpack.c.b16 %v2286, %v2282
    %v3075 = vpack.c.b16 %v2287, %v2283
    %v3076 = vpack.c.b16 %v2288, %v2284
    %v3077 = vpack.c.b16 %v2289, %v2285
    %v3078 = vpack.c.b16 %v2294, %v2290
    %v3079 = vpack.c.b16 %v2295, %v2291
    %v3080 = vpack.c.b16 %v2296, %v2292
    %v3081 = vpack.c.b16 %v2297, %v2293
    %v3082 = vpack.c.b16 %v2302, %v2298
    %v3083 = vpack.c.b16 %v2303, %v2299
    %v3084 = vpack.c.b16 %v2304, %v2300
    %v3085 = vpack.c.b16 %v2305, %v2301
    %v3086 = vpack.c.b16 %v2310, %v2306
    %v3087 = vpack.c.b16 %v2311, %v2307
    %v3088 = vpack.c.b16 %v2312, %v2308
    %v3089 = vpack.c.b16 %v2313, %v2309
    %v3090 = vpack.c.b16 %v2318, %v2314
    %v3091 = vpack.c.b16 %v2319, %v2315
    %v3092 = vpack.c.b16 %v2320, %v2316
    %v3093 = vpack.c.b16 %v2321, %v2317
    %v3094 = vpack.c.b16 %v2326, %v2322
    %v3095 = vpack.c.b16 %v2327, %v2323
    %v3096 = vpack.c.b16 %v2328, %v2324
    %v3097 = vpack.c.b16 %v2329, %v2325
    %v3098 = vpack.c.b16 %v2334, %v2330
    %v3099 = vpack.c.b16 %v2335, %v2331
    %v3100 = vpack.c.b16 %v2336, %v2332
    %v3101 = vpack.c.b16 %v2337, %v2333
    %v3102 = vpack.c.b16 %v2342, %v2338
    %v3103 = vpack.c.b16 %v2343, %v2339
    %v3104 = vpack.c.b16 %v2344, %v2340
    %v3105 = vpack.c.b16 %v2345, %v2341
    %v3106 = vpack.c.b16 %v2350, %v2346
    %v3107 = vpack.c.b16 %v2351, %v2347
    %v3108 = vpack.c.b16 %v2352, %v2348
    %v3109 = vpack.c.b16 %v2353, %v2349
    %v3110 = vpack.c.b16 %v2358, %v2354
    %v3111 = vpack.c.b16 %v2359, %v2355
    %v3112 = vpack.c.b16 %v2360, %v2356
    %v3113 = vpack.c.b16 %v2361, %v2357
    %v3114 = vpack.c.b16 %v2366, %v2362
    %v3115 = vpack.c.b16 %v2367, %v2363
    %v3116 = vpack.c.b16 %v2368, %v2364
    %v3117 = vpack.c.b16 %v2369, %v2365
    %v3118 = vpack.c.b16 %v2374, %v2370
    %v3119 = vpack.c.b16 %v2375, %v2371
    %v3120 = vpack.c.b16 %v2376, %v2372
    %v3121 = vpack.c.b16 %v2377, %v2373
    %v3122 = vpack.c.b16 %v2382, %v2378
    %v3123 = vpack.c.b16 %v2383, %v2379
    %v3124 = vpack.c.b16 %v2384, %v2380
    %v3125 = vpack.c.b16 %v2385, %v2381
    %v3126 = vpack.c.b16 %v2390, %v2386
    %v3127 = vpack.c.b16 %v2391, %v2387
    %v3128 = vpack.c.b16 %v2392, %v2388
    %v3129 = vpack.c.b16 %v2393, %v2389
    %v3130 = vpack.c.b16 %v2398, %v2394
    %v3131 = vpack.c.b16 %v2399, %v2395
    %v3132 = vpack.c.b16 %v2400, %v2396
    %v3133 = vpack.c.b16 %v2401, %v2397
    %v3134 = vpack.c.b16 %v2406, %v2402
    %v3135 = vpack.c.b16 %v2407, %v2403
    %v3136 = vpack.c.b16 %v2408, %v2404
    %v3137 = vpack.c.b16 %v2409, %v2405
    %v3138 = vpack.c.b16 %v2414, %v2410
    %v3139 = vpack.c.b16 %v2415, %v2411
    %v3140 = vpack.c.b16 %v2416, %v2412
    %v3141 = vpack.c.b16 %v2417, %v2413
    %v3142 = vpack.c.b16 %v2422, %v2418
    %v3143 = vpack.c.b16 %v2423, %v2419
    %v3144 = vpack.c.b16 %v2424, %v2420
    %v3145 = vpack.c.b16 %v2425, %v2421
    %v3146 = vpack.c.b16 %v2430, %v2426
    %v3147 = vpack.c.b16 %v2431, %v2427
    %v3148 = vpack.c.b16 %v2432, %v2428
    %v3149 = vpack.c.b16 %v2433, %v2429
    %v3150 = vpack.c.b16 %v2438, %v2434
    %v3151 = vpack.c.b16 %v2439, %v2435
    %v3152 = vpack.c.b16 %v2440, %v2436
    %v3153 = vpack.c.b16 %v2441, %v2437
    %v3154 = vpack.c.b16 %v2446, %v2442
    %v3155 = vpack.c.b16 %v2447, %v2443
    %v3156 = vpack.c.b16 %v2448, %v2444
    %v3157 = vpack.c.b16 %v2449, %v2445
    %v3158 = vpack.c.b16 %v2454, %v2450
    %v3159 = vpack.c.b16 %v2455, %v2451
    %v3160 = vpack.c.b16 %v2456, %v2452
    %v3161 = vpack.c.b16 %v2457, %v2453
    %v3162 = vpack.c.b16 %v2462, %v2458
    %v3163 = vpack.c.b16 %v2463, %v2459
    %v3164 = vpack.c.b16 %v2464, %v2460
    %v3165 = vpack.c.b16 %v2465, %v2461
    %v3166 = vpack.c.b16 %v2470, %v2466
    %v3167 = vpack.c.b16 %v2471, %v2467
    %v3168 = vpack.c.b16 %v2472, %v2468
    %v3169 = vpack.c.b16 %v2473, %v2469
    %v3170 = vpack.c.b16 %v2478, %v2474
    %v3171 = vpack.c.b16 %v2479, %v2475
    %v3172 = vpack.c.b16 %v2480, %v2476
    %v3173 = vpack.c.b16 %v2481, %v2477
    %v3174 = vpack.c.b16 %v2486, %v2482
    %v3175 = vpack.c.b16 %v2487, %v2483
    %v3176 = vpack.c.b16 %v2488, %v2484
    %v3177 = vpack.c.b16 %v2489, %v2485
    %v3178 = vpack.c.b16 %v2494, %v2490
    %v3179 = vpack.c.b16 %v2495, %v2491
    %v3180 = vpack.c.b16 %v2496, %v2492
    %v3181 = vpack.c.b16 %v2497, %v2493
    %v3182 = vpack.c.b16 %v2502, %v2498
    %v3183 = vpack.c.b16 %v2503, %v2499
    %v3184 = vpack.c.b16 %v2504, %v2500
    %v3185 = vpack.c.b16 %v2505, %v2501
    %v3186 = vpack.c.b16 %v2510, %v2506
    %v3187 = vpack.c.b16 %v2511, %v2507
    %v3188 = vpack.c.b16 %v2512, %v2508
    %v3189 = vpack.c.b16 %v2513, %v2509
    %v3190 = vpack.c.b16 %v2518, %v2514
    %v3191 = vpack.c.b16 %v2519, %v2515
    %v3192 = vpack.c.b16 %v2520, %v2516
    %v3193 = vpack.c.b16 %v2521, %v2517
    %v3194 = vpack.c.b16 %v2526, %v2522
    %v3195 = vpack.c.b16 %v2527, %v2523
    %v3196 = vpack.c.b16 %v2528, %v2524
    %v3197 = vpack.c.b16 %v2529, %v2525
    %v3198 = vpack.c.b16 %v2534, %v2530
    %v3199 = vpack.c.b16 %v2535, %v2531
    %v3200 = vpack.c.b16 %v2536, %v2532
    %v3201 = vpack.c.b16 %v2537, %v2533
    %v3202 = vpack.c.b16 %v2542, %v2538
    %v3203 = vpack.c.b16 %v2543, %v2539
    %v3204 = vpack.c.b16 %v2544, %v2540
    %v3205 = vpack.c.b16 %v2545, %v2541
    %v3206 = vpack.c.b16 %v2550, %v2546
    %v3207 = vpack.c.b16 %v2551, %v2547
    %v3208 = vpack.c.b16 %v2552, %v2548
    %v3209 = vpack.c.b16 %v2553, %v2549
    %v3210 = vpack.c.b16 %v2558, %v2554
    %v3211 = vpack.c.b16 %v2559, %v2555
    %v3212 = vpack.c.b16 %v2560, %v2556
    %v3213 = vpack.c.b16 %v2561, %v2557
    %v3214 = vpack.c.b16 %v2566, %v2562
    %v3215 = vpack.c.b16 %v2567, %v2563
    %v3216 = vpack.c.b16 %v2568, %v2564
    %v3217 = vpack.c.b16 %v2569, %v2565
    %v3218 = vpack.c.b16 %v2574, %v2570
    %v3219 = vpack.c.b16 %v2575, %v2571
    %v3220 = vpack.c.b16 %v2576, %v2572
    %v3221 = vpack.c.b16 %v2577, %v2573
    %v3222 = vpack.c.b16 %v2582, %v2578
    %v3223 = vpack.c.b16 %v2583, %v2579
    %v3224 = vpack.c.b16 %v2584, %v2580
    %v3225 = vpack.c.b16 %v2585, %v2581
    %v3226 = vpack.c.b16 %v2590, %v2586
    %v3227 = vpack.c.b16 %v2591, %v2587
    %v3228 = vpack.c.b16 %v2592, %v2588
    %v3229 = vpack.c.b16 %v2593, %v2589
    %v3230 = vpack.c.b16 %v2598, %v2594
    %v3231 = vpack.c.b16 %v2599, %v2595
    %v3232 = vpack.c.b16 %v2600, %v2596
    %v3233 = vpack.c.b16 %v2601, %v2597
    %v3234 = vpack.c.b16 %v2606, %v2602
    %v3235 = vpack.c.b16 %v2607, %v2603
    %v3236 = vpack.c.b16 %v2608, %v2604
    %v3237 = vpack.c.b16 %v2609, %v2605
    %v3238 = vpack.c.b16 %v2614, %v2610
    %v3239 = vpack.c.b16 %v2615, %v2611
    %v3240 = vpack.c.b16 %v2616, %v2612
    %v3241 = vpack.c.b16 %v2617, %v2613
    %v3242 = vpack.c.b16 %v2622, %v2618
    %v3243 = vpack.c.b16 %v2623, %v2619
    %v3244 = vpack.c.b16 %v2624, %v2620
    %v3245 = vpack.c.b16 %v2625, %v2621
    %v3246 = vpack.c.b16 %v2630, %v2626
    %v3247 = vpack.c.b16 %v2631, %v2627
    %v3248 = vpack.c.b16 %v2632, %v2628
    %v3249 = vpack.c.b16 %v2633, %v2629
    %v3250 = vpack.c.b16 %v2638, %v2634
    %v3251 = vpack.c.b16 %v2639, %v2635
    %v3252 = vpack.c.b16 %v2640, %v2636
    %v3253 = vpack.c.b16 %v2641, %v2637
    %v3254 = vpack.c.b16 %v2646, %v2642
    %v3255 = vpack.c.b16 %v2647, %v2643
    %v3256 = vpack.c.b16 %v2648, %v2644
    %v3257 = vpack.c.b16 %v2649, %v2645
    %3866 = vmatpush.bf16.msra.mxu0 %v2678
    %3867 = vmatpush.bf16.msra.mxu0 %v2674
    %3868 = vmatpush.bf16.msra.mxu0 %v2670
    %3869 = vmatpush.bf16.msra.mxu0 %v2666
    %3870 = vmatpush.bf16.msra.mxu0 %v2662
    %3871 = vmatpush.bf16.msra.mxu0 %v2658
    %3872 = vmatpush.bf16.msra.mxu0 %v2654
    %3873 = vmatpush.bf16.msra.mxu0 %v2650
    %3874 = vmatmul.bf16.gmra.mxu0 %v788
    %v3875 = vpop.f32.mrf.mxu0
    %v3876 = vadd.f32 %v751, %v3875
    %v3877 = vpop.f32.mrf.mxu0
    %3878 = vdwg.mxu0
    %3879 = vmatpush.bf16.msra.mxu0 %v2710
    %3880 = vmatpush.bf16.msra.mxu0 %v2706
    %3881 = vmatpush.bf16.msra.mxu0 %v2702
    %3882 = vmatpush.bf16.msra.mxu0 %v2698
    %3883 = vmatpush.bf16.msra.mxu0 %v2694
    %3884 = vmatpush.bf16.msra.mxu0 %v2690
    %3885 = vmatpush.bf16.msra.mxu0 %v2686
    %3886 = vmatpush.bf16.msra.mxu0 %v2682
    %3887 = vmatmul.bf16.gmra.mxu0 %v789
    %v3888 = vpop.f32.mrf.mxu0
    %v3889 = vadd.f32 %v3876, %v3888
    %v3890 = vpop.f32.mrf.mxu0
    %3891 = vdwg.mxu0
    %3892 = vmatpush.bf16.msra.mxu0 %v2742
    %3893 = vmatpush.bf16.msra.mxu0 %v2738
    %3894 = vmatpush.bf16.msra.mxu0 %v2734
    %3895 = vmatpush.bf16.msra.mxu0 %v2730
    %3896 = vmatpush.bf16.msra.mxu0 %v2726
    %3897 = vmatpush.bf16.msra.mxu0 %v2722
    %3898 = vmatpush.bf16.msra.mxu0 %v2718
    %3899 = vmatpush.bf16.msra.mxu0 %v2714
    %3900 = vmatmul.bf16.gmra.mxu0 %v790
    %v3901 = vpop.f32.mrf.mxu0
    %v3902 = vadd.f32 %v3889, %v3901
    %v3903 = vpop.f32.mrf.mxu0
    %3904 = vdwg.mxu0
    %3905 = vmatpush.bf16.msra.mxu0 %v2774
    %3906 = vmatpush.bf16.msra.mxu0 %v2770
    %3907 = vmatpush.bf16.msra.mxu0 %v2766
    %3908 = vmatpush.bf16.msra.mxu0 %v2762
    %3909 = vmatpush.bf16.msra.mxu0 %v2758
    %3910 = vmatpush.bf16.msra.mxu0 %v2754
    %3911 = vmatpush.bf16.msra.mxu0 %v2750
    %3912 = vmatpush.bf16.msra.mxu0 %v2746
    %3913 = vmatmul.bf16.gmra.mxu0 %v791
    %v3914 = vpop.f32.mrf.mxu0
    %v3915 = vadd.f32 %v3902, %v3914
    %v3916 = vpop.f32.mrf.mxu0
    %3917 = vdwg.mxu0
    %3918 = vmatpush.bf16.msra.mxu0 %v2806
    %3919 = vmatpush.bf16.msra.mxu0 %v2802
    %3920 = vmatpush.bf16.msra.mxu0 %v2798
    %3921 = vmatpush.bf16.msra.mxu0 %v2794
    %3922 = vmatpush.bf16.msra.mxu0 %v2790
    %3923 = vmatpush.bf16.msra.mxu0 %v2786
    %3924 = vmatpush.bf16.msra.mxu0 %v2782
    %3925 = vmatpush.bf16.msra.mxu0 %v2778
    %3926 = vmatmul.bf16.gmra.mxu0 %v792
    %v3927 = vpop.f32.mrf.mxu0
    %v3928 = vadd.f32 %v3915, %v3927
    %v3929 = vpop.f32.mrf.mxu0
    %3930 = vdwg.mxu0
    %3931 = vmatpush.bf16.msra.mxu0 %v2838
    %3932 = vmatpush.bf16.msra.mxu0 %v2834
    %3933 = vmatpush.bf16.msra.mxu0 %v2830
    %3934 = vmatpush.bf16.msra.mxu0 %v2826
    %3935 = vmatpush.bf16.msra.mxu0 %v2822
    %3936 = vmatpush.bf16.msra.mxu0 %v2818
    %3937 = vmatpush.bf16.msra.mxu0 %v2814
    %3938 = vmatpush.bf16.msra.mxu0 %v2810
    %3939 = vmatmul.bf16.gmra.mxu0 %v793
    %v3940 = vpop.f32.mrf.mxu0
    %v3941 = vadd.f32 %v3928, %v3940
    %v3942 = vpop.f32.mrf.mxu0
    %3943 = vdwg.mxu0
    %3944 = vmatpush.bf16.msra.mxu0 %v2870
    %3945 = vmatpush.bf16.msra.mxu0 %v2866
    %3946 = vmatpush.bf16.msra.mxu0 %v2862
    %3947 = vmatpush.bf16.msra.mxu0 %v2858
    %3948 = vmatpush.bf16.msra.mxu0 %v2854
    %3949 = vmatpush.bf16.msra.mxu0 %v2850
    %3950 = vmatpush.bf16.msra.mxu0 %v2846
    %3951 = vmatpush.bf16.msra.mxu0 %v2842
    %3952 = vmatmul.bf16.gmra.mxu0 %v794
    %v3953 = vpop.f32.mrf.mxu0
    %v3954 = vadd.f32 %v3941, %v3953
    %v3955 = vpop.f32.mrf.mxu0
    %3956 = vdwg.mxu0
    %3957 = vmatpush.bf16.msra.mxu0 %v2902
    %3958 = vmatpush.bf16.msra.mxu0 %v2898
    %3959 = vmatpush.bf16.msra.mxu0 %v2894
    %3960 = vmatpush.bf16.msra.mxu0 %v2890
    %3961 = vmatpush.bf16.msra.mxu0 %v2886
    %3962 = vmatpush.bf16.msra.mxu0 %v2882
    %3963 = vmatpush.bf16.msra.mxu0 %v2878
    %3964 = vmatpush.bf16.msra.mxu0 %v2874
    %3965 = vmatmul.bf16.gmra.mxu0 %v795
    %v3966 = vpop.f32.mrf.mxu0
    %v3967 = vadd.f32 %v3954, %v3966
    %v3968 = vpop.f32.mrf.mxu0
    %3969 = vdwg.mxu0
    %3970 = vmatpush.bf16.msra.mxu0 %v2934
    %3971 = vmatpush.bf16.msra.mxu0 %v2930
    %3972 = vmatpush.bf16.msra.mxu0 %v2926
    %3973 = vmatpush.bf16.msra.mxu0 %v2922
    %3974 = vmatpush.bf16.msra.mxu0 %v2918
    %3975 = vmatpush.bf16.msra.mxu0 %v2914
    %3976 = vmatpush.bf16.msra.mxu0 %v2910
    %3977 = vmatpush.bf16.msra.mxu0 %v2906
    %3978 = vmatmul.bf16.gmra.mxu0 %v796
    %v3979 = vpop.f32.mrf.mxu0
    %v3980 = vadd.f32 %v3967, %v3979
    %v3981 = vpop.f32.mrf.mxu0
    %3982 = vdwg.mxu0
    %3983 = vmatpush.bf16.msra.mxu0 %v2966
    %3984 = vmatpush.bf16.msra.mxu0 %v2962
    %3985 = vmatpush.bf16.msra.mxu0 %v2958
    %3986 = vmatpush.bf16.msra.mxu0 %v2954
    %3987 = vmatpush.bf16.msra.mxu0 %v2950
    %3988 = vmatpush.bf16.msra.mxu0 %v2946
    %3989 = vmatpush.bf16.msra.mxu0 %v2942
    %3990 = vmatpush.bf16.msra.mxu0 %v2938
    %3991 = vmatmul.bf16.gmra.mxu0 %v797
    %v3992 = vpop.f32.mrf.mxu0
    %v3993 = vadd.f32 %v3980, %v3992
    %v3994 = vpop.f32.mrf.mxu0
    %3995 = vdwg.mxu0
    %3996 = vmatpush.bf16.msra.mxu0 %v2998
    %3997 = vmatpush.bf16.msra.mxu0 %v2994
    %3998 = vmatpush.bf16.msra.mxu0 %v2990
    %3999 = vmatpush.bf16.msra.mxu0 %v2986
    %4000 = vmatpush.bf16.msra.mxu0 %v2982
    %4001 = vmatpush.bf16.msra.mxu0 %v2978
    %4002 = vmatpush.bf16.msra.mxu0 %v2974
    %4003 = vmatpush.bf16.msra.mxu0 %v2970
    %4004 = vmatmul.bf16.gmra.mxu0 %v798
    %v4005 = vpop.f32.mrf.mxu0
    %v4006 = vadd.f32 %v3993, %v4005
    %v4007 = vpop.f32.mrf.mxu0
    %4008 = vdwg.mxu0
    %4009 = vmatpush.bf16.msra.mxu0 %v3030
    %4010 = vmatpush.bf16.msra.mxu0 %v3026
    %4011 = vmatpush.bf16.msra.mxu0 %v3022
    %4012 = vmatpush.bf16.msra.mxu0 %v3018
    %4013 = vmatpush.bf16.msra.mxu0 %v3014
    %4014 = vmatpush.bf16.msra.mxu0 %v3010
    %4015 = vmatpush.bf16.msra.mxu0 %v3006
    %4016 = vmatpush.bf16.msra.mxu0 %v3002
    %4017 = vmatmul.bf16.gmra.mxu0 %v799
    %v4018 = vpop.f32.mrf.mxu0
    %v4019 = vadd.f32 %v4006, %v4018
    %v4020 = vpop.f32.mrf.mxu0
    %4021 = vdwg.mxu0
    %4022 = vmatpush.bf16.msra.mxu0 %v3062
    %4023 = vmatpush.bf16.msra.mxu0 %v3058
    %4024 = vmatpush.bf16.msra.mxu0 %v3054
    %4025 = vmatpush.bf16.msra.mxu0 %v3050
    %4026 = vmatpush.bf16.msra.mxu0 %v3046
    %4027 = vmatpush.bf16.msra.mxu0 %v3042
    %4028 = vmatpush.bf16.msra.mxu0 %v3038
    %4029 = vmatpush.bf16.msra.mxu0 %v3034
    %4030 = vmatmul.bf16.gmra.mxu0 %v800
    %v4031 = vpop.f32.mrf.mxu0
    %v4032 = vadd.f32 %v4019, %v4031
    %v4033 = vpop.f32.mrf.mxu0
    %4034 = vdwg.mxu0
    %4035 = vmatpush.bf16.msra.mxu0 %v3094
    %4036 = vmatpush.bf16.msra.mxu0 %v3090
    %4037 = vmatpush.bf16.msra.mxu0 %v3086
    %4038 = vmatpush.bf16.msra.mxu0 %v3082
    %4039 = vmatpush.bf16.msra.mxu0 %v3078
    %4040 = vmatpush.bf16.msra.mxu0 %v3074
    %4041 = vmatpush.bf16.msra.mxu0 %v3070
    %4042 = vmatpush.bf16.msra.mxu0 %v3066
    %4043 = vmatmul.bf16.gmra.mxu0 %v801
    %v4044 = vpop.f32.mrf.mxu0
    %v4045 = vadd.f32 %v4032, %v4044
    %v4046 = vpop.f32.mrf.mxu0
    %4047 = vdwg.mxu0
    %4048 = vmatpush.bf16.msra.mxu0 %v3126
    %4049 = vmatpush.bf16.msra.mxu0 %v3122
    %4050 = vmatpush.bf16.msra.mxu0 %v3118
    %4051 = vmatpush.bf16.msra.mxu0 %v3114
    %4052 = vmatpush.bf16.msra.mxu0 %v3110
    %4053 = vmatpush.bf16.msra.mxu0 %v3106
    %4054 = vmatpush.bf16.msra.mxu0 %v3102
    %4055 = vmatpush.bf16.msra.mxu0 %v3098
    %4056 = vmatmul.bf16.gmra.mxu0 %v802
    %v4057 = vpop.f32.mrf.mxu0
    %v4058 = vadd.f32 %v4045, %v4057
    %v4059 = vpop.f32.mrf.mxu0
    %4060 = vdwg.mxu0
    %4061 = vmatpush.bf16.msra.mxu0 %v3158
    %4062 = vmatpush.bf16.msra.mxu0 %v3154
    %4063 = vmatpush.bf16.msra.mxu0 %v3150
    %4064 = vmatpush.bf16.msra.mxu0 %v3146
    %4065 = vmatpush.bf16.msra.mxu0 %v3142
    %4066 = vmatpush.bf16.msra.mxu0 %v3138
    %4067 = vmatpush.bf16.msra.mxu0 %v3134
    %4068 = vmatpush.bf16.msra.mxu0 %v3130
    %4069 = vmatmul.bf16.gmra.mxu0 %v803
    %v4070 = vpop.f32.mrf.mxu0
    %v4071 = vadd.f32 %v4058, %v4070
    %v4072 = vpop.f32.mrf.mxu0
    %4073 = vdwg.mxu0
    %4074 = vmatpush.bf16.msra.mxu0 %v3190
    %4075 = vmatpush.bf16.msra.mxu0 %v3186
    %4076 = vmatpush.bf16.msra.mxu0 %v3182
    %4077 = vmatpush.bf16.msra.mxu0 %v3178
    %4078 = vmatpush.bf16.msra.mxu0 %v3174
    %4079 = vmatpush.bf16.msra.mxu0 %v3170
    %4080 = vmatpush.bf16.msra.mxu0 %v3166
    %4081 = vmatpush.bf16.msra.mxu0 %v3162
    %4082 = vmatmul.bf16.gmra.mxu0 %v804
    %v4083 = vpop.f32.mrf.mxu0
    %v4084 = vadd.f32 %v4071, %v4083
    %v4085 = vpop.f32.mrf.mxu0
    %4086 = vdwg.mxu0
    %4087 = vmatpush.bf16.msra.mxu0 %v3222
    %4088 = vmatpush.bf16.msra.mxu0 %v3218
    %4089 = vmatpush.bf16.msra.mxu0 %v3214
    %4090 = vmatpush.bf16.msra.mxu0 %v3210
    %4091 = vmatpush.bf16.msra.mxu0 %v3206
    %4092 = vmatpush.bf16.msra.mxu0 %v3202
    %4093 = vmatpush.bf16.msra.mxu0 %v3198
    %4094 = vmatpush.bf16.msra.mxu0 %v3194
    %4095 = vmatmul.bf16.gmra.mxu0 %v805
    %v4096 = vpop.f32.mrf.mxu0
    %v4097 = vadd.f32 %v4084, %v4096
    %v4098 = vpop.f32.mrf.mxu0
    %4099 = vdwg.mxu0
    %4100 = vmatpush.bf16.msra.mxu0 %v3254
    %4101 = vmatpush.bf16.msra.mxu0 %v3250
    %4102 = vmatpush.bf16.msra.mxu0 %v3246
    %4103 = vmatpush.bf16.msra.mxu0 %v3242
    %4104 = vmatpush.bf16.msra.mxu0 %v3238
    %4105 = vmatpush.bf16.msra.mxu0 %v3234
    %4106 = vmatpush.bf16.msra.mxu0 %v3230
    %4107 = vmatpush.bf16.msra.mxu0 %v3226
    %4108 = vmatmul.bf16.gmra.mxu0 %v806
    %v4109 = vpop.f32.mrf.mxu0
    %v4110 = vadd.f32 %v4097, %v4109
    %v4111 = vpop.f32.mrf.mxu0
    %4112 = vdwg.mxu0
    %4113 = vmatpush.bf16.msra.mxu0 %v2679
    %4114 = vmatpush.bf16.msra.mxu0 %v2675
    %4115 = vmatpush.bf16.msra.mxu0 %v2671
    %4116 = vmatpush.bf16.msra.mxu0 %v2667
    %4117 = vmatpush.bf16.msra.mxu0 %v2663
    %4118 = vmatpush.bf16.msra.mxu0 %v2659
    %4119 = vmatpush.bf16.msra.mxu0 %v2655
    %4120 = vmatpush.bf16.msra.mxu0 %v2651
    %4121 = vmatmul.bf16.gmra.mxu0 %v788
    %v4122 = vpop.f32.mrf.mxu0
    %v4123 = vadd.f32 %v752, %v4122
    %v4124 = vpop.f32.mrf.mxu0
    %4125 = vdwg.mxu0
    %4126 = vmatpush.bf16.msra.mxu0 %v2711
    %4127 = vmatpush.bf16.msra.mxu0 %v2707
    %4128 = vmatpush.bf16.msra.mxu0 %v2703
    %4129 = vmatpush.bf16.msra.mxu0 %v2699
    %4130 = vmatpush.bf16.msra.mxu0 %v2695
    %4131 = vmatpush.bf16.msra.mxu0 %v2691
    %4132 = vmatpush.bf16.msra.mxu0 %v2687
    %4133 = vmatpush.bf16.msra.mxu0 %v2683
    %4134 = vmatmul.bf16.gmra.mxu0 %v789
    %v4135 = vpop.f32.mrf.mxu0
    %v4136 = vadd.f32 %v4123, %v4135
    %v4137 = vpop.f32.mrf.mxu0
    %4138 = vdwg.mxu0
    %4139 = vmatpush.bf16.msra.mxu0 %v2743
    %4140 = vmatpush.bf16.msra.mxu0 %v2739
    %4141 = vmatpush.bf16.msra.mxu0 %v2735
    %4142 = vmatpush.bf16.msra.mxu0 %v2731
    %4143 = vmatpush.bf16.msra.mxu0 %v2727
    %4144 = vmatpush.bf16.msra.mxu0 %v2723
    %4145 = vmatpush.bf16.msra.mxu0 %v2719
    %4146 = vmatpush.bf16.msra.mxu0 %v2715
    %4147 = vmatmul.bf16.gmra.mxu0 %v790
    %v4148 = vpop.f32.mrf.mxu0
    %v4149 = vadd.f32 %v4136, %v4148
    %v4150 = vpop.f32.mrf.mxu0
    %4151 = vdwg.mxu0
    %4152 = vmatpush.bf16.msra.mxu0 %v2775
    %4153 = vmatpush.bf16.msra.mxu0 %v2771
    %4154 = vmatpush.bf16.msra.mxu0 %v2767
    %4155 = vmatpush.bf16.msra.mxu0 %v2763
    %4156 = vmatpush.bf16.msra.mxu0 %v2759
    %4157 = vmatpush.bf16.msra.mxu0 %v2755
    %4158 = vmatpush.bf16.msra.mxu0 %v2751
    %4159 = vmatpush.bf16.msra.mxu0 %v2747
    %4160 = vmatmul.bf16.gmra.mxu0 %v791
    %v4161 = vpop.f32.mrf.mxu0
    %v4162 = vadd.f32 %v4149, %v4161
    %v4163 = vpop.f32.mrf.mxu0
    %4164 = vdwg.mxu0
    %4165 = vmatpush.bf16.msra.mxu0 %v2807
    %4166 = vmatpush.bf16.msra.mxu0 %v2803
    %4167 = vmatpush.bf16.msra.mxu0 %v2799
    %4168 = vmatpush.bf16.msra.mxu0 %v2795
    %4169 = vmatpush.bf16.msra.mxu0 %v2791
    %4170 = vmatpush.bf16.msra.mxu0 %v2787
    %4171 = vmatpush.bf16.msra.mxu0 %v2783
    %4172 = vmatpush.bf16.msra.mxu0 %v2779
    %4173 = vmatmul.bf16.gmra.mxu0 %v792
    %v4174 = vpop.f32.mrf.mxu0
    %v4175 = vadd.f32 %v4162, %v4174
    %v4176 = vpop.f32.mrf.mxu0
    %4177 = vdwg.mxu0
    %4178 = vmatpush.bf16.msra.mxu0 %v2839
    %4179 = vmatpush.bf16.msra.mxu0 %v2835
    %4180 = vmatpush.bf16.msra.mxu0 %v2831
    %4181 = vmatpush.bf16.msra.mxu0 %v2827
    %4182 = vmatpush.bf16.msra.mxu0 %v2823
    %4183 = vmatpush.bf16.msra.mxu0 %v2819
    %4184 = vmatpush.bf16.msra.mxu0 %v2815
    %4185 = vmatpush.bf16.msra.mxu0 %v2811
    %4186 = vmatmul.bf16.gmra.mxu0 %v793
    %v4187 = vpop.f32.mrf.mxu0
    %v4188 = vadd.f32 %v4175, %v4187
    %v4189 = vpop.f32.mrf.mxu0
    %4190 = vdwg.mxu0
    %4191 = vmatpush.bf16.msra.mxu0 %v2871
    %4192 = vmatpush.bf16.msra.mxu0 %v2867
    %4193 = vmatpush.bf16.msra.mxu0 %v2863
    %4194 = vmatpush.bf16.msra.mxu0 %v2859
    %4195 = vmatpush.bf16.msra.mxu0 %v2855
    %4196 = vmatpush.bf16.msra.mxu0 %v2851
    %4197 = vmatpush.bf16.msra.mxu0 %v2847
    %4198 = vmatpush.bf16.msra.mxu0 %v2843
    %4199 = vmatmul.bf16.gmra.mxu0 %v794
    %v4200 = vpop.f32.mrf.mxu0
    %v4201 = vadd.f32 %v4188, %v4200
    %v4202 = vpop.f32.mrf.mxu0
    %4203 = vdwg.mxu0
    %4204 = vmatpush.bf16.msra.mxu0 %v2903
    %4205 = vmatpush.bf16.msra.mxu0 %v2899
    %4206 = vmatpush.bf16.msra.mxu0 %v2895
    %4207 = vmatpush.bf16.msra.mxu0 %v2891
    %4208 = vmatpush.bf16.msra.mxu0 %v2887
    %4209 = vmatpush.bf16.msra.mxu0 %v2883
    %4210 = vmatpush.bf16.msra.mxu0 %v2879
    %4211 = vmatpush.bf16.msra.mxu0 %v2875
    %4212 = vmatmul.bf16.gmra.mxu0 %v795
    %v4213 = vpop.f32.mrf.mxu0
    %v4214 = vadd.f32 %v4201, %v4213
    %v4215 = vpop.f32.mrf.mxu0
    %4216 = vdwg.mxu0
    %4217 = vmatpush.bf16.msra.mxu0 %v2935
    %4218 = vmatpush.bf16.msra.mxu0 %v2931
    %4219 = vmatpush.bf16.msra.mxu0 %v2927
    %4220 = vmatpush.bf16.msra.mxu0 %v2923
    %4221 = vmatpush.bf16.msra.mxu0 %v2919
    %4222 = vmatpush.bf16.msra.mxu0 %v2915
    %4223 = vmatpush.bf16.msra.mxu0 %v2911
    %4224 = vmatpush.bf16.msra.mxu0 %v2907
    %4225 = vmatmul.bf16.gmra.mxu0 %v796
    %v4226 = vpop.f32.mrf.mxu0
    %v4227 = vadd.f32 %v4214, %v4226
    %v4228 = vpop.f32.mrf.mxu0
    %4229 = vdwg.mxu0
    %4230 = vmatpush.bf16.msra.mxu0 %v2967
    %4231 = vmatpush.bf16.msra.mxu0 %v2963
    %4232 = vmatpush.bf16.msra.mxu0 %v2959
    %4233 = vmatpush.bf16.msra.mxu0 %v2955
    %4234 = vmatpush.bf16.msra.mxu0 %v2951
    %4235 = vmatpush.bf16.msra.mxu0 %v2947
    %4236 = vmatpush.bf16.msra.mxu0 %v2943
    %4237 = vmatpush.bf16.msra.mxu0 %v2939
    %4238 = vmatmul.bf16.gmra.mxu0 %v797
    %v4239 = vpop.f32.mrf.mxu0
    %v4240 = vadd.f32 %v4227, %v4239
    %v4241 = vpop.f32.mrf.mxu0
    %4242 = vdwg.mxu0
    %4243 = vmatpush.bf16.msra.mxu0 %v2999
    %4244 = vmatpush.bf16.msra.mxu0 %v2995
    %4245 = vmatpush.bf16.msra.mxu0 %v2991
    %4246 = vmatpush.bf16.msra.mxu0 %v2987
    %4247 = vmatpush.bf16.msra.mxu0 %v2983
    %4248 = vmatpush.bf16.msra.mxu0 %v2979
    %4249 = vmatpush.bf16.msra.mxu0 %v2975
    %4250 = vmatpush.bf16.msra.mxu0 %v2971
    %4251 = vmatmul.bf16.gmra.mxu0 %v798
    %v4252 = vpop.f32.mrf.mxu0
    %v4253 = vadd.f32 %v4240, %v4252
    %v4254 = vpop.f32.mrf.mxu0
    %4255 = vdwg.mxu0
    %4256 = vmatpush.bf16.msra.mxu0 %v3031
    %4257 = vmatpush.bf16.msra.mxu0 %v3027
    %4258 = vmatpush.bf16.msra.mxu0 %v3023
    %4259 = vmatpush.bf16.msra.mxu0 %v3019
    %4260 = vmatpush.bf16.msra.mxu0 %v3015
    %4261 = vmatpush.bf16.msra.mxu0 %v3011
    %4262 = vmatpush.bf16.msra.mxu0 %v3007
    %4263 = vmatpush.bf16.msra.mxu0 %v3003
    %4264 = vmatmul.bf16.gmra.mxu0 %v799
    %v4265 = vpop.f32.mrf.mxu0
    %v4266 = vadd.f32 %v4253, %v4265
    %v4267 = vpop.f32.mrf.mxu0
    %4268 = vdwg.mxu0
    %4269 = vmatpush.bf16.msra.mxu0 %v3063
    %4270 = vmatpush.bf16.msra.mxu0 %v3059
    %4271 = vmatpush.bf16.msra.mxu0 %v3055
    %4272 = vmatpush.bf16.msra.mxu0 %v3051
    %4273 = vmatpush.bf16.msra.mxu0 %v3047
    %4274 = vmatpush.bf16.msra.mxu0 %v3043
    %4275 = vmatpush.bf16.msra.mxu0 %v3039
    %4276 = vmatpush.bf16.msra.mxu0 %v3035
    %4277 = vmatmul.bf16.gmra.mxu0 %v800
    %v4278 = vpop.f32.mrf.mxu0
    %v4279 = vadd.f32 %v4266, %v4278
    %v4280 = vpop.f32.mrf.mxu0
    %4281 = vdwg.mxu0
    %4282 = vmatpush.bf16.msra.mxu0 %v3095
    %4283 = vmatpush.bf16.msra.mxu0 %v3091
    %4284 = vmatpush.bf16.msra.mxu0 %v3087
    %4285 = vmatpush.bf16.msra.mxu0 %v3083
    %4286 = vmatpush.bf16.msra.mxu0 %v3079
    %4287 = vmatpush.bf16.msra.mxu0 %v3075
    %4288 = vmatpush.bf16.msra.mxu0 %v3071
    %4289 = vmatpush.bf16.msra.mxu0 %v3067
    %4290 = vmatmul.bf16.gmra.mxu0 %v801
    %v4291 = vpop.f32.mrf.mxu0
    %v4292 = vadd.f32 %v4279, %v4291
    %v4293 = vpop.f32.mrf.mxu0
    %4294 = vdwg.mxu0
    %4295 = vmatpush.bf16.msra.mxu0 %v3127
    %4296 = vmatpush.bf16.msra.mxu0 %v3123
    %4297 = vmatpush.bf16.msra.mxu0 %v3119
    %4298 = vmatpush.bf16.msra.mxu0 %v3115
    %4299 = vmatpush.bf16.msra.mxu0 %v3111
    %4300 = vmatpush.bf16.msra.mxu0 %v3107
    %4301 = vmatpush.bf16.msra.mxu0 %v3103
    %4302 = vmatpush.bf16.msra.mxu0 %v3099
    %4303 = vmatmul.bf16.gmra.mxu0 %v802
    %v4304 = vpop.f32.mrf.mxu0
    %v4305 = vadd.f32 %v4292, %v4304
    %v4306 = vpop.f32.mrf.mxu0
    %4307 = vdwg.mxu0
    %4308 = vmatpush.bf16.msra.mxu0 %v3159
    %4309 = vmatpush.bf16.msra.mxu0 %v3155
    %4310 = vmatpush.bf16.msra.mxu0 %v3151
    %4311 = vmatpush.bf16.msra.mxu0 %v3147
    %4312 = vmatpush.bf16.msra.mxu0 %v3143
    %4313 = vmatpush.bf16.msra.mxu0 %v3139
    %4314 = vmatpush.bf16.msra.mxu0 %v3135
    %4315 = vmatpush.bf16.msra.mxu0 %v3131
    %4316 = vmatmul.bf16.gmra.mxu0 %v803
    %v4317 = vpop.f32.mrf.mxu0
    %v4318 = vadd.f32 %v4305, %v4317
    %v4319 = vpop.f32.mrf.mxu0
    %4320 = vdwg.mxu0
    %4321 = vmatpush.bf16.msra.mxu0 %v3191
    %4322 = vmatpush.bf16.msra.mxu0 %v3187
    %4323 = vmatpush.bf16.msra.mxu0 %v3183
    %4324 = vmatpush.bf16.msra.mxu0 %v3179
    %4325 = vmatpush.bf16.msra.mxu0 %v3175
    %4326 = vmatpush.bf16.msra.mxu0 %v3171
    %4327 = vmatpush.bf16.msra.mxu0 %v3167
    %4328 = vmatpush.bf16.msra.mxu0 %v3163
    %4329 = vmatmul.bf16.gmra.mxu0 %v804
    %v4330 = vpop.f32.mrf.mxu0
    %v4331 = vadd.f32 %v4318, %v4330
    %v4332 = vpop.f32.mrf.mxu0
    %4333 = vdwg.mxu0
    %4334 = vmatpush.bf16.msra.mxu0 %v3223
    %4335 = vmatpush.bf16.msra.mxu0 %v3219
    %4336 = vmatpush.bf16.msra.mxu0 %v3215
    %4337 = vmatpush.bf16.msra.mxu0 %v3211
    %4338 = vmatpush.bf16.msra.mxu0 %v3207
    %4339 = vmatpush.bf16.msra.mxu0 %v3203
    %4340 = vmatpush.bf16.msra.mxu0 %v3199
    %4341 = vmatpush.bf16.msra.mxu0 %v3195
    %4342 = vmatmul.bf16.gmra.mxu0 %v805
    %v4343 = vpop.f32.mrf.mxu0
    %v4344 = vadd.f32 %v4331, %v4343
    %v4345 = vpop.f32.mrf.mxu0
    %4346 = vdwg.mxu0
    %4347 = vmatpush.bf16.msra.mxu0 %v3255
    %4348 = vmatpush.bf16.msra.mxu0 %v3251
    %4349 = vmatpush.bf16.msra.mxu0 %v3247
    %4350 = vmatpush.bf16.msra.mxu0 %v3243
    %4351 = vmatpush.bf16.msra.mxu0 %v3239
    %4352 = vmatpush.bf16.msra.mxu0 %v3235
    %4353 = vmatpush.bf16.msra.mxu0 %v3231
    %4354 = vmatpush.bf16.msra.mxu0 %v3227
    %4355 = vmatmul.bf16.gmra.mxu0 %v806
    %v4356 = vpop.f32.mrf.mxu0
    %v4357 = vadd.f32 %v4344, %v4356
    %v4358 = vpop.f32.mrf.mxu0
    %4359 = vdwg.mxu0
    %4360 = vmatpush.bf16.msra.mxu0 %v2680
    %4361 = vmatpush.bf16.msra.mxu0 %v2676
    %4362 = vmatpush.bf16.msra.mxu0 %v2672
    %4363 = vmatpush.bf16.msra.mxu0 %v2668
    %4364 = vmatpush.bf16.msra.mxu0 %v2664
    %4365 = vmatpush.bf16.msra.mxu0 %v2660
    %4366 = vmatpush.bf16.msra.mxu0 %v2656
    %4367 = vmatpush.bf16.msra.mxu0 %v2652
    %4368 = vmatmul.bf16.gmra.mxu0 %v788
    %v4369 = vpop.f32.mrf.mxu0
    %v4370 = vadd.f32 %v753, %v4369
    %v4371 = vpop.f32.mrf.mxu0
    %4372 = vdwg.mxu0
    %4373 = vmatpush.bf16.msra.mxu0 %v2712
    %4374 = vmatpush.bf16.msra.mxu0 %v2708
    %4375 = vmatpush.bf16.msra.mxu0 %v2704
    %4376 = vmatpush.bf16.msra.mxu0 %v2700
    %4377 = vmatpush.bf16.msra.mxu0 %v2696
    %4378 = vmatpush.bf16.msra.mxu0 %v2692
    %4379 = vmatpush.bf16.msra.mxu0 %v2688
    %4380 = vmatpush.bf16.msra.mxu0 %v2684
    %4381 = vmatmul.bf16.gmra.mxu0 %v789
    %v4382 = vpop.f32.mrf.mxu0
    %v4383 = vadd.f32 %v4370, %v4382
    %v4384 = vpop.f32.mrf.mxu0
    %4385 = vdwg.mxu0
    %4386 = vmatpush.bf16.msra.mxu0 %v2744
    %4387 = vmatpush.bf16.msra.mxu0 %v2740
    %4388 = vmatpush.bf16.msra.mxu0 %v2736
    %4389 = vmatpush.bf16.msra.mxu0 %v2732
    %4390 = vmatpush.bf16.msra.mxu0 %v2728
    %4391 = vmatpush.bf16.msra.mxu0 %v2724
    %4392 = vmatpush.bf16.msra.mxu0 %v2720
    %4393 = vmatpush.bf16.msra.mxu0 %v2716
    %4394 = vmatmul.bf16.gmra.mxu0 %v790
    %v4395 = vpop.f32.mrf.mxu0
    %v4396 = vadd.f32 %v4383, %v4395
    %v4397 = vpop.f32.mrf.mxu0
    %4398 = vdwg.mxu0
    %4399 = vmatpush.bf16.msra.mxu0 %v2776
    %4400 = vmatpush.bf16.msra.mxu0 %v2772
    %4401 = vmatpush.bf16.msra.mxu0 %v2768
    %4402 = vmatpush.bf16.msra.mxu0 %v2764
    %4403 = vmatpush.bf16.msra.mxu0 %v2760
    %4404 = vmatpush.bf16.msra.mxu0 %v2756
    %4405 = vmatpush.bf16.msra.mxu0 %v2752
    %4406 = vmatpush.bf16.msra.mxu0 %v2748
    %4407 = vmatmul.bf16.gmra.mxu0 %v791
    %v4408 = vpop.f32.mrf.mxu0
    %v4409 = vadd.f32 %v4396, %v4408
    %v4410 = vpop.f32.mrf.mxu0
    %4411 = vdwg.mxu0
    %4412 = vmatpush.bf16.msra.mxu0 %v2808
    %4413 = vmatpush.bf16.msra.mxu0 %v2804
    %4414 = vmatpush.bf16.msra.mxu0 %v2800
    %4415 = vmatpush.bf16.msra.mxu0 %v2796
    %4416 = vmatpush.bf16.msra.mxu0 %v2792
    %4417 = vmatpush.bf16.msra.mxu0 %v2788
    %4418 = vmatpush.bf16.msra.mxu0 %v2784
    %4419 = vmatpush.bf16.msra.mxu0 %v2780
    %4420 = vmatmul.bf16.gmra.mxu0 %v792
    %v4421 = vpop.f32.mrf.mxu0
    %v4422 = vadd.f32 %v4409, %v4421
    %v4423 = vpop.f32.mrf.mxu0
    %4424 = vdwg.mxu0
    %4425 = vmatpush.bf16.msra.mxu0 %v2840
    %4426 = vmatpush.bf16.msra.mxu0 %v2836
    %4427 = vmatpush.bf16.msra.mxu0 %v2832
    %4428 = vmatpush.bf16.msra.mxu0 %v2828
    %4429 = vmatpush.bf16.msra.mxu0 %v2824
    %4430 = vmatpush.bf16.msra.mxu0 %v2820
    %4431 = vmatpush.bf16.msra.mxu0 %v2816
    %4432 = vmatpush.bf16.msra.mxu0 %v2812
    %4433 = vmatmul.bf16.gmra.mxu0 %v793
    %v4434 = vpop.f32.mrf.mxu0
    %v4435 = vadd.f32 %v4422, %v4434
    %v4436 = vpop.f32.mrf.mxu0
    %4437 = vdwg.mxu0
    %4438 = vmatpush.bf16.msra.mxu0 %v2872
    %4439 = vmatpush.bf16.msra.mxu0 %v2868
    %4440 = vmatpush.bf16.msra.mxu0 %v2864
    %4441 = vmatpush.bf16.msra.mxu0 %v2860
    %4442 = vmatpush.bf16.msra.mxu0 %v2856
    %4443 = vmatpush.bf16.msra.mxu0 %v2852
    %4444 = vmatpush.bf16.msra.mxu0 %v2848
    %4445 = vmatpush.bf16.msra.mxu0 %v2844
    %4446 = vmatmul.bf16.gmra.mxu0 %v794
    %v4447 = vpop.f32.mrf.mxu0
    %v4448 = vadd.f32 %v4435, %v4447
    %v4449 = vpop.f32.mrf.mxu0
    %4450 = vdwg.mxu0
    %4451 = vmatpush.bf16.msra.mxu0 %v2904
    %4452 = vmatpush.bf16.msra.mxu0 %v2900
    %4453 = vmatpush.bf16.msra.mxu0 %v2896
    %4454 = vmatpush.bf16.msra.mxu0 %v2892
    %4455 = vmatpush.bf16.msra.mxu0 %v2888
    %4456 = vmatpush.bf16.msra.mxu0 %v2884
    %4457 = vmatpush.bf16.msra.mxu0 %v2880
    %4458 = vmatpush.bf16.msra.mxu0 %v2876
    %4459 = vmatmul.bf16.gmra.mxu0 %v795
    %v4460 = vpop.f32.mrf.mxu0
    %v4461 = vadd.f32 %v4448, %v4460
    %v4462 = vpop.f32.mrf.mxu0
    %4463 = vdwg.mxu0
    %4464 = vmatpush.bf16.msra.mxu0 %v2936
    %4465 = vmatpush.bf16.msra.mxu0 %v2932
    %4466 = vmatpush.bf16.msra.mxu0 %v2928
    %4467 = vmatpush.bf16.msra.mxu0 %v2924
    %4468 = vmatpush.bf16.msra.mxu0 %v2920
    %4469 = vmatpush.bf16.msra.mxu0 %v2916
    %4470 = vmatpush.bf16.msra.mxu0 %v2912
    %4471 = vmatpush.bf16.msra.mxu0 %v2908
    %4472 = vmatmul.bf16.gmra.mxu0 %v796
    %v4473 = vpop.f32.mrf.mxu0
    %v4474 = vadd.f32 %v4461, %v4473
    %v4475 = vpop.f32.mrf.mxu0
    %4476 = vdwg.mxu0
    %4477 = vmatpush.bf16.msra.mxu0 %v2968
    %4478 = vmatpush.bf16.msra.mxu0 %v2964
    %4479 = vmatpush.bf16.msra.mxu0 %v2960
    %4480 = vmatpush.bf16.msra.mxu0 %v2956
    %4481 = vmatpush.bf16.msra.mxu0 %v2952
    %4482 = vmatpush.bf16.msra.mxu0 %v2948
    %4483 = vmatpush.bf16.msra.mxu0 %v2944
    %4484 = vmatpush.bf16.msra.mxu0 %v2940
    %4485 = vmatmul.bf16.gmra.mxu0 %v797
    %v4486 = vpop.f32.mrf.mxu0
    %v4487 = vadd.f32 %v4474, %v4486
    %v4488 = vpop.f32.mrf.mxu0
    %4489 = vdwg.mxu0
    %4490 = vmatpush.bf16.msra.mxu0 %v3000
    %4491 = vmatpush.bf16.msra.mxu0 %v2996
    %4492 = vmatpush.bf16.msra.mxu0 %v2992
    %4493 = vmatpush.bf16.msra.mxu0 %v2988
    %4494 = vmatpush.bf16.msra.mxu0 %v2984
    %4495 = vmatpush.bf16.msra.mxu0 %v2980
    %4496 = vmatpush.bf16.msra.mxu0 %v2976
    %4497 = vmatpush.bf16.msra.mxu0 %v2972
    %4498 = vmatmul.bf16.gmra.mxu0 %v798
    %v4499 = vpop.f32.mrf.mxu0
    %v4500 = vadd.f32 %v4487, %v4499
    %v4501 = vpop.f32.mrf.mxu0
    %4502 = vdwg.mxu0
    %4503 = vmatpush.bf16.msra.mxu0 %v3032
    %4504 = vmatpush.bf16.msra.mxu0 %v3028
    %4505 = vmatpush.bf16.msra.mxu0 %v3024
    %4506 = vmatpush.bf16.msra.mxu0 %v3020
    %4507 = vmatpush.bf16.msra.mxu0 %v3016
    %4508 = vmatpush.bf16.msra.mxu0 %v3012
    %4509 = vmatpush.bf16.msra.mxu0 %v3008
    %4510 = vmatpush.bf16.msra.mxu0 %v3004
    %4511 = vmatmul.bf16.gmra.mxu0 %v799
    %v4512 = vpop.f32.mrf.mxu0
    %v4513 = vadd.f32 %v4500, %v4512
    %v4514 = vpop.f32.mrf.mxu0
    %4515 = vdwg.mxu0
    %4516 = vmatpush.bf16.msra.mxu0 %v3064
    %4517 = vmatpush.bf16.msra.mxu0 %v3060
    %4518 = vmatpush.bf16.msra.mxu0 %v3056
    %4519 = vmatpush.bf16.msra.mxu0 %v3052
    %4520 = vmatpush.bf16.msra.mxu0 %v3048
    %4521 = vmatpush.bf16.msra.mxu0 %v3044
    %4522 = vmatpush.bf16.msra.mxu0 %v3040
    %4523 = vmatpush.bf16.msra.mxu0 %v3036
    %4524 = vmatmul.bf16.gmra.mxu0 %v800
    %v4525 = vpop.f32.mrf.mxu0
    %v4526 = vadd.f32 %v4513, %v4525
    %v4527 = vpop.f32.mrf.mxu0
    %4528 = vdwg.mxu0
    %4529 = vmatpush.bf16.msra.mxu0 %v3096
    %4530 = vmatpush.bf16.msra.mxu0 %v3092
    %4531 = vmatpush.bf16.msra.mxu0 %v3088
    %4532 = vmatpush.bf16.msra.mxu0 %v3084
    %4533 = vmatpush.bf16.msra.mxu0 %v3080
    %4534 = vmatpush.bf16.msra.mxu0 %v3076
    %4535 = vmatpush.bf16.msra.mxu0 %v3072
    %4536 = vmatpush.bf16.msra.mxu0 %v3068
    %4537 = vmatmul.bf16.gmra.mxu0 %v801
    %v4538 = vpop.f32.mrf.mxu0
    %v4539 = vadd.f32 %v4526, %v4538
    %v4540 = vpop.f32.mrf.mxu0
    %4541 = vdwg.mxu0
    %4542 = vmatpush.bf16.msra.mxu0 %v3128
    %4543 = vmatpush.bf16.msra.mxu0 %v3124
    %4544 = vmatpush.bf16.msra.mxu0 %v3120
    %4545 = vmatpush.bf16.msra.mxu0 %v3116
    %4546 = vmatpush.bf16.msra.mxu0 %v3112
    %4547 = vmatpush.bf16.msra.mxu0 %v3108
    %4548 = vmatpush.bf16.msra.mxu0 %v3104
    %4549 = vmatpush.bf16.msra.mxu0 %v3100
    %4550 = vmatmul.bf16.gmra.mxu0 %v802
    %v4551 = vpop.f32.mrf.mxu0
    %v4552 = vadd.f32 %v4539, %v4551
    %v4553 = vpop.f32.mrf.mxu0
    %4554 = vdwg.mxu0
    %4555 = vmatpush.bf16.msra.mxu0 %v3160
    %4556 = vmatpush.bf16.msra.mxu0 %v3156
    %4557 = vmatpush.bf16.msra.mxu0 %v3152
    %4558 = vmatpush.bf16.msra.mxu0 %v3148
    %4559 = vmatpush.bf16.msra.mxu0 %v3144
    %4560 = vmatpush.bf16.msra.mxu0 %v3140
    %4561 = vmatpush.bf16.msra.mxu0 %v3136
    %4562 = vmatpush.bf16.msra.mxu0 %v3132
    %4563 = vmatmul.bf16.gmra.mxu0 %v803
    %v4564 = vpop.f32.mrf.mxu0
    %v4565 = vadd.f32 %v4552, %v4564
    %v4566 = vpop.f32.mrf.mxu0
    %4567 = vdwg.mxu0
    %4568 = vmatpush.bf16.msra.mxu0 %v3192
    %4569 = vmatpush.bf16.msra.mxu0 %v3188
    %4570 = vmatpush.bf16.msra.mxu0 %v3184
    %4571 = vmatpush.bf16.msra.mxu0 %v3180
    %4572 = vmatpush.bf16.msra.mxu0 %v3176
    %4573 = vmatpush.bf16.msra.mxu0 %v3172
    %4574 = vmatpush.bf16.msra.mxu0 %v3168
    %4575 = vmatpush.bf16.msra.mxu0 %v3164
    %4576 = vmatmul.bf16.gmra.mxu0 %v804
    %v4577 = vpop.f32.mrf.mxu0
    %v4578 = vadd.f32 %v4565, %v4577
    %v4579 = vpop.f32.mrf.mxu0
    %4580 = vdwg.mxu0
    %4581 = vmatpush.bf16.msra.mxu0 %v3224
    %4582 = vmatpush.bf16.msra.mxu0 %v3220
    %4583 = vmatpush.bf16.msra.mxu0 %v3216
    %4584 = vmatpush.bf16.msra.mxu0 %v3212
    %4585 = vmatpush.bf16.msra.mxu0 %v3208
    %4586 = vmatpush.bf16.msra.mxu0 %v3204
    %4587 = vmatpush.bf16.msra.mxu0 %v3200
    %4588 = vmatpush.bf16.msra.mxu0 %v3196
    %4589 = vmatmul.bf16.gmra.mxu0 %v805
    %v4590 = vpop.f32.mrf.mxu0
    %v4591 = vadd.f32 %v4578, %v4590
    %v4592 = vpop.f32.mrf.mxu0
    %4593 = vdwg.mxu0
    %4594 = vmatpush.bf16.msra.mxu0 %v3256
    %4595 = vmatpush.bf16.msra.mxu0 %v3252
    %4596 = vmatpush.bf16.msra.mxu0 %v3248
    %4597 = vmatpush.bf16.msra.mxu0 %v3244
    %4598 = vmatpush.bf16.msra.mxu0 %v3240
    %4599 = vmatpush.bf16.msra.mxu0 %v3236
    %4600 = vmatpush.bf16.msra.mxu0 %v3232
    %4601 = vmatpush.bf16.msra.mxu0 %v3228
    %4602 = vmatmul.bf16.gmra.mxu0 %v806
    %v4603 = vpop.f32.mrf.mxu0
    %v4604 = vadd.f32 %v4591, %v4603
    %v4605 = vpop.f32.mrf.mxu0
    %4606 = vdwg.mxu0
    %4607 = vmatpush.bf16.msra.mxu0 %v2681
    %4608 = vmatpush.bf16.msra.mxu0 %v2677
    %4609 = vmatpush.bf16.msra.mxu0 %v2673
    %4610 = vmatpush.bf16.msra.mxu0 %v2669
    %4611 = vmatpush.bf16.msra.mxu0 %v2665
    %4612 = vmatpush.bf16.msra.mxu0 %v2661
    %4613 = vmatpush.bf16.msra.mxu0 %v2657
    %4614 = vmatpush.bf16.msra.mxu0 %v2653
    %4615 = vmatmul.bf16.gmra.mxu0 %v788
    %v4616 = vpop.f32.mrf.mxu0
    %v4617 = vadd.f32 %v754, %v4616
    %v4618 = vpop.f32.mrf.mxu0
    %4619 = vdwg.mxu0
    %4620 = vmatpush.bf16.msra.mxu0 %v2713
    %4621 = vmatpush.bf16.msra.mxu0 %v2709
    %4622 = vmatpush.bf16.msra.mxu0 %v2705
    %4623 = vmatpush.bf16.msra.mxu0 %v2701
    %4624 = vmatpush.bf16.msra.mxu0 %v2697
    %4625 = vmatpush.bf16.msra.mxu0 %v2693
    %4626 = vmatpush.bf16.msra.mxu0 %v2689
    %4627 = vmatpush.bf16.msra.mxu0 %v2685
    %4628 = vmatmul.bf16.gmra.mxu0 %v789
    %v4629 = vpop.f32.mrf.mxu0
    %v4630 = vadd.f32 %v4617, %v4629
    %v4631 = vpop.f32.mrf.mxu0
    %4632 = vdwg.mxu0
    %4633 = vmatpush.bf16.msra.mxu0 %v2745
    %4634 = vmatpush.bf16.msra.mxu0 %v2741
    %4635 = vmatpush.bf16.msra.mxu0 %v2737
    %4636 = vmatpush.bf16.msra.mxu0 %v2733
    %4637 = vmatpush.bf16.msra.mxu0 %v2729
    %4638 = vmatpush.bf16.msra.mxu0 %v2725
    %4639 = vmatpush.bf16.msra.mxu0 %v2721
    %4640 = vmatpush.bf16.msra.mxu0 %v2717
    %4641 = vmatmul.bf16.gmra.mxu0 %v790
    %v4642 = vpop.f32.mrf.mxu0
    %v4643 = vadd.f32 %v4630, %v4642
    %v4644 = vpop.f32.mrf.mxu0
    %4645 = vdwg.mxu0
    %4646 = vmatpush.bf16.msra.mxu0 %v2777
    %4647 = vmatpush.bf16.msra.mxu0 %v2773
    %4648 = vmatpush.bf16.msra.mxu0 %v2769
    %4649 = vmatpush.bf16.msra.mxu0 %v2765
    %4650 = vmatpush.bf16.msra.mxu0 %v2761
    %4651 = vmatpush.bf16.msra.mxu0 %v2757
    %4652 = vmatpush.bf16.msra.mxu0 %v2753
    %4653 = vmatpush.bf16.msra.mxu0 %v2749
    %4654 = vmatmul.bf16.gmra.mxu0 %v791
    %v4655 = vpop.f32.mrf.mxu0
    %v4656 = vadd.f32 %v4643, %v4655
    %v4657 = vpop.f32.mrf.mxu0
    %4658 = vdwg.mxu0
    %4659 = vmatpush.bf16.msra.mxu0 %v2809
    %4660 = vmatpush.bf16.msra.mxu0 %v2805
    %4661 = vmatpush.bf16.msra.mxu0 %v2801
    %4662 = vmatpush.bf16.msra.mxu0 %v2797
    %4663 = vmatpush.bf16.msra.mxu0 %v2793
    %4664 = vmatpush.bf16.msra.mxu0 %v2789
    %4665 = vmatpush.bf16.msra.mxu0 %v2785
    %4666 = vmatpush.bf16.msra.mxu0 %v2781
    %4667 = vmatmul.bf16.gmra.mxu0 %v792
    %v4668 = vpop.f32.mrf.mxu0
    %v4669 = vadd.f32 %v4656, %v4668
    %v4670 = vpop.f32.mrf.mxu0
    %4671 = vdwg.mxu0
    %4672 = vmatpush.bf16.msra.mxu0 %v2841
    %4673 = vmatpush.bf16.msra.mxu0 %v2837
    %4674 = vmatpush.bf16.msra.mxu0 %v2833
    %4675 = vmatpush.bf16.msra.mxu0 %v2829
    %4676 = vmatpush.bf16.msra.mxu0 %v2825
    %4677 = vmatpush.bf16.msra.mxu0 %v2821
    %4678 = vmatpush.bf16.msra.mxu0 %v2817
    %4679 = vmatpush.bf16.msra.mxu0 %v2813
    %4680 = vmatmul.bf16.gmra.mxu0 %v793
    %v4681 = vpop.f32.mrf.mxu0
    %v4682 = vadd.f32 %v4669, %v4681
    %v4683 = vpop.f32.mrf.mxu0
    %4684 = vdwg.mxu0
    %4685 = vmatpush.bf16.msra.mxu0 %v2873
    %4686 = vmatpush.bf16.msra.mxu0 %v2869
    %4687 = vmatpush.bf16.msra.mxu0 %v2865
    %4688 = vmatpush.bf16.msra.mxu0 %v2861
    %4689 = vmatpush.bf16.msra.mxu0 %v2857
    %4690 = vmatpush.bf16.msra.mxu0 %v2853
    %4691 = vmatpush.bf16.msra.mxu0 %v2849
    %4692 = vmatpush.bf16.msra.mxu0 %v2845
    %4693 = vmatmul.bf16.gmra.mxu0 %v794
    %v4694 = vpop.f32.mrf.mxu0
    %v4695 = vadd.f32 %v4682, %v4694
    %v4696 = vpop.f32.mrf.mxu0
    %4697 = vdwg.mxu0
    %4698 = vmatpush.bf16.msra.mxu0 %v2905
    %4699 = vmatpush.bf16.msra.mxu0 %v2901
    %4700 = vmatpush.bf16.msra.mxu0 %v2897
    %4701 = vmatpush.bf16.msra.mxu0 %v2893
    %4702 = vmatpush.bf16.msra.mxu0 %v2889
    %4703 = vmatpush.bf16.msra.mxu0 %v2885
    %4704 = vmatpush.bf16.msra.mxu0 %v2881
    %4705 = vmatpush.bf16.msra.mxu0 %v2877
    %4706 = vmatmul.bf16.gmra.mxu0 %v795
    %v4707 = vpop.f32.mrf.mxu0
    %v4708 = vadd.f32 %v4695, %v4707
    %v4709 = vpop.f32.mrf.mxu0
    %4710 = vdwg.mxu0
    %4711 = vmatpush.bf16.msra.mxu0 %v2937
    %4712 = vmatpush.bf16.msra.mxu0 %v2933
    %4713 = vmatpush.bf16.msra.mxu0 %v2929
    %4714 = vmatpush.bf16.msra.mxu0 %v2925
    %4715 = vmatpush.bf16.msra.mxu0 %v2921
    %4716 = vmatpush.bf16.msra.mxu0 %v2917
    %4717 = vmatpush.bf16.msra.mxu0 %v2913
    %4718 = vmatpush.bf16.msra.mxu0 %v2909
    %4719 = vmatmul.bf16.gmra.mxu0 %v796
    %v4720 = vpop.f32.mrf.mxu0
    %v4721 = vadd.f32 %v4708, %v4720
    %v4722 = vpop.f32.mrf.mxu0
    %4723 = vdwg.mxu0
    %4724 = vmatpush.bf16.msra.mxu0 %v2969
    %4725 = vmatpush.bf16.msra.mxu0 %v2965
    %4726 = vmatpush.bf16.msra.mxu0 %v2961
    %4727 = vmatpush.bf16.msra.mxu0 %v2957
    %4728 = vmatpush.bf16.msra.mxu0 %v2953
    %4729 = vmatpush.bf16.msra.mxu0 %v2949
    %4730 = vmatpush.bf16.msra.mxu0 %v2945
    %4731 = vmatpush.bf16.msra.mxu0 %v2941
    %4732 = vmatmul.bf16.gmra.mxu0 %v797
    %v4733 = vpop.f32.mrf.mxu0
    %v4734 = vadd.f32 %v4721, %v4733
    %v4735 = vpop.f32.mrf.mxu0
    %4736 = vdwg.mxu0
    %4737 = vmatpush.bf16.msra.mxu0 %v3001
    %4738 = vmatpush.bf16.msra.mxu0 %v2997
    %4739 = vmatpush.bf16.msra.mxu0 %v2993
    %4740 = vmatpush.bf16.msra.mxu0 %v2989
    %4741 = vmatpush.bf16.msra.mxu0 %v2985
    %4742 = vmatpush.bf16.msra.mxu0 %v2981
    %4743 = vmatpush.bf16.msra.mxu0 %v2977
    %4744 = vmatpush.bf16.msra.mxu0 %v2973
    %4745 = vmatmul.bf16.gmra.mxu0 %v798
    %v4746 = vpop.f32.mrf.mxu0
    %v4747 = vadd.f32 %v4734, %v4746
    %v4748 = vpop.f32.mrf.mxu0
    %4749 = vdwg.mxu0
    %4750 = vmatpush.bf16.msra.mxu0 %v3033
    %4751 = vmatpush.bf16.msra.mxu0 %v3029
    %4752 = vmatpush.bf16.msra.mxu0 %v3025
    %4753 = vmatpush.bf16.msra.mxu0 %v3021
    %4754 = vmatpush.bf16.msra.mxu0 %v3017
    %4755 = vmatpush.bf16.msra.mxu0 %v3013
    %4756 = vmatpush.bf16.msra.mxu0 %v3009
    %4757 = vmatpush.bf16.msra.mxu0 %v3005
    %4758 = vmatmul.bf16.gmra.mxu0 %v799
    %v4759 = vpop.f32.mrf.mxu0
    %v4760 = vadd.f32 %v4747, %v4759
    %v4761 = vpop.f32.mrf.mxu0
    %4762 = vdwg.mxu0
    %4763 = vmatpush.bf16.msra.mxu0 %v3065
    %4764 = vmatpush.bf16.msra.mxu0 %v3061
    %4765 = vmatpush.bf16.msra.mxu0 %v3057
    %4766 = vmatpush.bf16.msra.mxu0 %v3053
    %4767 = vmatpush.bf16.msra.mxu0 %v3049
    %4768 = vmatpush.bf16.msra.mxu0 %v3045
    %4769 = vmatpush.bf16.msra.mxu0 %v3041
    %4770 = vmatpush.bf16.msra.mxu0 %v3037
    %4771 = vmatmul.bf16.gmra.mxu0 %v800
    %v4772 = vpop.f32.mrf.mxu0
    %v4773 = vadd.f32 %v4760, %v4772
    %v4774 = vpop.f32.mrf.mxu0
    %4775 = vdwg.mxu0
    %4776 = vmatpush.bf16.msra.mxu0 %v3097
    %4777 = vmatpush.bf16.msra.mxu0 %v3093
    %4778 = vmatpush.bf16.msra.mxu0 %v3089
    %4779 = vmatpush.bf16.msra.mxu0 %v3085
    %4780 = vmatpush.bf16.msra.mxu0 %v3081
    %4781 = vmatpush.bf16.msra.mxu0 %v3077
    %4782 = vmatpush.bf16.msra.mxu0 %v3073
    %4783 = vmatpush.bf16.msra.mxu0 %v3069
    %4784 = vmatmul.bf16.gmra.mxu0 %v801
    %v4785 = vpop.f32.mrf.mxu0
    %v4786 = vadd.f32 %v4773, %v4785
    %v4787 = vpop.f32.mrf.mxu0
    %4788 = vdwg.mxu0
    %4789 = vmatpush.bf16.msra.mxu0 %v3129
    %4790 = vmatpush.bf16.msra.mxu0 %v3125
    %4791 = vmatpush.bf16.msra.mxu0 %v3121
    %4792 = vmatpush.bf16.msra.mxu0 %v3117
    %4793 = vmatpush.bf16.msra.mxu0 %v3113
    %4794 = vmatpush.bf16.msra.mxu0 %v3109
    %4795 = vmatpush.bf16.msra.mxu0 %v3105
    %4796 = vmatpush.bf16.msra.mxu0 %v3101
    %4797 = vmatmul.bf16.gmra.mxu0 %v802
    %v4798 = vpop.f32.mrf.mxu0
    %v4799 = vadd.f32 %v4786, %v4798
    %v4800 = vpop.f32.mrf.mxu0
    %4801 = vdwg.mxu0
    %4802 = vmatpush.bf16.msra.mxu0 %v3161
    %4803 = vmatpush.bf16.msra.mxu0 %v3157
    %4804 = vmatpush.bf16.msra.mxu0 %v3153
    %4805 = vmatpush.bf16.msra.mxu0 %v3149
    %4806 = vmatpush.bf16.msra.mxu0 %v3145
    %4807 = vmatpush.bf16.msra.mxu0 %v3141
    %4808 = vmatpush.bf16.msra.mxu0 %v3137
    %4809 = vmatpush.bf16.msra.mxu0 %v3133
    %4810 = vmatmul.bf16.gmra.mxu0 %v803
    %v4811 = vpop.f32.mrf.mxu0
    %v4812 = vadd.f32 %v4799, %v4811
    %v4813 = vpop.f32.mrf.mxu0
    %4814 = vdwg.mxu0
    %4815 = vmatpush.bf16.msra.mxu0 %v3193
    %4816 = vmatpush.bf16.msra.mxu0 %v3189
    %4817 = vmatpush.bf16.msra.mxu0 %v3185
    %4818 = vmatpush.bf16.msra.mxu0 %v3181
    %4819 = vmatpush.bf16.msra.mxu0 %v3177
    %4820 = vmatpush.bf16.msra.mxu0 %v3173
    %4821 = vmatpush.bf16.msra.mxu0 %v3169
    %4822 = vmatpush.bf16.msra.mxu0 %v3165
    %4823 = vmatmul.bf16.gmra.mxu0 %v804
    %v4824 = vpop.f32.mrf.mxu0
    %v4825 = vadd.f32 %v4812, %v4824
    %v4826 = vpop.f32.mrf.mxu0
    %4827 = vdwg.mxu0
    %4828 = vmatpush.bf16.msra.mxu0 %v3225
    %4829 = vmatpush.bf16.msra.mxu0 %v3221
    %4830 = vmatpush.bf16.msra.mxu0 %v3217
    %4831 = vmatpush.bf16.msra.mxu0 %v3213
    %4832 = vmatpush.bf16.msra.mxu0 %v3209
    %4833 = vmatpush.bf16.msra.mxu0 %v3205
    %4834 = vmatpush.bf16.msra.mxu0 %v3201
    %4835 = vmatpush.bf16.msra.mxu0 %v3197
    %4836 = vmatmul.bf16.gmra.mxu0 %v805
    %v4837 = vpop.f32.mrf.mxu0
    %v4838 = vadd.f32 %v4825, %v4837
    %v4839 = vpop.f32.mrf.mxu0
    %4840 = vdwg.mxu0
    %4841 = vmatpush.bf16.msra.mxu0 %v3257
    %4842 = vmatpush.bf16.msra.mxu0 %v3253
    %4843 = vmatpush.bf16.msra.mxu0 %v3249
    %4844 = vmatpush.bf16.msra.mxu0 %v3245
    %4845 = vmatpush.bf16.msra.mxu0 %v3241
    %4846 = vmatpush.bf16.msra.mxu0 %v3237
    %4847 = vmatpush.bf16.msra.mxu0 %v3233
    %4848 = vmatpush.bf16.msra.mxu0 %v3229
    %4849 = vmatmul.bf16.gmra.mxu0 %v806
    %v4850 = vpop.f32.mrf.mxu0
    %v4851 = vadd.f32 %v4838, %v4850
    %v4852 = vpop.f32.mrf.mxu0
    %4853 = vdwg.mxu0
    %v4854 = vmax.f32 %v4110, 0.0
    %v4855 = vmax.f32 %v4357, 0.0
    %v4856 = vmax.f32 %v4604, 0.0
    %v4857 = vmax.f32 %v4851, 0.0
    %v4858 = vpack.c.bf16 %v4854, %v4854
    %v4859 = vpack.c.bf16 %v4855, %v4855
    %v4860 = vpack.c.bf16 %v4856, %v4856
    %v4861 = vpack.c.bf16 %v4857, %v4857
    %v4862 = vld [vmem:[#allocation8] sm:$0xff]
    %v4863 = vld [vmem:[#allocation8 + $0x8] sm:$0xff]
    %v4864 = vld [vmem:[#allocation8 + $0x10] sm:$0xff]
    %v4865 = vld [vmem:[#allocation8 + $0x18] sm:$0xff]
    %v4866 = vld [vmem:[#allocation8 + $0x20] sm:$0xff]
    %v4867 = vld [vmem:[#allocation8 + $0x28] sm:$0xff]
    %v4868 = vld [vmem:[#allocation8 + $0x30] sm:$0xff]
    %v4869 = vld [vmem:[#allocation8 + $0x38] sm:$0xff]
    %v4870 = vld [vmem:[#allocation8 + $0x40] sm:$0xff]
    %v4871 = vld [vmem:[#allocation8 + $0x48] sm:$0xff]
    %v4872 = vld [vmem:[#allocation8 + $0x50] sm:$0xff]
    %v4873 = vld [vmem:[#allocation8 + $0x58] sm:$0xff]
    %v4874 = vld [vmem:[#allocation8 + $0x60] sm:$0xff]
    %v4875 = vld [vmem:[#allocation8 + $0x68] sm:$0xff]
    %v4876 = vld [vmem:[#allocation8 + $0x70] sm:$0xff]
    %v4877 = vld [vmem:[#allocation8 + $0x78] sm:$0xff]
    %v4878 = vld [vmem:[#allocation8 + $0x80] sm:$0xff]
    %v4879 = vld [vmem:[#allocation8 + $0x88] sm:$0xff]
    %v4880 = vld [vmem:[#allocation8 + $0x90] sm:$0xff]
    %v4881 = vld [vmem:[#allocation8 + $0x98] sm:$0xff]
    %v4882 = vld [vmem:[#allocation8 + $0xa0] sm:$0xff]
    %v4883 = vld [vmem:[#allocation8 + $0xa8] sm:$0xff]
    %v4884 = vld [vmem:[#allocation8 + $0xb0] sm:$0xff]
    %v4885 = vld [vmem:[#allocation8 + $0xb8] sm:$0xff]
    %v4886 = vld [vmem:[#allocation8 + $0xc0] sm:$0xff]
    %v4887 = vld [vmem:[#allocation8 + $0xc8] sm:$0xff]
    %v4888 = vld [vmem:[#allocation8 + $0xd0] sm:$0xff]
    %v4889 = vld [vmem:[#allocation8 + $0xd8] sm:$0xff]
    %v4890 = vld [vmem:[#allocation8 + $0xe0] sm:$0xff]
    %v4891 = vld [vmem:[#allocation8 + $0xe8] sm:$0xff]
    %v4892 = vld [vmem:[#allocation8 + $0xf0] sm:$0xff]
    %v4893 = vld [vmem:[#allocation8 + $0xf8] sm:$0xff]
    %v4894 = vld [vmem:[#allocation8 + $0x100] sm:$0xff]
    %v4895 = vld [vmem:[#allocation8 + $0x108] sm:$0xff]
    %v4896 = vld [vmem:[#allocation8 + $0x110] sm:$0xff]
    %v4897 = vld [vmem:[#allocation8 + $0x118] sm:$0xff]
    %v4898 = vld [vmem:[#allocation8 + $0x120] sm:$0xff]
    %v4899 = vld [vmem:[#allocation8 + $0x128] sm:$0xff]
    %v4900 = vld [vmem:[#allocation8 + $0x130] sm:$0xff]
    %v4901 = vld [vmem:[#allocation8 + $0x138] sm:$0xff]
    %v4902 = vld [vmem:[#allocation8 + $0x140] sm:$0xff]
    %v4903 = vld [vmem:[#allocation8 + $0x148] sm:$0xff]
    %v4904 = vld [vmem:[#allocation8 + $0x150] sm:$0xff]
    %v4905 = vld [vmem:[#allocation8 + $0x158] sm:$0xff]
    %v4906 = vld [vmem:[#allocation8 + $0x160] sm:$0xff]
    %v4907 = vld [vmem:[#allocation8 + $0x168] sm:$0xff]
    %v4908 = vld [vmem:[#allocation8 + $0x170] sm:$0xff]
    %v4909 = vld [vmem:[#allocation8 + $0x178] sm:$0xff]
    %v4910 = vld [vmem:[#allocation8 + $0x180] sm:$0xff]
    %v4911 = vld [vmem:[#allocation8 + $0x188] sm:$0xff]
    %v4912 = vld [vmem:[#allocation8 + $0x190] sm:$0xff]
    %v4913 = vld [vmem:[#allocation8 + $0x198] sm:$0xff]
    %v4914 = vld [vmem:[#allocation8 + $0x1a0] sm:$0xff]
    %v4915 = vld [vmem:[#allocation8 + $0x1a8] sm:$0xff]
    %v4916 = vld [vmem:[#allocation8 + $0x1b0] sm:$0xff]
    %v4917 = vld [vmem:[#allocation8 + $0x1b8] sm:$0xff]
    %v4918 = vld [vmem:[#allocation8 + $0x1c0] sm:$0xff]
    %v4919 = vld [vmem:[#allocation8 + $0x1c8] sm:$0xff]
    %v4920 = vld [vmem:[#allocation8 + $0x1d0] sm:$0xff]
    %v4921 = vld [vmem:[#allocation8 + $0x1d8] sm:$0xff]
    %v4922 = vld [vmem:[#allocation8 + $0x1e0] sm:$0xff]
    %v4923 = vld [vmem:[#allocation8 + $0x1e8] sm:$0xff]
    %v4924 = vld [vmem:[#allocation8 + $0x1f0] sm:$0xff]
    %v4925 = vld [vmem:[#allocation8 + $0x1f8] sm:$0xff]
    %v4926 = vld [vmem:[#allocation8 + $0x200] sm:$0xff]
    %v4927 = vld [vmem:[#allocation8 + $0x208] sm:$0xff]
    %v4928 = vld [vmem:[#allocation8 + $0x210] sm:$0xff]
    %v4929 = vld [vmem:[#allocation8 + $0x218] sm:$0xff]
    %v4930 = vld [vmem:[#allocation8 + $0x220] sm:$0xff]
    %v4931 = vld [vmem:[#allocation8 + $0x228] sm:$0xff]
    %v4932 = vld [vmem:[#allocation8 + $0x230] sm:$0xff]
    %v4933 = vld [vmem:[#allocation8 + $0x238] sm:$0xff]
    %v4934 = vld [vmem:[#allocation8 + $0x240] sm:$0xff]
    %v4935 = vld [vmem:[#allocation8 + $0x248] sm:$0xff]
    %v4936 = vld [vmem:[#allocation8 + $0x250] sm:$0xff]
    %v4937 = vld [vmem:[#allocation8 + $0x258] sm:$0xff]
    %v4938 = vld [vmem:[#allocation8 + $0x260] sm:$0xff]
    %v4939 = vld [vmem:[#allocation8 + $0x268] sm:$0xff]
    %v4940 = vld [vmem:[#allocation8 + $0x270] sm:$0xff]
    %v4941 = vld [vmem:[#allocation8 + $0x278] sm:$0xff]
    %v4942 = vld [vmem:[#allocation8 + $0x280] sm:$0xff]
    %v4943 = vld [vmem:[#allocation8 + $0x288] sm:$0xff]
    %v4944 = vld [vmem:[#allocation8 + $0x290] sm:$0xff]
    %v4945 = vld [vmem:[#allocation8 + $0x298] sm:$0xff]
    %v4946 = vld [vmem:[#allocation8 + $0x2a0] sm:$0xff]
    %v4947 = vld [vmem:[#allocation8 + $0x2a8] sm:$0xff]
    %v4948 = vld [vmem:[#allocation8 + $0x2b0] sm:$0xff]
    %v4949 = vld [vmem:[#allocation8 + $0x2b8] sm:$0xff]
    %v4950 = vld [vmem:[#allocation8 + $0x2c0] sm:$0xff]
    %v4951 = vld [vmem:[#allocation8 + $0x2c8] sm:$0xff]
    %v4952 = vld [vmem:[#allocation8 + $0x2d0] sm:$0xff]
    %v4953 = vld [vmem:[#allocation8 + $0x2d8] sm:$0xff]
    %v4954 = vld [vmem:[#allocation8 + $0x2e0] sm:$0xff]
    %v4955 = vld [vmem:[#allocation8 + $0x2e8] sm:$0xff]
    %v4956 = vld [vmem:[#allocation8 + $0x2f0] sm:$0xff]
    %v4957 = vld [vmem:[#allocation8 + $0x2f8] sm:$0xff]
    %v4958 = vld [vmem:[#allocation8 + $0x300] sm:$0xff]
    %v4959 = vld [vmem:[#allocation8 + $0x308] sm:$0xff]
    %v4960 = vld [vmem:[#allocation8 + $0x310] sm:$0xff]
    %v4961 = vld [vmem:[#allocation8 + $0x318] sm:$0xff]
    %v4962 = vld [vmem:[#allocation8 + $0x320] sm:$0xff]
    %v4963 = vld [vmem:[#allocation8 + $0x328] sm:$0xff]
    %v4964 = vld [vmem:[#allocation8 + $0x330] sm:$0xff]
    %v4965 = vld [vmem:[#allocation8 + $0x338] sm:$0xff]
    %v4966 = vld [vmem:[#allocation8 + $0x340] sm:$0xff]
    %v4967 = vld [vmem:[#allocation8 + $0x348] sm:$0xff]
    %v4968 = vld [vmem:[#allocation8 + $0x350] sm:$0xff]
    %v4969 = vld [vmem:[#allocation8 + $0x358] sm:$0xff]
    %v4970 = vld [vmem:[#allocation8 + $0x360] sm:$0xff]
    %v4971 = vld [vmem:[#allocation8 + $0x368] sm:$0xff]
    %v4972 = vld [vmem:[#allocation8 + $0x370] sm:$0xff]
    %v4973 = vld [vmem:[#allocation8 + $0x378] sm:$0xff]
    %v4974 = vld [vmem:[#allocation8 + $0x380] sm:$0xff]
    %v4975 = vld [vmem:[#allocation8 + $0x388] sm:$0xff]
    %v4976 = vld [vmem:[#allocation8 + $0x390] sm:$0xff]
    %v4977 = vld [vmem:[#allocation8 + $0x398] sm:$0xff]
    %v4978 = vld [vmem:[#allocation8 + $0x3a0] sm:$0xff]
    %v4979 = vld [vmem:[#allocation8 + $0x3a8] sm:$0xff]
    %v4980 = vld [vmem:[#allocation8 + $0x3b0] sm:$0xff]
    %v4981 = vld [vmem:[#allocation8 + $0x3b8] sm:$0xff]
    %v4982 = vld [vmem:[#allocation8 + $0x3c0] sm:$0xff]
    %v4983 = vld [vmem:[#allocation8 + $0x3c8] sm:$0xff]
    %v4984 = vld [vmem:[#allocation8 + $0x3d0] sm:$0xff]
    %v4985 = vld [vmem:[#allocation8 + $0x3d8] sm:$0xff]
    %v4986 = vld [vmem:[#allocation8 + $0x3e0] sm:$0xff]
    %v4987 = vld [vmem:[#allocation8 + $0x3e8] sm:$0xff]
    %v4988 = vld [vmem:[#allocation8 + $0x3f0] sm:$0xff]
    %v4989 = vld [vmem:[#allocation8 + $0x3f8] sm:$0xff]
    %v4990 = vld [vmem:[#allocation10] sm:$0xf]
    %v4992 = vperm.slane %v4990, 0
    %v4993 = vperm.slane %v4990, 1
    %v4994 = vperm.slane %v4990, 2
    %v4995 = vperm.slane %v4990, 3
    %v5128 = vunpack.c.l.b16 %v4862
    %v5129 = vunpack.c.h.b16 %v4862
    %v5130 = vunpack.c.l.b16 %v4863
    %v5131 = vunpack.c.h.b16 %v4863
    %v5132 = vunpack.c.l.b16 %v4864
    %v5133 = vunpack.c.h.b16 %v4864
    %v5134 = vunpack.c.l.b16 %v4865
    %v5135 = vunpack.c.h.b16 %v4865
    %v5136 = vunpack.c.l.b16 %v4866
    %v5137 = vunpack.c.h.b16 %v4866
    %v5138 = vunpack.c.l.b16 %v4867
    %v5139 = vunpack.c.h.b16 %v4867
    %v5140 = vunpack.c.l.b16 %v4868
    %v5141 = vunpack.c.h.b16 %v4868
    %v5142 = vunpack.c.l.b16 %v4869
    %v5143 = vunpack.c.h.b16 %v4869
    %v5144 = vunpack.c.l.b16 %v4870
    %v5145 = vunpack.c.h.b16 %v4870
    %v5146 = vunpack.c.l.b16 %v4871
    %v5147 = vunpack.c.h.b16 %v4871
    %v5148 = vunpack.c.l.b16 %v4872
    %v5149 = vunpack.c.h.b16 %v4872
    %v5150 = vunpack.c.l.b16 %v4873
    %v5151 = vunpack.c.h.b16 %v4873
    %v5152 = vunpack.c.l.b16 %v4874
    %v5153 = vunpack.c.h.b16 %v4874
    %v5154 = vunpack.c.l.b16 %v4875
    %v5155 = vunpack.c.h.b16 %v4875
    %v5156 = vunpack.c.l.b16 %v4876
    %v5157 = vunpack.c.h.b16 %v4876
    %v5158 = vunpack.c.l.b16 %v4877
    %v5159 = vunpack.c.h.b16 %v4877
    %v5160 = vunpack.c.l.b16 %v4878
    %v5161 = vunpack.c.h.b16 %v4878
    %v5162 = vunpack.c.l.b16 %v4879
    %v5163 = vunpack.c.h.b16 %v4879
    %v5164 = vunpack.c.l.b16 %v4880
    %v5165 = vunpack.c.h.b16 %v4880
    %v5166 = vunpack.c.l.b16 %v4881
    %v5167 = vunpack.c.h.b16 %v4881
    %v5168 = vunpack.c.l.b16 %v4882
    %v5169 = vunpack.c.h.b16 %v4882
    %v5170 = vunpack.c.l.b16 %v4883
    %v5171 = vunpack.c.h.b16 %v4883
    %v5172 = vunpack.c.l.b16 %v4884
    %v5173 = vunpack.c.h.b16 %v4884
    %v5174 = vunpack.c.l.b16 %v4885
    %v5175 = vunpack.c.h.b16 %v4885
    %v5176 = vunpack.c.l.b16 %v4886
    %v5177 = vunpack.c.h.b16 %v4886
    %v5178 = vunpack.c.l.b16 %v4887
    %v5179 = vunpack.c.h.b16 %v4887
    %v5180 = vunpack.c.l.b16 %v4888
    %v5181 = vunpack.c.h.b16 %v4888
    %v5182 = vunpack.c.l.b16 %v4889
    %v5183 = vunpack.c.h.b16 %v4889
    %v5184 = vunpack.c.l.b16 %v4890
    %v5185 = vunpack.c.h.b16 %v4890
    %v5186 = vunpack.c.l.b16 %v4891
    %v5187 = vunpack.c.h.b16 %v4891
    %v5188 = vunpack.c.l.b16 %v4892
    %v5189 = vunpack.c.h.b16 %v4892
    %v5190 = vunpack.c.l.b16 %v4893
    %v5191 = vunpack.c.h.b16 %v4893
    %v5192 = vunpack.c.l.b16 %v4894
    %v5193 = vunpack.c.h.b16 %v4894
    %v5194 = vunpack.c.l.b16 %v4895
    %v5195 = vunpack.c.h.b16 %v4895
    %v5196 = vunpack.c.l.b16 %v4896
    %v5197 = vunpack.c.h.b16 %v4896
    %v5198 = vunpack.c.l.b16 %v4897
    %v5199 = vunpack.c.h.b16 %v4897
    %v5200 = vunpack.c.l.b16 %v4898
    %v5201 = vunpack.c.h.b16 %v4898
    %v5202 = vunpack.c.l.b16 %v4899
    %v5203 = vunpack.c.h.b16 %v4899
    %v5204 = vunpack.c.l.b16 %v4900
    %v5205 = vunpack.c.h.b16 %v4900
    %v5206 = vunpack.c.l.b16 %v4901
    %v5207 = vunpack.c.h.b16 %v4901
    %v5208 = vunpack.c.l.b16 %v4902
    %v5209 = vunpack.c.h.b16 %v4902
    %v5210 = vunpack.c.l.b16 %v4903
    %v5211 = vunpack.c.h.b16 %v4903
    %v5212 = vunpack.c.l.b16 %v4904
    %v5213 = vunpack.c.h.b16 %v4904
    %v5214 = vunpack.c.l.b16 %v4905
    %v5215 = vunpack.c.h.b16 %v4905
    %v5216 = vunpack.c.l.b16 %v4906
    %v5217 = vunpack.c.h.b16 %v4906
    %v5218 = vunpack.c.l.b16 %v4907
    %v5219 = vunpack.c.h.b16 %v4907
    %v5220 = vunpack.c.l.b16 %v4908
    %v5221 = vunpack.c.h.b16 %v4908
    %v5222 = vunpack.c.l.b16 %v4909
    %v5223 = vunpack.c.h.b16 %v4909
    %v5224 = vunpack.c.l.b16 %v4910
    %v5225 = vunpack.c.h.b16 %v4910
    %v5226 = vunpack.c.l.b16 %v4911
    %v5227 = vunpack.c.h.b16 %v4911
    %v5228 = vunpack.c.l.b16 %v4912
    %v5229 = vunpack.c.h.b16 %v4912
    %v5230 = vunpack.c.l.b16 %v4913
    %v5231 = vunpack.c.h.b16 %v4913
    %v5232 = vunpack.c.l.b16 %v4914
    %v5233 = vunpack.c.h.b16 %v4914
    %v5234 = vunpack.c.l.b16 %v4915
    %v5235 = vunpack.c.h.b16 %v4915
    %v5236 = vunpack.c.l.b16 %v4916
    %v5237 = vunpack.c.h.b16 %v4916
    %v5238 = vunpack.c.l.b16 %v4917
    %v5239 = vunpack.c.h.b16 %v4917
    %v5240 = vunpack.c.l.b16 %v4918
    %v5241 = vunpack.c.h.b16 %v4918
    %v5242 = vunpack.c.l.b16 %v4919
    %v5243 = vunpack.c.h.b16 %v4919
    %v5244 = vunpack.c.l.b16 %v4920
    %v5245 = vunpack.c.h.b16 %v4920
    %v5246 = vunpack.c.l.b16 %v4921
    %v5247 = vunpack.c.h.b16 %v4921
    %v5248 = vunpack.c.l.b16 %v4922
    %v5249 = vunpack.c.h.b16 %v4922
    %v5250 = vunpack.c.l.b16 %v4923
    %v5251 = vunpack.c.h.b16 %v4923
    %v5252 = vunpack.c.l.b16 %v4924
    %v5253 = vunpack.c.h.b16 %v4924
    %v5254 = vunpack.c.l.b16 %v4925
    %v5255 = vunpack.c.h.b16 %v4925
    %v5256 = vunpack.c.l.b16 %v4926
    %v5257 = vunpack.c.h.b16 %v4926
    %v5258 = vunpack.c.l.b16 %v4927
    %v5259 = vunpack.c.h.b16 %v4927
    %v5260 = vunpack.c.l.b16 %v4928
    %v5261 = vunpack.c.h.b16 %v4928
    %v5262 = vunpack.c.l.b16 %v4929
    %v5263 = vunpack.c.h.b16 %v4929
    %v5264 = vunpack.c.l.b16 %v4930
    %v5265 = vunpack.c.h.b16 %v4930
    %v5266 = vunpack.c.l.b16 %v4931
    %v5267 = vunpack.c.h.b16 %v4931
    %v5268 = vunpack.c.l.b16 %v4932
    %v5269 = vunpack.c.h.b16 %v4932
    %v5270 = vunpack.c.l.b16 %v4933
    %v5271 = vunpack.c.h.b16 %v4933
    %v5272 = vunpack.c.l.b16 %v4934
    %v5273 = vunpack.c.h.b16 %v4934
    %v5274 = vunpack.c.l.b16 %v4935
    %v5275 = vunpack.c.h.b16 %v4935
    %v5276 = vunpack.c.l.b16 %v4936
    %v5277 = vunpack.c.h.b16 %v4936
    %v5278 = vunpack.c.l.b16 %v4937
    %v5279 = vunpack.c.h.b16 %v4937
    %v5280 = vunpack.c.l.b16 %v4938
    %v5281 = vunpack.c.h.b16 %v4938
    %v5282 = vunpack.c.l.b16 %v4939
    %v5283 = vunpack.c.h.b16 %v4939
    %v5284 = vunpack.c.l.b16 %v4940
    %v5285 = vunpack.c.h.b16 %v4940
    %v5286 = vunpack.c.l.b16 %v4941
    %v5287 = vunpack.c.h.b16 %v4941
    %v5288 = vunpack.c.l.b16 %v4942
    %v5289 = vunpack.c.h.b16 %v4942
    %v5290 = vunpack.c.l.b16 %v4943
    %v5291 = vunpack.c.h.b16 %v4943
    %v5292 = vunpack.c.l.b16 %v4944
    %v5293 = vunpack.c.h.b16 %v4944
    %v5294 = vunpack.c.l.b16 %v4945
    %v5295 = vunpack.c.h.b16 %v4945
    %v5296 = vunpack.c.l.b16 %v4946
    %v5297 = vunpack.c.h.b16 %v4946
    %v5298 = vunpack.c.l.b16 %v4947
    %v5299 = vunpack.c.h.b16 %v4947
    %v5300 = vunpack.c.l.b16 %v4948
    %v5301 = vunpack.c.h.b16 %v4948
    %v5302 = vunpack.c.l.b16 %v4949
    %v5303 = vunpack.c.h.b16 %v4949
    %v5304 = vunpack.c.l.b16 %v4950
    %v5305 = vunpack.c.h.b16 %v4950
    %v5306 = vunpack.c.l.b16 %v4951
    %v5307 = vunpack.c.h.b16 %v4951
    %v5308 = vunpack.c.l.b16 %v4952
    %v5309 = vunpack.c.h.b16 %v4952
    %v5310 = vunpack.c.l.b16 %v4953
    %v5311 = vunpack.c.h.b16 %v4953
    %v5312 = vunpack.c.l.b16 %v4954
    %v5313 = vunpack.c.h.b16 %v4954
    %v5314 = vunpack.c.l.b16 %v4955
    %v5315 = vunpack.c.h.b16 %v4955
    %v5316 = vunpack.c.l.b16 %v4956
    %v5317 = vunpack.c.h.b16 %v4956
    %v5318 = vunpack.c.l.b16 %v4957
    %v5319 = vunpack.c.h.b16 %v4957
    %v5320 = vunpack.c.l.b16 %v4958
    %v5321 = vunpack.c.h.b16 %v4958
    %v5322 = vunpack.c.l.b16 %v4959
    %v5323 = vunpack.c.h.b16 %v4959
    %v5324 = vunpack.c.l.b16 %v4960
    %v5325 = vunpack.c.h.b16 %v4960
    %v5326 = vunpack.c.l.b16 %v4961
    %v5327 = vunpack.c.h.b16 %v4961
    %v5328 = vunpack.c.l.b16 %v4962
    %v5329 = vunpack.c.h.b16 %v4962
    %v5330 = vunpack.c.l.b16 %v4963
    %v5331 = vunpack.c.h.b16 %v4963
    %v5332 = vunpack.c.l.b16 %v4964
    %v5333 = vunpack.c.h.b16 %v4964
    %v5334 = vunpack.c.l.b16 %v4965
    %v5335 = vunpack.c.h.b16 %v4965
    %v5336 = vunpack.c.l.b16 %v4966
    %v5337 = vunpack.c.h.b16 %v4966
    %v5338 = vunpack.c.l.b16 %v4967
    %v5339 = vunpack.c.h.b16 %v4967
    %v5340 = vunpack.c.l.b16 %v4968
    %v5341 = vunpack.c.h.b16 %v4968
    %v5342 = vunpack.c.l.b16 %v4969
    %v5343 = vunpack.c.h.b16 %v4969
    %v5344 = vunpack.c.l.b16 %v4970
    %v5345 = vunpack.c.h.b16 %v4970
    %v5346 = vunpack.c.l.b16 %v4971
    %v5347 = vunpack.c.h.b16 %v4971
    %v5348 = vunpack.c.l.b16 %v4972
    %v5349 = vunpack.c.h.b16 %v4972
    %v5350 = vunpack.c.l.b16 %v4973
    %v5351 = vunpack.c.h.b16 %v4973
    %v5352 = vunpack.c.l.b16 %v4974
    %v5353 = vunpack.c.h.b16 %v4974
    %v5354 = vunpack.c.l.b16 %v4975
    %v5355 = vunpack.c.h.b16 %v4975
    %v5356 = vunpack.c.l.b16 %v4976
    %v5357 = vunpack.c.h.b16 %v4976
    %v5358 = vunpack.c.l.b16 %v4977
    %v5359 = vunpack.c.h.b16 %v4977
    %v5360 = vunpack.c.l.b16 %v4978
    %v5361 = vunpack.c.h.b16 %v4978
    %v5362 = vunpack.c.l.b16 %v4979
    %v5363 = vunpack.c.h.b16 %v4979
    %v5364 = vunpack.c.l.b16 %v4980
    %v5365 = vunpack.c.h.b16 %v4980
    %v5366 = vunpack.c.l.b16 %v4981
    %v5367 = vunpack.c.h.b16 %v4981
    %v5368 = vunpack.c.l.b16 %v4982
    %v5369 = vunpack.c.h.b16 %v4982
    %v5370 = vunpack.c.l.b16 %v4983
    %v5371 = vunpack.c.h.b16 %v4983
    %v5372 = vunpack.c.l.b16 %v4984
    %v5373 = vunpack.c.h.b16 %v4984
    %v5374 = vunpack.c.l.b16 %v4985
    %v5375 = vunpack.c.h.b16 %v4985
    %v5376 = vunpack.c.l.b16 %v4986
    %v5377 = vunpack.c.h.b16 %v4986
    %v5378 = vunpack.c.l.b16 %v4987
    %v5379 = vunpack.c.h.b16 %v4987
    %v5380 = vunpack.c.l.b16 %v4988
    %v5381 = vunpack.c.h.b16 %v4988
    %v5382 = vunpack.c.l.b16 %v4989
    %v5383 = vunpack.c.h.b16 %v4989
    %v5384 = vpack.c.b16 %v5132, %v5128
    %v5385 = vpack.c.b16 %v5133, %v5129
    %v5386 = vpack.c.b16 %v5134, %v5130
    %v5387 = vpack.c.b16 %v5135, %v5131
    %v5388 = vpack.c.b16 %v5140, %v5136
    %v5389 = vpack.c.b16 %v5141, %v5137
    %v5390 = vpack.c.b16 %v5142, %v5138
    %v5391 = vpack.c.b16 %v5143, %v5139
    %v5392 = vpack.c.b16 %v5148, %v5144
    %v5393 = vpack.c.b16 %v5149, %v5145
    %v5394 = vpack.c.b16 %v5150, %v5146
    %v5395 = vpack.c.b16 %v5151, %v5147
    %v5396 = vpack.c.b16 %v5156, %v5152
    %v5397 = vpack.c.b16 %v5157, %v5153
    %v5398 = vpack.c.b16 %v5158, %v5154
    %v5399 = vpack.c.b16 %v5159, %v5155
    %v5400 = vpack.c.b16 %v5164, %v5160
    %v5401 = vpack.c.b16 %v5165, %v5161
    %v5402 = vpack.c.b16 %v5166, %v5162
    %v5403 = vpack.c.b16 %v5167, %v5163
    %v5404 = vpack.c.b16 %v5172, %v5168
    %v5405 = vpack.c.b16 %v5173, %v5169
    %v5406 = vpack.c.b16 %v5174, %v5170
    %v5407 = vpack.c.b16 %v5175, %v5171
    %v5408 = vpack.c.b16 %v5180, %v5176
    %v5409 = vpack.c.b16 %v5181, %v5177
    %v5410 = vpack.c.b16 %v5182, %v5178
    %v5411 = vpack.c.b16 %v5183, %v5179
    %v5412 = vpack.c.b16 %v5188, %v5184
    %v5413 = vpack.c.b16 %v5189, %v5185
    %v5414 = vpack.c.b16 %v5190, %v5186
    %v5415 = vpack.c.b16 %v5191, %v5187
    %v5416 = vpack.c.b16 %v5196, %v5192
    %v5417 = vpack.c.b16 %v5197, %v5193
    %v5418 = vpack.c.b16 %v5198, %v5194
    %v5419 = vpack.c.b16 %v5199, %v5195
    %v5420 = vpack.c.b16 %v5204, %v5200
    %v5421 = vpack.c.b16 %v5205, %v5201
    %v5422 = vpack.c.b16 %v5206, %v5202
    %v5423 = vpack.c.b16 %v5207, %v5203
    %v5424 = vpack.c.b16 %v5212, %v5208
    %v5425 = vpack.c.b16 %v5213, %v5209
    %v5426 = vpack.c.b16 %v5214, %v5210
    %v5427 = vpack.c.b16 %v5215, %v5211
    %v5428 = vpack.c.b16 %v5220, %v5216
    %v5429 = vpack.c.b16 %v5221, %v5217
    %v5430 = vpack.c.b16 %v5222, %v5218
    %v5431 = vpack.c.b16 %v5223, %v5219
    %v5432 = vpack.c.b16 %v5228, %v5224
    %v5433 = vpack.c.b16 %v5229, %v5225
    %v5434 = vpack.c.b16 %v5230, %v5226
    %v5435 = vpack.c.b16 %v5231, %v5227
    %v5436 = vpack.c.b16 %v5236, %v5232
    %v5437 = vpack.c.b16 %v5237, %v5233
    %v5438 = vpack.c.b16 %v5238, %v5234
    %v5439 = vpack.c.b16 %v5239, %v5235
    %v5440 = vpack.c.b16 %v5244, %v5240
    %v5441 = vpack.c.b16 %v5245, %v5241
    %v5442 = vpack.c.b16 %v5246, %v5242
    %v5443 = vpack.c.b16 %v5247, %v5243
    %v5444 = vpack.c.b16 %v5252, %v5248
    %v5445 = vpack.c.b16 %v5253, %v5249
    %v5446 = vpack.c.b16 %v5254, %v5250
    %v5447 = vpack.c.b16 %v5255, %v5251
    %v5448 = vpack.c.b16 %v5260, %v5256
    %v5449 = vpack.c.b16 %v5261, %v5257
    %v5450 = vpack.c.b16 %v5262, %v5258
    %v5451 = vpack.c.b16 %v5263, %v5259
    %v5452 = vpack.c.b16 %v5268, %v5264
    %v5453 = vpack.c.b16 %v5269, %v5265
    %v5454 = vpack.c.b16 %v5270, %v5266
    %v5455 = vpack.c.b16 %v5271, %v5267
    %v5456 = vpack.c.b16 %v5276, %v5272
    %v5457 = vpack.c.b16 %v5277, %v5273
    %v5458 = vpack.c.b16 %v5278, %v5274
    %v5459 = vpack.c.b16 %v5279, %v5275
    %v5460 = vpack.c.b16 %v5284, %v5280
    %v5461 = vpack.c.b16 %v5285, %v5281
    %v5462 = vpack.c.b16 %v5286, %v5282
    %v5463 = vpack.c.b16 %v5287, %v5283
    %v5464 = vpack.c.b16 %v5292, %v5288
    %v5465 = vpack.c.b16 %v5293, %v5289
    %v5466 = vpack.c.b16 %v5294, %v5290
    %v5467 = vpack.c.b16 %v5295, %v5291
    %v5468 = vpack.c.b16 %v5300, %v5296
    %v5469 = vpack.c.b16 %v5301, %v5297
    %v5470 = vpack.c.b16 %v5302, %v5298
    %v5471 = vpack.c.b16 %v5303, %v5299
    %v5472 = vpack.c.b16 %v5308, %v5304
    %v5473 = vpack.c.b16 %v5309, %v5305
    %v5474 = vpack.c.b16 %v5310, %v5306
    %v5475 = vpack.c.b16 %v5311, %v5307
    %v5476 = vpack.c.b16 %v5316, %v5312
    %v5477 = vpack.c.b16 %v5317, %v5313
    %v5478 = vpack.c.b16 %v5318, %v5314
    %v5479 = vpack.c.b16 %v5319, %v5315
    %v5480 = vpack.c.b16 %v5324, %v5320
    %v5481 = vpack.c.b16 %v5325, %v5321
    %v5482 = vpack.c.b16 %v5326, %v5322
    %v5483 = vpack.c.b16 %v5327, %v5323
    %v5484 = vpack.c.b16 %v5332, %v5328
    %v5485 = vpack.c.b16 %v5333, %v5329
    %v5486 = vpack.c.b16 %v5334, %v5330
    %v5487 = vpack.c.b16 %v5335, %v5331
    %v5488 = vpack.c.b16 %v5340, %v5336
    %v5489 = vpack.c.b16 %v5341, %v5337
    %v5490 = vpack.c.b16 %v5342, %v5338
    %v5491 = vpack.c.b16 %v5343, %v5339
    %v5492 = vpack.c.b16 %v5348, %v5344
    %v5493 = vpack.c.b16 %v5349, %v5345
    %v5494 = vpack.c.b16 %v5350, %v5346
    %v5495 = vpack.c.b16 %v5351, %v5347
    %v5496 = vpack.c.b16 %v5356, %v5352
    %v5497 = vpack.c.b16 %v5357, %v5353
    %v5498 = vpack.c.b16 %v5358, %v5354
    %v5499 = vpack.c.b16 %v5359, %v5355
    %v5500 = vpack.c.b16 %v5364, %v5360
    %v5501 = vpack.c.b16 %v5365, %v5361
    %v5502 = vpack.c.b16 %v5366, %v5362
    %v5503 = vpack.c.b16 %v5367, %v5363
    %v5504 = vpack.c.b16 %v5372, %v5368
    %v5505 = vpack.c.b16 %v5373, %v5369
    %v5506 = vpack.c.b16 %v5374, %v5370
    %v5507 = vpack.c.b16 %v5375, %v5371
    %v5508 = vpack.c.b16 %v5380, %v5376
    %v5509 = vpack.c.b16 %v5381, %v5377
    %v5510 = vpack.c.b16 %v5382, %v5378
    %v5511 = vpack.c.b16 %v5383, %v5379
    %5640 = vmatpush.bf16.msra.mxu0 %v5412
    %5641 = vmatpush.bf16.msra.mxu0 %v5408
    %5642 = vmatpush.bf16.msra.mxu0 %v5404
    %5643 = vmatpush.bf16.msra.mxu0 %v5400
    %5644 = vmatpush.bf16.msra.mxu0 %v5396
    %5645 = vmatpush.bf16.msra.mxu0 %v5392
    %5646 = vmatpush.bf16.msra.mxu0 %v5388
    %5647 = vmatpush.bf16.msra.mxu0 %v5384
    %5648 = vmatmul.bf16.gmra.mxu0 %v4858
    %v5649 = vpop.f32.mrf.mxu0
    %v5650 = vadd.f32 %v4992, %v5649
    %v5651 = vpop.f32.mrf.mxu0
    %5652 = vdwg.mxu0
    %5653 = vmatpush.bf16.msra.mxu0 %v5444
    %5654 = vmatpush.bf16.msra.mxu0 %v5440
    %5655 = vmatpush.bf16.msra.mxu0 %v5436
    %5656 = vmatpush.bf16.msra.mxu0 %v5432
    %5657 = vmatpush.bf16.msra.mxu0 %v5428
    %5658 = vmatpush.bf16.msra.mxu0 %v5424
    %5659 = vmatpush.bf16.msra.mxu0 %v5420
    %5660 = vmatpush.bf16.msra.mxu0 %v5416
    %5661 = vmatmul.bf16.gmra.mxu0 %v4859
    %v5662 = vpop.f32.mrf.mxu0
    %v5663 = vadd.f32 %v5650, %v5662
    %v5664 = vpop.f32.mrf.mxu0
    %5665 = vdwg.mxu0
    %5666 = vmatpush.bf16.msra.mxu0 %v5476
    %5667 = vmatpush.bf16.msra.mxu0 %v5472
    %5668 = vmatpush.bf16.msra.mxu0 %v5468
    %5669 = vmatpush.bf16.msra.mxu0 %v5464
    %5670 = vmatpush.bf16.msra.mxu0 %v5460
    %5671 = vmatpush.bf16.msra.mxu0 %v5456
    %5672 = vmatpush.bf16.msra.mxu0 %v5452
    %5673 = vmatpush.bf16.msra.mxu0 %v5448
    %5674 = vmatmul.bf16.gmra.mxu0 %v4860
    %v5675 = vpop.f32.mrf.mxu0
    %v5676 = vadd.f32 %v5663, %v5675
    %v5677 = vpop.f32.mrf.mxu0
    %5678 = vdwg.mxu0
    %5679 = vmatpush.bf16.msra.mxu0 %v5508
    %5680 = vmatpush.bf16.msra.mxu0 %v5504
    %5681 = vmatpush.bf16.msra.mxu0 %v5500
    %5682 = vmatpush.bf16.msra.mxu0 %v5496
    %5683 = vmatpush.bf16.msra.mxu0 %v5492
    %5684 = vmatpush.bf16.msra.mxu0 %v5488
    %5685 = vmatpush.bf16.msra.mxu0 %v5484
    %5686 = vmatpush.bf16.msra.mxu0 %v5480
    %5687 = vmatmul.bf16.gmra.mxu0 %v4861
    %v5688 = vpop.f32.mrf.mxu0
    %v5689 = vadd.f32 %v5676, %v5688
    %v5690 = vpop.f32.mrf.mxu0
    %5691 = vdwg.mxu0
    %5692 = vmatpush.bf16.msra.mxu0 %v5413
    %5693 = vmatpush.bf16.msra.mxu0 %v5409
    %5694 = vmatpush.bf16.msra.mxu0 %v5405
    %5695 = vmatpush.bf16.msra.mxu0 %v5401
    %5696 = vmatpush.bf16.msra.mxu0 %v5397
    %5697 = vmatpush.bf16.msra.mxu0 %v5393
    %5698 = vmatpush.bf16.msra.mxu0 %v5389
    %5699 = vmatpush.bf16.msra.mxu0 %v5385
    %5700 = vmatmul.bf16.gmra.mxu0 %v4858
    %v5701 = vpop.f32.mrf.mxu0
    %v5702 = vadd.f32 %v4993, %v5701
    %v5703 = vpop.f32.mrf.mxu0
    %5704 = vdwg.mxu0
    %5705 = vmatpush.bf16.msra.mxu0 %v5445
    %5706 = vmatpush.bf16.msra.mxu0 %v5441
    %5707 = vmatpush.bf16.msra.mxu0 %v5437
    %5708 = vmatpush.bf16.msra.mxu0 %v5433
    %5709 = vmatpush.bf16.msra.mxu0 %v5429
    %5710 = vmatpush.bf16.msra.mxu0 %v5425
    %5711 = vmatpush.bf16.msra.mxu0 %v5421
    %5712 = vmatpush.bf16.msra.mxu0 %v5417
    %5713 = vmatmul.bf16.gmra.mxu0 %v4859
    %v5714 = vpop.f32.mrf.mxu0
    %v5715 = vadd.f32 %v5702, %v5714
    %v5716 = vpop.f32.mrf.mxu0
    %5717 = vdwg.mxu0
    %5718 = vmatpush.bf16.msra.mxu0 %v5477
    %5719 = vmatpush.bf16.msra.mxu0 %v5473
    %5720 = vmatpush.bf16.msra.mxu0 %v5469
    %5721 = vmatpush.bf16.msra.mxu0 %v5465
    %5722 = vmatpush.bf16.msra.mxu0 %v5461
    %5723 = vmatpush.bf16.msra.mxu0 %v5457
    %5724 = vmatpush.bf16.msra.mxu0 %v5453
    %5725 = vmatpush.bf16.msra.mxu0 %v5449
    %5726 = vmatmul.bf16.gmra.mxu0 %v4860
    %v5727 = vpop.f32.mrf.mxu0
    %v5728 = vadd.f32 %v5715, %v5727
    %v5729 = vpop.f32.mrf.mxu0
    %5730 = vdwg.mxu0
    %5731 = vmatpush.bf16.msra.mxu0 %v5509
    %5732 = vmatpush.bf16.msra.mxu0 %v5505
    %5733 = vmatpush.bf16.msra.mxu0 %v5501
    %5734 = vmatpush.bf16.msra.mxu0 %v5497
    %5735 = vmatpush.bf16.msra.mxu0 %v5493
    %5736 = vmatpush.bf16.msra.mxu0 %v5489
    %5737 = vmatpush.bf16.msra.mxu0 %v5485
    %5738 = vmatpush.bf16.msra.mxu0 %v5481
    %5739 = vmatmul.bf16.gmra.mxu0 %v4861
    %v5740 = vpop.f32.mrf.mxu0
    %v5741 = vadd.f32 %v5728, %v5740
    %v5742 = vpop.f32.mrf.mxu0
    %5743 = vdwg.mxu0
    %5744 = vmatpush.bf16.msra.mxu0 %v5414
    %5745 = vmatpush.bf16.msra.mxu0 %v5410
    %5746 = vmatpush.bf16.msra.mxu0 %v5406
    %5747 = vmatpush.bf16.msra.mxu0 %v5402
    %5748 = vmatpush.bf16.msra.mxu0 %v5398
    %5749 = vmatpush.bf16.msra.mxu0 %v5394
    %5750 = vmatpush.bf16.msra.mxu0 %v5390
    %5751 = vmatpush.bf16.msra.mxu0 %v5386
    %5752 = vmatmul.bf16.gmra.mxu0 %v4858
    %v5753 = vpop.f32.mrf.mxu0
    %v5754 = vadd.f32 %v4994, %v5753
    %v5755 = vpop.f32.mrf.mxu0
    %5756 = vdwg.mxu0
    %5757 = vmatpush.bf16.msra.mxu0 %v5446
    %5758 = vmatpush.bf16.msra.mxu0 %v5442
    %5759 = vmatpush.bf16.msra.mxu0 %v5438
    %5760 = vmatpush.bf16.msra.mxu0 %v5434
    %5761 = vmatpush.bf16.msra.mxu0 %v5430
    %5762 = vmatpush.bf16.msra.mxu0 %v5426
    %5763 = vmatpush.bf16.msra.mxu0 %v5422
    %5764 = vmatpush.bf16.msra.mxu0 %v5418
    %5765 = vmatmul.bf16.gmra.mxu0 %v4859
    %v5766 = vpop.f32.mrf.mxu0
    %v5767 = vadd.f32 %v5754, %v5766
    %v5768 = vpop.f32.mrf.mxu0
    %5769 = vdwg.mxu0
    %5770 = vmatpush.bf16.msra.mxu0 %v5478
    %5771 = vmatpush.bf16.msra.mxu0 %v5474
    %5772 = vmatpush.bf16.msra.mxu0 %v5470
    %5773 = vmatpush.bf16.msra.mxu0 %v5466
    %5774 = vmatpush.bf16.msra.mxu0 %v5462
    %5775 = vmatpush.bf16.msra.mxu0 %v5458
    %5776 = vmatpush.bf16.msra.mxu0 %v5454
    %5777 = vmatpush.bf16.msra.mxu0 %v5450
    %5778 = vmatmul.bf16.gmra.mxu0 %v4860
    %v5779 = vpop.f32.mrf.mxu0
    %v5780 = vadd.f32 %v5767, %v5779
    %v5781 = vpop.f32.mrf.mxu0
    %5782 = vdwg.mxu0
    %5783 = vmatpush.bf16.msra.mxu0 %v5510
    %5784 = vmatpush.bf16.msra.mxu0 %v5506
    %5785 = vmatpush.bf16.msra.mxu0 %v5502
    %5786 = vmatpush.bf16.msra.mxu0 %v5498
    %5787 = vmatpush.bf16.msra.mxu0 %v5494
    %5788 = vmatpush.bf16.msra.mxu0 %v5490
    %5789 = vmatpush.bf16.msra.mxu0 %v5486
    %5790 = vmatpush.bf16.msra.mxu0 %v5482
    %5791 = vmatmul.bf16.gmra.mxu0 %v4861
    %v5792 = vpop.f32.mrf.mxu0
    %v5793 = vadd.f32 %v5780, %v5792
    %v5794 = vpop.f32.mrf.mxu0
    %5795 = vdwg.mxu0
    %5796 = vmatpush.bf16.msra.mxu0 %v5415
    %5797 = vmatpush.bf16.msra.mxu0 %v5411
    %5798 = vmatpush.bf16.msra.mxu0 %v5407
    %5799 = vmatpush.bf16.msra.mxu0 %v5403
    %5800 = vmatpush.bf16.msra.mxu0 %v5399
    %5801 = vmatpush.bf16.msra.mxu0 %v5395
    %5802 = vmatpush.bf16.msra.mxu0 %v5391
    %5803 = vmatpush.bf16.msra.mxu0 %v5387
    %5804 = vmatmul.bf16.gmra.mxu0 %v4858
    %v5805 = vpop.f32.mrf.mxu0
    %v5806 = vadd.f32 %v4995, %v5805
    %v5807 = vpop.f32.mrf.mxu0
    %5808 = vdwg.mxu0
    %5809 = vmatpush.bf16.msra.mxu0 %v5447
    %5810 = vmatpush.bf16.msra.mxu0 %v5443
    %5811 = vmatpush.bf16.msra.mxu0 %v5439
    %5812 = vmatpush.bf16.msra.mxu0 %v5435
    %5813 = vmatpush.bf16.msra.mxu0 %v5431
    %5814 = vmatpush.bf16.msra.mxu0 %v5427
    %5815 = vmatpush.bf16.msra.mxu0 %v5423
    %5816 = vmatpush.bf16.msra.mxu0 %v5419
    %5817 = vmatmul.bf16.gmra.mxu0 %v4859
    %v5818 = vpop.f32.mrf.mxu0
    %v5819 = vadd.f32 %v5806, %v5818
    %v5820 = vpop.f32.mrf.mxu0
    %5821 = vdwg.mxu0
    %5822 = vmatpush.bf16.msra.mxu0 %v5479
    %5823 = vmatpush.bf16.msra.mxu0 %v5475
    %5824 = vmatpush.bf16.msra.mxu0 %v5471
    %5825 = vmatpush.bf16.msra.mxu0 %v5467
    %5826 = vmatpush.bf16.msra.mxu0 %v5463
    %5827 = vmatpush.bf16.msra.mxu0 %v5459
    %5828 = vmatpush.bf16.msra.mxu0 %v5455
    %5829 = vmatpush.bf16.msra.mxu0 %v5451
    %5830 = vmatmul.bf16.gmra.mxu0 %v4860
    %v5831 = vpop.f32.mrf.mxu0
    %v5832 = vadd.f32 %v5819, %v5831
    %v5833 = vpop.f32.mrf.mxu0
    %5834 = vdwg.mxu0
    %5835 = vmatpush.bf16.msra.mxu0 %v5511
    %5836 = vmatpush.bf16.msra.mxu0 %v5507
    %5837 = vmatpush.bf16.msra.mxu0 %v5503
    %5838 = vmatpush.bf16.msra.mxu0 %v5499
    %5839 = vmatpush.bf16.msra.mxu0 %v5495
    %5840 = vmatpush.bf16.msra.mxu0 %v5491
    %5841 = vmatpush.bf16.msra.mxu0 %v5487
    %5842 = vmatpush.bf16.msra.mxu0 %v5483
    %5843 = vmatmul.bf16.gmra.mxu0 %v4861
    %v5844 = vpop.f32.mrf.mxu0
    %v5845 = vadd.f32 %v5832, %v5844
    %v5846 = vpop.f32.mrf.mxu0
    %5847 = vdwg.mxu0
    %v5848 = vmax.f32 %v5689, 0.0
    %v5849 = vmax.f32 %v5741, 0.0
    %v5850 = vmax.f32 %v5793, 0.0
    %v5851 = vmax.f32 %v5845, 0.0
    %v5852 = vld [vmem:[#allocation11] sm:$0xff]
    %v5853 = vld [vmem:[#allocation11 + $0x8] sm:$0xff]
    %v5854 = vld [vmem:[#allocation11 + $0x10] sm:$0xff]
    %v5855 = vld [vmem:[#allocation11 + $0x18] sm:$0xff]
    %v5856 = vld [vmem:[#allocation11 + $0x20] sm:$0xff]
    %v5857 = vld [vmem:[#allocation11 + $0x28] sm:$0xff]
    %v5858 = vld [vmem:[#allocation11 + $0x30] sm:$0xff]
    %v5859 = vld [vmem:[#allocation11 + $0x38] sm:$0xff]
    %v5860 = vld [vmem:[#allocation11 + $0x40] sm:$0xff]
    %v5861 = vld [vmem:[#allocation11 + $0x48] sm:$0xff]
    %v5862 = vld [vmem:[#allocation11 + $0x50] sm:$0xff]
    %v5863 = vld [vmem:[#allocation11 + $0x58] sm:$0xff]
    %v5864 = vld [vmem:[#allocation11 + $0x60] sm:$0xff]
    %v5865 = vld [vmem:[#allocation11 + $0x68] sm:$0xff]
    %v5866 = vld [vmem:[#allocation11 + $0x70] sm:$0xff]
    %v5867 = vld [vmem:[#allocation11 + $0x78] sm:$0xff]
    %v5868 = vld [vmem:[#allocation11 + $0x80] sm:$0xff]
    %v5869 = vld [vmem:[#allocation11 + $0x88] sm:$0xff]
    %v5870 = vld [vmem:[#allocation11 + $0x90] sm:$0xff]
    %v5871 = vld [vmem:[#allocation11 + $0x98] sm:$0xff]
    %v5872 = vld [vmem:[#allocation11 + $0xa0] sm:$0xff]
    %v5873 = vld [vmem:[#allocation11 + $0xa8] sm:$0xff]
    %v5874 = vld [vmem:[#allocation11 + $0xb0] sm:$0xff]
    %v5875 = vld [vmem:[#allocation11 + $0xb8] sm:$0xff]
    %v5876 = vld [vmem:[#allocation11 + $0xc0] sm:$0xff]
    %v5877 = vld [vmem:[#allocation11 + $0xc8] sm:$0xff]
    %v5878 = vld [vmem:[#allocation11 + $0xd0] sm:$0xff]
    %v5879 = vld [vmem:[#allocation11 + $0xd8] sm:$0xff]
    %v5880 = vld [vmem:[#allocation11 + $0xe0] sm:$0xff]
    %v5881 = vld [vmem:[#allocation11 + $0xe8] sm:$0xff]
    %v5882 = vld [vmem:[#allocation11 + $0xf0] sm:$0xff]
    %v5883 = vld [vmem:[#allocation11 + $0xf8] sm:$0xff]
    %v5884 = vld [vmem:[#allocation11 + $0x100] sm:$0xff]
    %v5885 = vld [vmem:[#allocation11 + $0x108] sm:$0xff]
    %v5886 = vld [vmem:[#allocation11 + $0x110] sm:$0xff]
    %v5887 = vld [vmem:[#allocation11 + $0x118] sm:$0xff]
    %v5888 = vld [vmem:[#allocation11 + $0x120] sm:$0xff]
    %v5889 = vld [vmem:[#allocation11 + $0x128] sm:$0xff]
    %v5890 = vld [vmem:[#allocation11 + $0x130] sm:$0xff]
    %v5891 = vld [vmem:[#allocation11 + $0x138] sm:$0xff]
    %v5892 = vld [vmem:[#allocation11 + $0x140] sm:$0xff]
    %v5893 = vld [vmem:[#allocation11 + $0x148] sm:$0xff]
    %v5894 = vld [vmem:[#allocation11 + $0x150] sm:$0xff]
    %v5895 = vld [vmem:[#allocation11 + $0x158] sm:$0xff]
    %v5896 = vld [vmem:[#allocation11 + $0x160] sm:$0xff]
    %v5897 = vld [vmem:[#allocation11 + $0x168] sm:$0xff]
    %v5898 = vld [vmem:[#allocation11 + $0x170] sm:$0xff]
    %v5899 = vld [vmem:[#allocation11 + $0x178] sm:$0xff]
    %v5900 = vld [vmem:[#allocation11 + $0x180] sm:$0xff]
    %v5901 = vld [vmem:[#allocation11 + $0x188] sm:$0xff]
    %v5902 = vld [vmem:[#allocation11 + $0x190] sm:$0xff]
    %v5903 = vld [vmem:[#allocation11 + $0x198] sm:$0xff]
    %v5904 = vld [vmem:[#allocation11 + $0x1a0] sm:$0xff]
    %v5905 = vld [vmem:[#allocation11 + $0x1a8] sm:$0xff]
    %v5906 = vld [vmem:[#allocation11 + $0x1b0] sm:$0xff]
    %v5907 = vld [vmem:[#allocation11 + $0x1b8] sm:$0xff]
    %v5908 = vld [vmem:[#allocation11 + $0x1c0] sm:$0xff]
    %v5909 = vld [vmem:[#allocation11 + $0x1c8] sm:$0xff]
    %v5910 = vld [vmem:[#allocation11 + $0x1d0] sm:$0xff]
    %v5911 = vld [vmem:[#allocation11 + $0x1d8] sm:$0xff]
    %v5912 = vld [vmem:[#allocation11 + $0x1e0] sm:$0xff]
    %v5913 = vld [vmem:[#allocation11 + $0x1e8] sm:$0xff]
    %v5914 = vld [vmem:[#allocation11 + $0x1f0] sm:$0xff]
    %v5915 = vld [vmem:[#allocation11 + $0x1f8] sm:$0xff]
    %v5916 = vld [vmem:[#allocation11 + $0x200] sm:$0xff]
    %v5917 = vld [vmem:[#allocation11 + $0x208] sm:$0xff]
    %v5918 = vld [vmem:[#allocation11 + $0x210] sm:$0xff]
    %v5919 = vld [vmem:[#allocation11 + $0x218] sm:$0xff]
    %v5920 = vld [vmem:[#allocation11 + $0x220] sm:$0xff]
    %v5921 = vld [vmem:[#allocation11 + $0x228] sm:$0xff]
    %v5922 = vld [vmem:[#allocation11 + $0x230] sm:$0xff]
    %v5923 = vld [vmem:[#allocation11 + $0x238] sm:$0xff]
    %v5924 = vld [vmem:[#allocation11 + $0x240] sm:$0xff]
    %v5925 = vld [vmem:[#allocation11 + $0x248] sm:$0xff]
    %v5926 = vld [vmem:[#allocation11 + $0x250] sm:$0xff]
    %v5927 = vld [vmem:[#allocation11 + $0x258] sm:$0xff]
    %v5928 = vld [vmem:[#allocation11 + $0x260] sm:$0xff]
    %v5929 = vld [vmem:[#allocation11 + $0x268] sm:$0xff]
    %v5930 = vld [vmem:[#allocation11 + $0x270] sm:$0xff]
    %v5931 = vld [vmem:[#allocation11 + $0x278] sm:$0xff]
    %v5932 = vld [vmem:[#allocation11 + $0x280] sm:$0xff]
    %v5933 = vld [vmem:[#allocation11 + $0x288] sm:$0xff]
    %v5934 = vld [vmem:[#allocation11 + $0x290] sm:$0xff]
    %v5935 = vld [vmem:[#allocation11 + $0x298] sm:$0xff]
    %v5936 = vld [vmem:[#allocation11 + $0x2a0] sm:$0xff]
    %v5937 = vld [vmem:[#allocation11 + $0x2a8] sm:$0xff]
    %v5938 = vld [vmem:[#allocation11 + $0x2b0] sm:$0xff]
    %v5939 = vld [vmem:[#allocation11 + $0x2b8] sm:$0xff]
    %v5940 = vld [vmem:[#allocation11 + $0x2c0] sm:$0xff]
    %v5941 = vld [vmem:[#allocation11 + $0x2c8] sm:$0xff]
    %v5942 = vld [vmem:[#allocation11 + $0x2d0] sm:$0xff]
    %v5943 = vld [vmem:[#allocation11 + $0x2d8] sm:$0xff]
    %v5944 = vld [vmem:[#allocation11 + $0x2e0] sm:$0xff]
    %v5945 = vld [vmem:[#allocation11 + $0x2e8] sm:$0xff]
    %v5946 = vld [vmem:[#allocation11 + $0x2f0] sm:$0xff]
    %v5947 = vld [vmem:[#allocation11 + $0x2f8] sm:$0xff]
    %v5948 = vld [vmem:[#allocation11 + $0x300] sm:$0xff]
    %v5949 = vld [vmem:[#allocation11 + $0x308] sm:$0xff]
    %v5950 = vld [vmem:[#allocation11 + $0x310] sm:$0xff]
    %v5951 = vld [vmem:[#allocation11 + $0x318] sm:$0xff]
    %v5952 = vld [vmem:[#allocation11 + $0x320] sm:$0xff]
    %v5953 = vld [vmem:[#allocation11 + $0x328] sm:$0xff]
    %v5954 = vld [vmem:[#allocation11 + $0x330] sm:$0xff]
    %v5955 = vld [vmem:[#allocation11 + $0x338] sm:$0xff]
    %v5956 = vld [vmem:[#allocation11 + $0x340] sm:$0xff]
    %v5957 = vld [vmem:[#allocation11 + $0x348] sm:$0xff]
    %v5958 = vld [vmem:[#allocation11 + $0x350] sm:$0xff]
    %v5959 = vld [vmem:[#allocation11 + $0x358] sm:$0xff]
    %v5960 = vld [vmem:[#allocation11 + $0x360] sm:$0xff]
    %v5961 = vld [vmem:[#allocation11 + $0x368] sm:$0xff]
    %v5962 = vld [vmem:[#allocation11 + $0x370] sm:$0xff]
    %v5963 = vld [vmem:[#allocation11 + $0x378] sm:$0xff]
    %v5964 = vld [vmem:[#allocation11 + $0x380] sm:$0xff]
    %v5965 = vld [vmem:[#allocation11 + $0x388] sm:$0xff]
    %v5966 = vld [vmem:[#allocation11 + $0x390] sm:$0xff]
    %v5967 = vld [vmem:[#allocation11 + $0x398] sm:$0xff]
    %v5968 = vld [vmem:[#allocation11 + $0x3a0] sm:$0xff]
    %v5969 = vld [vmem:[#allocation11 + $0x3a8] sm:$0xff]
    %v5970 = vld [vmem:[#allocation11 + $0x3b0] sm:$0xff]
    %v5971 = vld [vmem:[#allocation11 + $0x3b8] sm:$0xff]
    %v5972 = vld [vmem:[#allocation11 + $0x3c0] sm:$0xff]
    %v5973 = vld [vmem:[#allocation11 + $0x3c8] sm:$0xff]
    %v5974 = vld [vmem:[#allocation11 + $0x3d0] sm:$0xff]
    %v5975 = vld [vmem:[#allocation11 + $0x3d8] sm:$0xff]
    %v5976 = vld [vmem:[#allocation11 + $0x3e0] sm:$0xff]
    %v5977 = vld [vmem:[#allocation11 + $0x3e8] sm:$0xff]
    %v5978 = vld [vmem:[#allocation11 + $0x3f0] sm:$0xff]
    %v5979 = vld [vmem:[#allocation11 + $0x3f8] sm:$0xff]
    %v5980 = vld [vmem:[#allocation11 + $0x400] sm:$0xff]
    %v5981 = vld [vmem:[#allocation11 + $0x408] sm:$0xff]
    %v5982 = vld [vmem:[#allocation11 + $0x410] sm:$0xff]
    %v5983 = vld [vmem:[#allocation11 + $0x418] sm:$0xff]
    %v5984 = vld [vmem:[#allocation11 + $0x420] sm:$0xff]
    %v5985 = vld [vmem:[#allocation11 + $0x428] sm:$0xff]
    %v5986 = vld [vmem:[#allocation11 + $0x430] sm:$0xff]
    %v5987 = vld [vmem:[#allocation11 + $0x438] sm:$0xff]
    %v5988 = vld [vmem:[#allocation11 + $0x440] sm:$0xff]
    %v5989 = vld [vmem:[#allocation11 + $0x448] sm:$0xff]
    %v5990 = vld [vmem:[#allocation11 + $0x450] sm:$0xff]
    %v5991 = vld [vmem:[#allocation11 + $0x458] sm:$0xff]
    %v5992 = vld [vmem:[#allocation11 + $0x460] sm:$0xff]
    %v5993 = vld [vmem:[#allocation11 + $0x468] sm:$0xff]
    %v5994 = vld [vmem:[#allocation11 + $0x470] sm:$0xff]
    %v5995 = vld [vmem:[#allocation11 + $0x478] sm:$0xff]
    %v5996 = vld [vmem:[#allocation11 + $0x480] sm:$0xff]
    %v5997 = vld [vmem:[#allocation11 + $0x488] sm:$0xff]
    %v5998 = vld [vmem:[#allocation11 + $0x490] sm:$0xff]
    %v5999 = vld [vmem:[#allocation11 + $0x498] sm:$0xff]
    %v6000 = vld [vmem:[#allocation11 + $0x4a0] sm:$0xff]
    %v6001 = vld [vmem:[#allocation11 + $0x4a8] sm:$0xff]
    %v6002 = vld [vmem:[#allocation11 + $0x4b0] sm:$0xff]
    %v6003 = vld [vmem:[#allocation11 + $0x4b8] sm:$0xff]
    %v6004 = vld [vmem:[#allocation11 + $0x4c0] sm:$0xff]
    %v6005 = vld [vmem:[#allocation11 + $0x4c8] sm:$0xff]
    %v6006 = vld [vmem:[#allocation11 + $0x4d0] sm:$0xff]
    %v6007 = vld [vmem:[#allocation11 + $0x4d8] sm:$0xff]
    %v6008 = vld [vmem:[#allocation11 + $0x4e0] sm:$0xff]
    %v6009 = vld [vmem:[#allocation11 + $0x4e8] sm:$0xff]
    %v6010 = vld [vmem:[#allocation11 + $0x4f0] sm:$0xff]
    %v6011 = vld [vmem:[#allocation11 + $0x4f8] sm:$0xff]
    %v6012 = vld [vmem:[#allocation11 + $0x500] sm:$0xff]
    %v6013 = vld [vmem:[#allocation11 + $0x508] sm:$0xff]
    %v6014 = vld [vmem:[#allocation11 + $0x510] sm:$0xff]
    %v6015 = vld [vmem:[#allocation11 + $0x518] sm:$0xff]
    %v6016 = vld [vmem:[#allocation11 + $0x520] sm:$0xff]
    %v6017 = vld [vmem:[#allocation11 + $0x528] sm:$0xff]
    %v6018 = vld [vmem:[#allocation11 + $0x530] sm:$0xff]
    %v6019 = vld [vmem:[#allocation11 + $0x538] sm:$0xff]
    %v6020 = vld [vmem:[#allocation11 + $0x540] sm:$0xff]
    %v6021 = vld [vmem:[#allocation11 + $0x548] sm:$0xff]
    %v6022 = vld [vmem:[#allocation11 + $0x550] sm:$0xff]
    %v6023 = vld [vmem:[#allocation11 + $0x558] sm:$0xff]
    %v6024 = vld [vmem:[#allocation11 + $0x560] sm:$0xff]
    %v6025 = vld [vmem:[#allocation11 + $0x568] sm:$0xff]
    %v6026 = vld [vmem:[#allocation11 + $0x570] sm:$0xff]
    %v6027 = vld [vmem:[#allocation11 + $0x578] sm:$0xff]
    %v6028 = vld [vmem:[#allocation11 + $0x580] sm:$0xff]
    %v6029 = vld [vmem:[#allocation11 + $0x588] sm:$0xff]
    %v6030 = vld [vmem:[#allocation11 + $0x590] sm:$0xff]
    %v6031 = vld [vmem:[#allocation11 + $0x598] sm:$0xff]
    %v6032 = vld [vmem:[#allocation11 + $0x5a0] sm:$0xff]
    %v6033 = vld [vmem:[#allocation11 + $0x5a8] sm:$0xff]
    %v6034 = vld [vmem:[#allocation11 + $0x5b0] sm:$0xff]
    %v6035 = vld [vmem:[#allocation11 + $0x5b8] sm:$0xff]
    %v6036 = vld [vmem:[#allocation11 + $0x5c0] sm:$0xff]
    %v6037 = vld [vmem:[#allocation11 + $0x5c8] sm:$0xff]
    %v6038 = vld [vmem:[#allocation11 + $0x5d0] sm:$0xff]
    %v6039 = vld [vmem:[#allocation11 + $0x5d8] sm:$0xff]
    %v6040 = vld [vmem:[#allocation11 + $0x5e0] sm:$0xff]
    %v6041 = vld [vmem:[#allocation11 + $0x5e8] sm:$0xff]
    %v6042 = vld [vmem:[#allocation11 + $0x5f0] sm:$0xff]
    %v6043 = vld [vmem:[#allocation11 + $0x5f8] sm:$0xff]
    %v6044 = vld [vmem:[#allocation11 + $0x600] sm:$0xff]
    %v6045 = vld [vmem:[#allocation11 + $0x608] sm:$0xff]
    %v6046 = vld [vmem:[#allocation11 + $0x610] sm:$0xff]
    %v6047 = vld [vmem:[#allocation11 + $0x618] sm:$0xff]
    %v6048 = vld [vmem:[#allocation11 + $0x620] sm:$0xff]
    %v6049 = vld [vmem:[#allocation11 + $0x628] sm:$0xff]
    %v6050 = vld [vmem:[#allocation11 + $0x630] sm:$0xff]
    %v6051 = vld [vmem:[#allocation11 + $0x638] sm:$0xff]
    %v6052 = vld [vmem:[#allocation11 + $0x640] sm:$0xff]
    %v6053 = vld [vmem:[#allocation11 + $0x648] sm:$0xff]
    %v6054 = vld [vmem:[#allocation11 + $0x650] sm:$0xff]
    %v6055 = vld [vmem:[#allocation11 + $0x658] sm:$0xff]
    %v6056 = vld [vmem:[#allocation11 + $0x660] sm:$0xff]
    %v6057 = vld [vmem:[#allocation11 + $0x668] sm:$0xff]
    %v6058 = vld [vmem:[#allocation11 + $0x670] sm:$0xff]
    %v6059 = vld [vmem:[#allocation11 + $0x678] sm:$0xff]
    %v6060 = vld [vmem:[#allocation11 + $0x680] sm:$0xff]
    %v6061 = vld [vmem:[#allocation11 + $0x688] sm:$0xff]
    %v6062 = vld [vmem:[#allocation11 + $0x690] sm:$0xff]
    %v6063 = vld [vmem:[#allocation11 + $0x698] sm:$0xff]
    %v6064 = vld [vmem:[#allocation11 + $0x6a0] sm:$0xff]
    %v6065 = vld [vmem:[#allocation11 + $0x6a8] sm:$0xff]
    %v6066 = vld [vmem:[#allocation11 + $0x6b0] sm:$0xff]
    %v6067 = vld [vmem:[#allocation11 + $0x6b8] sm:$0xff]
    %v6068 = vld [vmem:[#allocation11 + $0x6c0] sm:$0xff]
    %v6069 = vld [vmem:[#allocation11 + $0x6c8] sm:$0xff]
    %v6070 = vld [vmem:[#allocation11 + $0x6d0] sm:$0xff]
    %v6071 = vld [vmem:[#allocation11 + $0x6d8] sm:$0xff]
    %v6072 = vld [vmem:[#allocation11 + $0x6e0] sm:$0xff]
    %v6073 = vld [vmem:[#allocation11 + $0x6e8] sm:$0xff]
    %v6074 = vld [vmem:[#allocation11 + $0x6f0] sm:$0xff]
    %v6075 = vld [vmem:[#allocation11 + $0x6f8] sm:$0xff]
    %v6076 = vld [vmem:[#allocation11 + $0x700] sm:$0xff]
    %v6077 = vld [vmem:[#allocation11 + $0x708] sm:$0xff]
    %v6078 = vld [vmem:[#allocation11 + $0x710] sm:$0xff]
    %v6079 = vld [vmem:[#allocation11 + $0x718] sm:$0xff]
    %v6080 = vld [vmem:[#allocation11 + $0x720] sm:$0xff]
    %v6081 = vld [vmem:[#allocation11 + $0x728] sm:$0xff]
    %v6082 = vld [vmem:[#allocation11 + $0x730] sm:$0xff]
    %v6083 = vld [vmem:[#allocation11 + $0x738] sm:$0xff]
    %v6084 = vld [vmem:[#allocation11 + $0x740] sm:$0xff]
    %v6085 = vld [vmem:[#allocation11 + $0x748] sm:$0xff]
    %v6086 = vld [vmem:[#allocation11 + $0x750] sm:$0xff]
    %v6087 = vld [vmem:[#allocation11 + $0x758] sm:$0xff]
    %v6088 = vld [vmem:[#allocation11 + $0x760] sm:$0xff]
    %v6089 = vld [vmem:[#allocation11 + $0x768] sm:$0xff]
    %v6090 = vld [vmem:[#allocation11 + $0x770] sm:$0xff]
    %v6091 = vld [vmem:[#allocation11 + $0x778] sm:$0xff]
    %v6092 = vld [vmem:[#allocation11 + $0x780] sm:$0xff]
    %v6093 = vld [vmem:[#allocation11 + $0x788] sm:$0xff]
    %v6094 = vld [vmem:[#allocation11 + $0x790] sm:$0xff]
    %v6095 = vld [vmem:[#allocation11 + $0x798] sm:$0xff]
    %v6096 = vld [vmem:[#allocation11 + $0x7a0] sm:$0xff]
    %v6097 = vld [vmem:[#allocation11 + $0x7a8] sm:$0xff]
    %v6098 = vld [vmem:[#allocation11 + $0x7b0] sm:$0xff]
    %v6099 = vld [vmem:[#allocation11 + $0x7b8] sm:$0xff]
    %v6100 = vld [vmem:[#allocation11 + $0x7c0] sm:$0xff]
    %v6101 = vld [vmem:[#allocation11 + $0x7c8] sm:$0xff]
    %v6102 = vld [vmem:[#allocation11 + $0x7d0] sm:$0xff]
    %v6103 = vld [vmem:[#allocation11 + $0x7d8] sm:$0xff]
    %v6104 = vld [vmem:[#allocation11 + $0x7e0] sm:$0xff]
    %v6105 = vld [vmem:[#allocation11 + $0x7e8] sm:$0xff]
    %v6106 = vld [vmem:[#allocation11 + $0x7f0] sm:$0xff]
    %v6107 = vld [vmem:[#allocation11 + $0x7f8] sm:$0xff]
    %v6108 = vld [vmem:[#allocation11 + $0x800] sm:$0xff]
    %v6109 = vld [vmem:[#allocation11 + $0x808] sm:$0xff]
    %v6110 = vld [vmem:[#allocation11 + $0x810] sm:$0xff]
    %v6111 = vld [vmem:[#allocation11 + $0x818] sm:$0xff]
    %v6112 = vld [vmem:[#allocation11 + $0x820] sm:$0xff]
    %v6113 = vld [vmem:[#allocation11 + $0x828] sm:$0xff]
    %v6114 = vld [vmem:[#allocation11 + $0x830] sm:$0xff]
    %v6115 = vld [vmem:[#allocation11 + $0x838] sm:$0xff]
    %v6116 = vld [vmem:[#allocation11 + $0x840] sm:$0xff]
    %v6117 = vld [vmem:[#allocation11 + $0x848] sm:$0xff]
    %v6118 = vld [vmem:[#allocation11 + $0x850] sm:$0xff]
    %v6119 = vld [vmem:[#allocation11 + $0x858] sm:$0xff]
    %v6120 = vld [vmem:[#allocation11 + $0x860] sm:$0xff]
    %v6121 = vld [vmem:[#allocation11 + $0x868] sm:$0xff]
    %v6122 = vld [vmem:[#allocation11 + $0x870] sm:$0xff]
    %v6123 = vld [vmem:[#allocation11 + $0x878] sm:$0xff]
    %v6124 = vld [vmem:[#allocation11 + $0x880] sm:$0xff]
    %v6125 = vld [vmem:[#allocation11 + $0x888] sm:$0xff]
    %v6126 = vld [vmem:[#allocation11 + $0x890] sm:$0xff]
    %v6127 = vld [vmem:[#allocation11 + $0x898] sm:$0xff]
    %v6128 = vld [vmem:[#allocation11 + $0x8a0] sm:$0xff]
    %v6129 = vld [vmem:[#allocation11 + $0x8a8] sm:$0xff]
    %v6130 = vld [vmem:[#allocation11 + $0x8b0] sm:$0xff]
    %v6131 = vld [vmem:[#allocation11 + $0x8b8] sm:$0xff]
    %v6132 = vld [vmem:[#allocation11 + $0x8c0] sm:$0xff]
    %v6133 = vld [vmem:[#allocation11 + $0x8c8] sm:$0xff]
    %v6134 = vld [vmem:[#allocation11 + $0x8d0] sm:$0xff]
    %v6135 = vld [vmem:[#allocation11 + $0x8d8] sm:$0xff]
    %v6136 = vld [vmem:[#allocation11 + $0x8e0] sm:$0xff]
    %v6137 = vld [vmem:[#allocation11 + $0x8e8] sm:$0xff]
    %v6138 = vld [vmem:[#allocation11 + $0x8f0] sm:$0xff]
    %v6139 = vld [vmem:[#allocation11 + $0x8f8] sm:$0xff]
    %v6140 = vld [vmem:[#allocation11 + $0x900] sm:$0xff]
    %v6141 = vld [vmem:[#allocation11 + $0x908] sm:$0xff]
    %v6142 = vld [vmem:[#allocation11 + $0x910] sm:$0xff]
    %v6143 = vld [vmem:[#allocation11 + $0x918] sm:$0xff]
    %v6144 = vld [vmem:[#allocation11 + $0x920] sm:$0xff]
    %v6145 = vld [vmem:[#allocation11 + $0x928] sm:$0xff]
    %v6146 = vld [vmem:[#allocation11 + $0x930] sm:$0xff]
    %v6147 = vld [vmem:[#allocation11 + $0x938] sm:$0xff]
    %v6148 = vld [vmem:[#allocation11 + $0x940] sm:$0xff]
    %v6149 = vld [vmem:[#allocation11 + $0x948] sm:$0xff]
    %v6150 = vld [vmem:[#allocation11 + $0x950] sm:$0xff]
    %v6151 = vld [vmem:[#allocation11 + $0x958] sm:$0xff]
    %v6152 = vld [vmem:[#allocation11 + $0x960] sm:$0xff]
    %v6153 = vld [vmem:[#allocation11 + $0x968] sm:$0xff]
    %v6154 = vld [vmem:[#allocation11 + $0x970] sm:$0xff]
    %v6155 = vld [vmem:[#allocation11 + $0x978] sm:$0xff]
    %v6156 = vld [vmem:[#allocation11 + $0x980] sm:$0xff]
    %v6157 = vld [vmem:[#allocation11 + $0x988] sm:$0xff]
    %v6158 = vld [vmem:[#allocation11 + $0x990] sm:$0xff]
    %v6159 = vld [vmem:[#allocation11 + $0x998] sm:$0xff]
    %v6160 = vld [vmem:[#allocation11 + $0x9a0] sm:$0xff]
    %v6161 = vld [vmem:[#allocation11 + $0x9a8] sm:$0xff]
    %v6162 = vld [vmem:[#allocation11 + $0x9b0] sm:$0xff]
    %v6163 = vld [vmem:[#allocation11 + $0x9b8] sm:$0xff]
    %v6164 = vld [vmem:[#allocation11 + $0x9c0] sm:$0xff]
    %v6165 = vld [vmem:[#allocation11 + $0x9c8] sm:$0xff]
    %v6166 = vld [vmem:[#allocation11 + $0x9d0] sm:$0xff]
    %v6167 = vld [vmem:[#allocation11 + $0x9d8] sm:$0xff]
    %v6168 = vld [vmem:[#allocation11 + $0x9e0] sm:$0xff]
    %v6169 = vld [vmem:[#allocation11 + $0x9e8] sm:$0xff]
    %v6170 = vld [vmem:[#allocation11 + $0x9f0] sm:$0xff]
    %v6171 = vld [vmem:[#allocation11 + $0x9f8] sm:$0xff]
    %v6172 = vld [vmem:[#allocation11 + $0xa00] sm:$0xff]
    %v6173 = vld [vmem:[#allocation11 + $0xa08] sm:$0xff]
    %v6174 = vld [vmem:[#allocation11 + $0xa10] sm:$0xff]
    %v6175 = vld [vmem:[#allocation11 + $0xa18] sm:$0xff]
    %v6176 = vld [vmem:[#allocation11 + $0xa20] sm:$0xff]
    %v6177 = vld [vmem:[#allocation11 + $0xa28] sm:$0xff]
    %v6178 = vld [vmem:[#allocation11 + $0xa30] sm:$0xff]
    %v6179 = vld [vmem:[#allocation11 + $0xa38] sm:$0xff]
    %v6180 = vld [vmem:[#allocation11 + $0xa40] sm:$0xff]
    %v6181 = vld [vmem:[#allocation11 + $0xa48] sm:$0xff]
    %v6182 = vld [vmem:[#allocation11 + $0xa50] sm:$0xff]
    %v6183 = vld [vmem:[#allocation11 + $0xa58] sm:$0xff]
    %v6184 = vld [vmem:[#allocation11 + $0xa60] sm:$0xff]
    %v6185 = vld [vmem:[#allocation11 + $0xa68] sm:$0xff]
    %v6186 = vld [vmem:[#allocation11 + $0xa70] sm:$0xff]
    %v6187 = vld [vmem:[#allocation11 + $0xa78] sm:$0xff]
    %v6188 = vld [vmem:[#allocation11 + $0xa80] sm:$0xff]
    %v6189 = vld [vmem:[#allocation11 + $0xa88] sm:$0xff]
    %v6190 = vld [vmem:[#allocation11 + $0xa90] sm:$0xff]
    %v6191 = vld [vmem:[#allocation11 + $0xa98] sm:$0xff]
    %v6192 = vld [vmem:[#allocation11 + $0xaa0] sm:$0xff]
    %v6193 = vld [vmem:[#allocation11 + $0xaa8] sm:$0xff]
    %v6194 = vld [vmem:[#allocation11 + $0xab0] sm:$0xff]
    %v6195 = vld [vmem:[#allocation11 + $0xab8] sm:$0xff]
    %v6196 = vld [vmem:[#allocation11 + $0xac0] sm:$0xff]
    %v6197 = vld [vmem:[#allocation11 + $0xac8] sm:$0xff]
    %v6198 = vld [vmem:[#allocation11 + $0xad0] sm:$0xff]
    %v6199 = vld [vmem:[#allocation11 + $0xad8] sm:$0xff]
    %v6200 = vld [vmem:[#allocation11 + $0xae0] sm:$0xff]
    %v6201 = vld [vmem:[#allocation11 + $0xae8] sm:$0xff]
    %v6202 = vld [vmem:[#allocation11 + $0xaf0] sm:$0xff]
    %v6203 = vld [vmem:[#allocation11 + $0xaf8] sm:$0xff]
    %v6204 = vld [vmem:[#allocation11 + $0xb00] sm:$0xff]
    %v6205 = vld [vmem:[#allocation11 + $0xb08] sm:$0xff]
    %v6206 = vld [vmem:[#allocation11 + $0xb10] sm:$0xff]
    %v6207 = vld [vmem:[#allocation11 + $0xb18] sm:$0xff]
    %v6208 = vld [vmem:[#allocation11 + $0xb20] sm:$0xff]
    %v6209 = vld [vmem:[#allocation11 + $0xb28] sm:$0xff]
    %v6210 = vld [vmem:[#allocation11 + $0xb30] sm:$0xff]
    %v6211 = vld [vmem:[#allocation11 + $0xb38] sm:$0xff]
    %v6212 = vld [vmem:[#allocation11 + $0xb40] sm:$0xff]
    %v6213 = vld [vmem:[#allocation11 + $0xb48] sm:$0xff]
    %v6214 = vld [vmem:[#allocation11 + $0xb50] sm:$0xff]
    %v6215 = vld [vmem:[#allocation11 + $0xb58] sm:$0xff]
    %v6216 = vld [vmem:[#allocation11 + $0xb60] sm:$0xff]
    %v6217 = vld [vmem:[#allocation11 + $0xb68] sm:$0xff]
    %v6218 = vld [vmem:[#allocation11 + $0xb70] sm:$0xff]
    %v6219 = vld [vmem:[#allocation11 + $0xb78] sm:$0xff]
    %v6220 = vld [vmem:[#allocation11 + $0xb80] sm:$0xff]
    %v6221 = vld [vmem:[#allocation11 + $0xb88] sm:$0xff]
    %v6222 = vld [vmem:[#allocation11 + $0xb90] sm:$0xff]
    %v6223 = vld [vmem:[#allocation11 + $0xb98] sm:$0xff]
    %v6224 = vld [vmem:[#allocation11 + $0xba0] sm:$0xff]
    %v6225 = vld [vmem:[#allocation11 + $0xba8] sm:$0xff]
    %v6226 = vld [vmem:[#allocation11 + $0xbb0] sm:$0xff]
    %v6227 = vld [vmem:[#allocation11 + $0xbb8] sm:$0xff]
    %v6228 = vld [vmem:[#allocation11 + $0xbc0] sm:$0xff]
    %v6229 = vld [vmem:[#allocation11 + $0xbc8] sm:$0xff]
    %v6230 = vld [vmem:[#allocation11 + $0xbd0] sm:$0xff]
    %v6231 = vld [vmem:[#allocation11 + $0xbd8] sm:$0xff]
    %v6232 = vld [vmem:[#allocation11 + $0xbe0] sm:$0xff]
    %v6233 = vld [vmem:[#allocation11 + $0xbe8] sm:$0xff]
    %v6234 = vld [vmem:[#allocation11 + $0xbf0] sm:$0xff]
    %v6235 = vld [vmem:[#allocation11 + $0xbf8] sm:$0xff]
    %v6236 = vld [vmem:[#allocation11 + $0xc00] sm:$0xff]
    %v6237 = vld [vmem:[#allocation11 + $0xc08] sm:$0xff]
    %v6238 = vld [vmem:[#allocation11 + $0xc10] sm:$0xff]
    %v6239 = vld [vmem:[#allocation11 + $0xc18] sm:$0xff]
    %v6240 = vld [vmem:[#allocation11 + $0xc20] sm:$0xff]
    %v6241 = vld [vmem:[#allocation11 + $0xc28] sm:$0xff]
    %v6242 = vld [vmem:[#allocation11 + $0xc30] sm:$0xff]
    %v6243 = vld [vmem:[#allocation11 + $0xc38] sm:$0xff]
    %v6244 = vld [vmem:[#allocation11 + $0xc40] sm:$0xff]
    %v6245 = vld [vmem:[#allocation11 + $0xc48] sm:$0xff]
    %v6246 = vld [vmem:[#allocation11 + $0xc50] sm:$0xff]
    %v6247 = vld [vmem:[#allocation11 + $0xc58] sm:$0xff]
    %v6248 = vld [vmem:[#allocation11 + $0xc60] sm:$0xff]
    %v6249 = vld [vmem:[#allocation11 + $0xc68] sm:$0xff]
    %v6250 = vld [vmem:[#allocation11 + $0xc70] sm:$0xff]
    %v6251 = vld [vmem:[#allocation11 + $0xc78] sm:$0xff]
    %v6252 = vld [vmem:[#allocation11 + $0xc80] sm:$0xff]
    %v6253 = vld [vmem:[#allocation11 + $0xc88] sm:$0xff]
    %v6254 = vld [vmem:[#allocation11 + $0xc90] sm:$0xff]
    %v6255 = vld [vmem:[#allocation11 + $0xc98] sm:$0xff]
    %v6256 = vld [vmem:[#allocation11 + $0xca0] sm:$0xff]
    %v6257 = vld [vmem:[#allocation11 + $0xca8] sm:$0xff]
    %v6258 = vld [vmem:[#allocation11 + $0xcb0] sm:$0xff]
    %v6259 = vld [vmem:[#allocation11 + $0xcb8] sm:$0xff]
    %v6260 = vld [vmem:[#allocation11 + $0xcc0] sm:$0xff]
    %v6261 = vld [vmem:[#allocation11 + $0xcc8] sm:$0xff]
    %v6262 = vld [vmem:[#allocation11 + $0xcd0] sm:$0xff]
    %v6263 = vld [vmem:[#allocation11 + $0xcd8] sm:$0xff]
    %v6264 = vld [vmem:[#allocation11 + $0xce0] sm:$0xff]
    %v6265 = vld [vmem:[#allocation11 + $0xce8] sm:$0xff]
    %v6266 = vld [vmem:[#allocation11 + $0xcf0] sm:$0xff]
    %v6267 = vld [vmem:[#allocation11 + $0xcf8] sm:$0xff]
    %v6268 = vld [vmem:[#allocation11 + $0xd00] sm:$0xff]
    %v6269 = vld [vmem:[#allocation11 + $0xd08] sm:$0xff]
    %v6270 = vld [vmem:[#allocation11 + $0xd10] sm:$0xff]
    %v6271 = vld [vmem:[#allocation11 + $0xd18] sm:$0xff]
    %v6272 = vld [vmem:[#allocation11 + $0xd20] sm:$0xff]
    %v6273 = vld [vmem:[#allocation11 + $0xd28] sm:$0xff]
    %v6274 = vld [vmem:[#allocation11 + $0xd30] sm:$0xff]
    %v6275 = vld [vmem:[#allocation11 + $0xd38] sm:$0xff]
    %v6276 = vld [vmem:[#allocation11 + $0xd40] sm:$0xff]
    %v6277 = vld [vmem:[#allocation11 + $0xd48] sm:$0xff]
    %v6278 = vld [vmem:[#allocation11 + $0xd50] sm:$0xff]
    %v6279 = vld [vmem:[#allocation11 + $0xd58] sm:$0xff]
    %v6280 = vld [vmem:[#allocation11 + $0xd60] sm:$0xff]
    %v6281 = vld [vmem:[#allocation11 + $0xd68] sm:$0xff]
    %v6282 = vld [vmem:[#allocation11 + $0xd70] sm:$0xff]
    %v6283 = vld [vmem:[#allocation11 + $0xd78] sm:$0xff]
    %v6284 = vld [vmem:[#allocation11 + $0xd80] sm:$0xff]
    %v6285 = vld [vmem:[#allocation11 + $0xd88] sm:$0xff]
    %v6286 = vld [vmem:[#allocation11 + $0xd90] sm:$0xff]
    %v6287 = vld [vmem:[#allocation11 + $0xd98] sm:$0xff]
    %v6288 = vld [vmem:[#allocation11 + $0xda0] sm:$0xff]
    %v6289 = vld [vmem:[#allocation11 + $0xda8] sm:$0xff]
    %v6290 = vld [vmem:[#allocation11 + $0xdb0] sm:$0xff]
    %v6291 = vld [vmem:[#allocation11 + $0xdb8] sm:$0xff]
    %v6292 = vld [vmem:[#allocation11 + $0xdc0] sm:$0xff]
    %v6293 = vld [vmem:[#allocation11 + $0xdc8] sm:$0xff]
    %v6294 = vld [vmem:[#allocation11 + $0xdd0] sm:$0xff]
    %v6295 = vld [vmem:[#allocation11 + $0xdd8] sm:$0xff]
    %v6296 = vld [vmem:[#allocation11 + $0xde0] sm:$0xff]
    %v6297 = vld [vmem:[#allocation11 + $0xde8] sm:$0xff]
    %v6298 = vld [vmem:[#allocation11 + $0xdf0] sm:$0xff]
    %v6299 = vld [vmem:[#allocation11 + $0xdf8] sm:$0xff]
    %v6300 = vld [vmem:[#allocation11 + $0xe00] sm:$0xff]
    %v6301 = vld [vmem:[#allocation11 + $0xe08] sm:$0xff]
    %v6302 = vld [vmem:[#allocation11 + $0xe10] sm:$0xff]
    %v6303 = vld [vmem:[#allocation11 + $0xe18] sm:$0xff]
    %v6304 = vld [vmem:[#allocation11 + $0xe20] sm:$0xff]
    %v6305 = vld [vmem:[#allocation11 + $0xe28] sm:$0xff]
    %v6306 = vld [vmem:[#allocation11 + $0xe30] sm:$0xff]
    %v6307 = vld [vmem:[#allocation11 + $0xe38] sm:$0xff]
    %v6308 = vld [vmem:[#allocation11 + $0xe40] sm:$0xff]
    %v6309 = vld [vmem:[#allocation11 + $0xe48] sm:$0xff]
    %v6310 = vld [vmem:[#allocation11 + $0xe50] sm:$0xff]
    %v6311 = vld [vmem:[#allocation11 + $0xe58] sm:$0xff]
    %v6312 = vld [vmem:[#allocation11 + $0xe60] sm:$0xff]
    %v6313 = vld [vmem:[#allocation11 + $0xe68] sm:$0xff]
    %v6314 = vld [vmem:[#allocation11 + $0xe70] sm:$0xff]
    %v6315 = vld [vmem:[#allocation11 + $0xe78] sm:$0xff]
    %v6316 = vld [vmem:[#allocation11 + $0xe80] sm:$0xff]
    %v6317 = vld [vmem:[#allocation11 + $0xe88] sm:$0xff]
    %v6318 = vld [vmem:[#allocation11 + $0xe90] sm:$0xff]
    %v6319 = vld [vmem:[#allocation11 + $0xe98] sm:$0xff]
    %v6320 = vld [vmem:[#allocation11 + $0xea0] sm:$0xff]
    %v6321 = vld [vmem:[#allocation11 + $0xea8] sm:$0xff]
    %v6322 = vld [vmem:[#allocation11 + $0xeb0] sm:$0xff]
    %v6323 = vld [vmem:[#allocation11 + $0xeb8] sm:$0xff]
    %v6324 = vld [vmem:[#allocation11 + $0xec0] sm:$0xff]
    %v6325 = vld [vmem:[#allocation11 + $0xec8] sm:$0xff]
    %v6326 = vld [vmem:[#allocation11 + $0xed0] sm:$0xff]
    %v6327 = vld [vmem:[#allocation11 + $0xed8] sm:$0xff]
    %v6328 = vld [vmem:[#allocation11 + $0xee0] sm:$0xff]
    %v6329 = vld [vmem:[#allocation11 + $0xee8] sm:$0xff]
    %v6330 = vld [vmem:[#allocation11 + $0xef0] sm:$0xff]
    %v6331 = vld [vmem:[#allocation11 + $0xef8] sm:$0xff]
    %v6332 = vld [vmem:[#allocation11 + $0xf00] sm:$0xff]
    %v6333 = vld [vmem:[#allocation11 + $0xf08] sm:$0xff]
    %v6334 = vld [vmem:[#allocation11 + $0xf10] sm:$0xff]
    %v6335 = vld [vmem:[#allocation11 + $0xf18] sm:$0xff]
    %v6336 = vld [vmem:[#allocation11 + $0xf20] sm:$0xff]
    %v6337 = vld [vmem:[#allocation11 + $0xf28] sm:$0xff]
    %v6338 = vld [vmem:[#allocation11 + $0xf30] sm:$0xff]
    %v6339 = vld [vmem:[#allocation11 + $0xf38] sm:$0xff]
    %v6340 = vld [vmem:[#allocation11 + $0xf40] sm:$0xff]
    %v6341 = vld [vmem:[#allocation11 + $0xf48] sm:$0xff]
    %v6342 = vld [vmem:[#allocation11 + $0xf50] sm:$0xff]
    %v6343 = vld [vmem:[#allocation11 + $0xf58] sm:$0xff]
    %v6344 = vld [vmem:[#allocation11 + $0xf60] sm:$0xff]
    %v6345 = vld [vmem:[#allocation11 + $0xf68] sm:$0xff]
    %v6346 = vld [vmem:[#allocation11 + $0xf70] sm:$0xff]
    %v6347 = vld [vmem:[#allocation11 + $0xf78] sm:$0xff]
    %v6348 = vld [vmem:[#allocation11 + $0xf80] sm:$0xff]
    %v6349 = vld [vmem:[#allocation11 + $0xf88] sm:$0xff]
    %v6350 = vld [vmem:[#allocation11 + $0xf90] sm:$0xff]
    %v6351 = vld [vmem:[#allocation11 + $0xf98] sm:$0xff]
    %v6352 = vld [vmem:[#allocation11 + $0xfa0] sm:$0xff]
    %v6353 = vld [vmem:[#allocation11 + $0xfa8] sm:$0xff]
    %v6354 = vld [vmem:[#allocation11 + $0xfb0] sm:$0xff]
    %v6355 = vld [vmem:[#allocation11 + $0xfb8] sm:$0xff]
    %v6356 = vld [vmem:[#allocation11 + $0xfc0] sm:$0xff]
    %v6357 = vld [vmem:[#allocation11 + $0xfc8] sm:$0xff]
    %v6358 = vld [vmem:[#allocation11 + $0xfd0] sm:$0xff]
    %v6359 = vld [vmem:[#allocation11 + $0xfd8] sm:$0xff]
    %v6360 = vld [vmem:[#allocation11 + $0xfe0] sm:$0xff]
    %v6361 = vld [vmem:[#allocation11 + $0xfe8] sm:$0xff]
    %v6362 = vld [vmem:[#allocation11 + $0xff0] sm:$0xff]
    %v6363 = vld [vmem:[#allocation11 + $0xff8] sm:$0xff]
    %v6364 = vld [vmem:[#allocation13] sm:$0xff]
    %v6366 = vperm.slane %v6364, 0
    %v6367 = vperm.slane %v6364, 1
    %v6368 = vperm.slane %v6364, 2
    %v6369 = vperm.slane %v6364, 3
    %v6370 = vperm.slane %v6364, 4
    %v6371 = vperm.slane %v6364, 5
    %v6372 = vperm.slane %v6364, 6
    %v6373 = vperm.slane %v6364, 7
    %6382 = vmatpush.msra.mxu0 %v5972
    %6383 = vmatpush.msra.mxu0 %v5964
    %6384 = vmatpush.msra.mxu0 %v5956
    %6385 = vmatpush.msra.mxu0 %v5948
    %6386 = vmatpush.msra.mxu0 %v5940
    %6387 = vmatpush.msra.mxu0 %v5932
    %6388 = vmatpush.msra.mxu0 %v5924
    %6389 = vmatpush.msra.mxu0 %v5916
    %6390 = vmatpush.msra.mxu0 %v5908
    %6391 = vmatpush.msra.mxu0 %v5900
    %6392 = vmatpush.msra.mxu0 %v5892
    %6393 = vmatpush.msra.mxu0 %v5884
    %6394 = vmatpush.msra.mxu0 %v5876
    %6395 = vmatpush.msra.mxu0 %v5868
    %6396 = vmatpush.msra.mxu0 %v5860
    %6397 = vmatpush.msra.mxu0 %v5852
    %6398 = vmatmul.f32.gmra.mxu0 %v5848
    %v6399 = vpop.f32.mrf.mxu0
    %v6400 = vadd.f32 %v6366, %v6399
    %6401 = vdwg.mxu0
    %6402 = vmatpush.msra.mxu0 %v6100
    %6403 = vmatpush.msra.mxu0 %v6092
    %6404 = vmatpush.msra.mxu0 %v6084
    %6405 = vmatpush.msra.mxu0 %v6076
    %6406 = vmatpush.msra.mxu0 %v6068
    %6407 = vmatpush.msra.mxu0 %v6060
    %6408 = vmatpush.msra.mxu0 %v6052
    %6409 = vmatpush.msra.mxu0 %v6044
    %6410 = vmatpush.msra.mxu0 %v6036
    %6411 = vmatpush.msra.mxu0 %v6028
    %6412 = vmatpush.msra.mxu0 %v6020
    %6413 = vmatpush.msra.mxu0 %v6012
    %6414 = vmatpush.msra.mxu0 %v6004
    %6415 = vmatpush.msra.mxu0 %v5996
    %6416 = vmatpush.msra.mxu0 %v5988
    %6417 = vmatpush.msra.mxu0 %v5980
    %6418 = vmatmul.f32.gmra.mxu0 %v5849
    %v6419 = vpop.f32.mrf.mxu0
    %v6420 = vadd.f32 %v6400, %v6419
    %6421 = vdwg.mxu0
    %6422 = vmatpush.msra.mxu0 %v6228
    %6423 = vmatpush.msra.mxu0 %v6220
    %6424 = vmatpush.msra.mxu0 %v6212
    %6425 = vmatpush.msra.mxu0 %v6204
    %6426 = vmatpush.msra.mxu0 %v6196
    %6427 = vmatpush.msra.mxu0 %v6188
    %6428 = vmatpush.msra.mxu0 %v6180
    %6429 = vmatpush.msra.mxu0 %v6172
    %6430 = vmatpush.msra.mxu0 %v6164
    %6431 = vmatpush.msra.mxu0 %v6156
    %6432 = vmatpush.msra.mxu0 %v6148
    %6433 = vmatpush.msra.mxu0 %v6140
    %6434 = vmatpush.msra.mxu0 %v6132
    %6435 = vmatpush.msra.mxu0 %v6124
    %6436 = vmatpush.msra.mxu0 %v6116
    %6437 = vmatpush.msra.mxu0 %v6108
    %6438 = vmatmul.f32.gmra.mxu0 %v5850
    %v6439 = vpop.f32.mrf.mxu0
    %v6440 = vadd.f32 %v6420, %v6439
    %6441 = vdwg.mxu0
    %6442 = vmatpush.msra.mxu0 %v6356
    %6443 = vmatpush.msra.mxu0 %v6348
    %6444 = vmatpush.msra.mxu0 %v6340
    %6445 = vmatpush.msra.mxu0 %v6332
    %6446 = vmatpush.msra.mxu0 %v6324
    %6447 = vmatpush.msra.mxu0 %v6316
    %6448 = vmatpush.msra.mxu0 %v6308
    %6449 = vmatpush.msra.mxu0 %v6300
    %6450 = vmatpush.msra.mxu0 %v6292
    %6451 = vmatpush.msra.mxu0 %v6284
    %6452 = vmatpush.msra.mxu0 %v6276
    %6453 = vmatpush.msra.mxu0 %v6268
    %6454 = vmatpush.msra.mxu0 %v6260
    %6455 = vmatpush.msra.mxu0 %v6252
    %6456 = vmatpush.msra.mxu0 %v6244
    %6457 = vmatpush.msra.mxu0 %v6236
    %6458 = vmatmul.f32.gmra.mxu0 %v5851
    %v6459 = vpop.f32.mrf.mxu0
    %v6460 = vadd.f32 %v6440, %v6459
    %6461 = vdwg.mxu0
    %6462 = vmatpush.msra.mxu0 %v5973
    %6463 = vmatpush.msra.mxu0 %v5965
    %6464 = vmatpush.msra.mxu0 %v5957
    %6465 = vmatpush.msra.mxu0 %v5949
    %6466 = vmatpush.msra.mxu0 %v5941
    %6467 = vmatpush.msra.mxu0 %v5933
    %6468 = vmatpush.msra.mxu0 %v5925
    %6469 = vmatpush.msra.mxu0 %v5917
    %6470 = vmatpush.msra.mxu0 %v5909
    %6471 = vmatpush.msra.mxu0 %v5901
    %6472 = vmatpush.msra.mxu0 %v5893
    %6473 = vmatpush.msra.mxu0 %v5885
    %6474 = vmatpush.msra.mxu0 %v5877
    %6475 = vmatpush.msra.mxu0 %v5869
    %6476 = vmatpush.msra.mxu0 %v5861
    %6477 = vmatpush.msra.mxu0 %v5853
    %6478 = vmatmul.f32.gmra.mxu0 %v5848
    %v6479 = vpop.f32.mrf.mxu0
    %v6480 = vadd.f32 %v6367, %v6479
    %6481 = vdwg.mxu0
    %6482 = vmatpush.msra.mxu0 %v6101
    %6483 = vmatpush.msra.mxu0 %v6093
    %6484 = vmatpush.msra.mxu0 %v6085
    %6485 = vmatpush.msra.mxu0 %v6077
    %6486 = vmatpush.msra.mxu0 %v6069
    %6487 = vmatpush.msra.mxu0 %v6061
    %6488 = vmatpush.msra.mxu0 %v6053
    %6489 = vmatpush.msra.mxu0 %v6045
    %6490 = vmatpush.msra.mxu0 %v6037
    %6491 = vmatpush.msra.mxu0 %v6029
    %6492 = vmatpush.msra.mxu0 %v6021
    %6493 = vmatpush.msra.mxu0 %v6013
    %6494 = vmatpush.msra.mxu0 %v6005
    %6495 = vmatpush.msra.mxu0 %v5997
    %6496 = vmatpush.msra.mxu0 %v5989
    %6497 = vmatpush.msra.mxu0 %v5981
    %6498 = vmatmul.f32.gmra.mxu0 %v5849
    %v6499 = vpop.f32.mrf.mxu0
    %v6500 = vadd.f32 %v6480, %v6499
    %6501 = vdwg.mxu0
    %6502 = vmatpush.msra.mxu0 %v6229
    %6503 = vmatpush.msra.mxu0 %v6221
    %6504 = vmatpush.msra.mxu0 %v6213
    %6505 = vmatpush.msra.mxu0 %v6205
    %6506 = vmatpush.msra.mxu0 %v6197
    %6507 = vmatpush.msra.mxu0 %v6189
    %6508 = vmatpush.msra.mxu0 %v6181
    %6509 = vmatpush.msra.mxu0 %v6173
    %6510 = vmatpush.msra.mxu0 %v6165
    %6511 = vmatpush.msra.mxu0 %v6157
    %6512 = vmatpush.msra.mxu0 %v6149
    %6513 = vmatpush.msra.mxu0 %v6141
    %6514 = vmatpush.msra.mxu0 %v6133
    %6515 = vmatpush.msra.mxu0 %v6125
    %6516 = vmatpush.msra.mxu0 %v6117
    %6517 = vmatpush.msra.mxu0 %v6109
    %6518 = vmatmul.f32.gmra.mxu0 %v5850
    %v6519 = vpop.f32.mrf.mxu0
    %v6520 = vadd.f32 %v6500, %v6519
    %6521 = vdwg.mxu0
    %6522 = vmatpush.msra.mxu0 %v6357
    %6523 = vmatpush.msra.mxu0 %v6349
    %6524 = vmatpush.msra.mxu0 %v6341
    %6525 = vmatpush.msra.mxu0 %v6333
    %6526 = vmatpush.msra.mxu0 %v6325
    %6527 = vmatpush.msra.mxu0 %v6317
    %6528 = vmatpush.msra.mxu0 %v6309
    %6529 = vmatpush.msra.mxu0 %v6301
    %6530 = vmatpush.msra.mxu0 %v6293
    %6531 = vmatpush.msra.mxu0 %v6285
    %6532 = vmatpush.msra.mxu0 %v6277
    %6533 = vmatpush.msra.mxu0 %v6269
    %6534 = vmatpush.msra.mxu0 %v6261
    %6535 = vmatpush.msra.mxu0 %v6253
    %6536 = vmatpush.msra.mxu0 %v6245
    %6537 = vmatpush.msra.mxu0 %v6237
    %6538 = vmatmul.f32.gmra.mxu0 %v5851
    %v6539 = vpop.f32.mrf.mxu0
    %v6540 = vadd.f32 %v6520, %v6539
    %6541 = vdwg.mxu0
    %6542 = vmatpush.msra.mxu0 %v5974
    %6543 = vmatpush.msra.mxu0 %v5966
    %6544 = vmatpush.msra.mxu0 %v5958
    %6545 = vmatpush.msra.mxu0 %v5950
    %6546 = vmatpush.msra.mxu0 %v5942
    %6547 = vmatpush.msra.mxu0 %v5934
    %6548 = vmatpush.msra.mxu0 %v5926
    %6549 = vmatpush.msra.mxu0 %v5918
    %6550 = vmatpush.msra.mxu0 %v5910
    %6551 = vmatpush.msra.mxu0 %v5902
    %6552 = vmatpush.msra.mxu0 %v5894
    %6553 = vmatpush.msra.mxu0 %v5886
    %6554 = vmatpush.msra.mxu0 %v5878
    %6555 = vmatpush.msra.mxu0 %v5870
    %6556 = vmatpush.msra.mxu0 %v5862
    %6557 = vmatpush.msra.mxu0 %v5854
    %6558 = vmatmul.f32.gmra.mxu0 %v5848
    %v6559 = vpop.f32.mrf.mxu0
    %v6560 = vadd.f32 %v6368, %v6559
    %6561 = vdwg.mxu0
    %6562 = vmatpush.msra.mxu0 %v6102
    %6563 = vmatpush.msra.mxu0 %v6094
    %6564 = vmatpush.msra.mxu0 %v6086
    %6565 = vmatpush.msra.mxu0 %v6078
    %6566 = vmatpush.msra.mxu0 %v6070
    %6567 = vmatpush.msra.mxu0 %v6062
    %6568 = vmatpush.msra.mxu0 %v6054
    %6569 = vmatpush.msra.mxu0 %v6046
    %6570 = vmatpush.msra.mxu0 %v6038
    %6571 = vmatpush.msra.mxu0 %v6030
    %6572 = vmatpush.msra.mxu0 %v6022
    %6573 = vmatpush.msra.mxu0 %v6014
    %6574 = vmatpush.msra.mxu0 %v6006
    %6575 = vmatpush.msra.mxu0 %v5998
    %6576 = vmatpush.msra.mxu0 %v5990
    %6577 = vmatpush.msra.mxu0 %v5982
    %6578 = vmatmul.f32.gmra.mxu0 %v5849
    %v6579 = vpop.f32.mrf.mxu0
    %v6580 = vadd.f32 %v6560, %v6579
    %6581 = vdwg.mxu0
    %6582 = vmatpush.msra.mxu0 %v6230
    %6583 = vmatpush.msra.mxu0 %v6222
    %6584 = vmatpush.msra.mxu0 %v6214
    %6585 = vmatpush.msra.mxu0 %v6206
    %6586 = vmatpush.msra.mxu0 %v6198
    %6587 = vmatpush.msra.mxu0 %v6190
    %6588 = vmatpush.msra.mxu0 %v6182
    %6589 = vmatpush.msra.mxu0 %v6174
    %6590 = vmatpush.msra.mxu0 %v6166
    %6591 = vmatpush.msra.mxu0 %v6158
    %6592 = vmatpush.msra.mxu0 %v6150
    %6593 = vmatpush.msra.mxu0 %v6142
    %6594 = vmatpush.msra.mxu0 %v6134
    %6595 = vmatpush.msra.mxu0 %v6126
    %6596 = vmatpush.msra.mxu0 %v6118
    %6597 = vmatpush.msra.mxu0 %v6110
    %6598 = vmatmul.f32.gmra.mxu0 %v5850
    %v6599 = vpop.f32.mrf.mxu0
    %v6600 = vadd.f32 %v6580, %v6599
    %6601 = vdwg.mxu0
    %6602 = vmatpush.msra.mxu0 %v6358
    %6603 = vmatpush.msra.mxu0 %v6350
    %6604 = vmatpush.msra.mxu0 %v6342
    %6605 = vmatpush.msra.mxu0 %v6334
    %6606 = vmatpush.msra.mxu0 %v6326
    %6607 = vmatpush.msra.mxu0 %v6318
    %6608 = vmatpush.msra.mxu0 %v6310
    %6609 = vmatpush.msra.mxu0 %v6302
    %6610 = vmatpush.msra.mxu0 %v6294
    %6611 = vmatpush.msra.mxu0 %v6286
    %6612 = vmatpush.msra.mxu0 %v6278
    %6613 = vmatpush.msra.mxu0 %v6270
    %6614 = vmatpush.msra.mxu0 %v6262
    %6615 = vmatpush.msra.mxu0 %v6254
    %6616 = vmatpush.msra.mxu0 %v6246
    %6617 = vmatpush.msra.mxu0 %v6238
    %6618 = vmatmul.f32.gmra.mxu0 %v5851
    %v6619 = vpop.f32.mrf.mxu0
    %v6620 = vadd.f32 %v6600, %v6619
    %6621 = vdwg.mxu0
    %6622 = vmatpush.msra.mxu0 %v5975
    %6623 = vmatpush.msra.mxu0 %v5967
    %6624 = vmatpush.msra.mxu0 %v5959
    %6625 = vmatpush.msra.mxu0 %v5951
    %6626 = vmatpush.msra.mxu0 %v5943
    %6627 = vmatpush.msra.mxu0 %v5935
    %6628 = vmatpush.msra.mxu0 %v5927
    %6629 = vmatpush.msra.mxu0 %v5919
    %6630 = vmatpush.msra.mxu0 %v5911
    %6631 = vmatpush.msra.mxu0 %v5903
    %6632 = vmatpush.msra.mxu0 %v5895
    %6633 = vmatpush.msra.mxu0 %v5887
    %6634 = vmatpush.msra.mxu0 %v5879
    %6635 = vmatpush.msra.mxu0 %v5871
    %6636 = vmatpush.msra.mxu0 %v5863
    %6637 = vmatpush.msra.mxu0 %v5855
    %6638 = vmatmul.f32.gmra.mxu0 %v5848
    %v6639 = vpop.f32.mrf.mxu0
    %v6640 = vadd.f32 %v6369, %v6639
    %6641 = vdwg.mxu0
    %6642 = vmatpush.msra.mxu0 %v6103
    %6643 = vmatpush.msra.mxu0 %v6095
    %6644 = vmatpush.msra.mxu0 %v6087
    %6645 = vmatpush.msra.mxu0 %v6079
    %6646 = vmatpush.msra.mxu0 %v6071
    %6647 = vmatpush.msra.mxu0 %v6063
    %6648 = vmatpush.msra.mxu0 %v6055
    %6649 = vmatpush.msra.mxu0 %v6047
    %6650 = vmatpush.msra.mxu0 %v6039
    %6651 = vmatpush.msra.mxu0 %v6031
    %6652 = vmatpush.msra.mxu0 %v6023
    %6653 = vmatpush.msra.mxu0 %v6015
    %6654 = vmatpush.msra.mxu0 %v6007
    %6655 = vmatpush.msra.mxu0 %v5999
    %6656 = vmatpush.msra.mxu0 %v5991
    %6657 = vmatpush.msra.mxu0 %v5983
    %6658 = vmatmul.f32.gmra.mxu0 %v5849
    %v6659 = vpop.f32.mrf.mxu0
    %v6660 = vadd.f32 %v6640, %v6659
    %6661 = vdwg.mxu0
    %6662 = vmatpush.msra.mxu0 %v6231
    %6663 = vmatpush.msra.mxu0 %v6223
    %6664 = vmatpush.msra.mxu0 %v6215
    %6665 = vmatpush.msra.mxu0 %v6207
    %6666 = vmatpush.msra.mxu0 %v6199
    %6667 = vmatpush.msra.mxu0 %v6191
    %6668 = vmatpush.msra.mxu0 %v6183
    %6669 = vmatpush.msra.mxu0 %v6175
    %6670 = vmatpush.msra.mxu0 %v6167
    %6671 = vmatpush.msra.mxu0 %v6159
    %6672 = vmatpush.msra.mxu0 %v6151
    %6673 = vmatpush.msra.mxu0 %v6143
    %6674 = vmatpush.msra.mxu0 %v6135
    %6675 = vmatpush.msra.mxu0 %v6127
    %6676 = vmatpush.msra.mxu0 %v6119
    %6677 = vmatpush.msra.mxu0 %v6111
    %6678 = vmatmul.f32.gmra.mxu0 %v5850
    %v6679 = vpop.f32.mrf.mxu0
    %v6680 = vadd.f32 %v6660, %v6679
    %6681 = vdwg.mxu0
    %6682 = vmatpush.msra.mxu0 %v6359
    %6683 = vmatpush.msra.mxu0 %v6351
    %6684 = vmatpush.msra.mxu0 %v6343
    %6685 = vmatpush.msra.mxu0 %v6335
    %6686 = vmatpush.msra.mxu0 %v6327
    %6687 = vmatpush.msra.mxu0 %v6319
    %6688 = vmatpush.msra.mxu0 %v6311
    %6689 = vmatpush.msra.mxu0 %v6303
    %6690 = vmatpush.msra.mxu0 %v6295
    %6691 = vmatpush.msra.mxu0 %v6287
    %6692 = vmatpush.msra.mxu0 %v6279
    %6693 = vmatpush.msra.mxu0 %v6271
    %6694 = vmatpush.msra.mxu0 %v6263
    %6695 = vmatpush.msra.mxu0 %v6255
    %6696 = vmatpush.msra.mxu0 %v6247
    %6697 = vmatpush.msra.mxu0 %v6239
    %6698 = vmatmul.f32.gmra.mxu0 %v5851
    %v6699 = vpop.f32.mrf.mxu0
    %v6700 = vadd.f32 %v6680, %v6699
    %6701 = vdwg.mxu0
    %6702 = vmatpush.msra.mxu0 %v5976
    %6703 = vmatpush.msra.mxu0 %v5968
    %6704 = vmatpush.msra.mxu0 %v5960
    %6705 = vmatpush.msra.mxu0 %v5952
    %6706 = vmatpush.msra.mxu0 %v5944
    %6707 = vmatpush.msra.mxu0 %v5936
    %6708 = vmatpush.msra.mxu0 %v5928
    %6709 = vmatpush.msra.mxu0 %v5920
    %6710 = vmatpush.msra.mxu0 %v5912
    %6711 = vmatpush.msra.mxu0 %v5904
    %6712 = vmatpush.msra.mxu0 %v5896
    %6713 = vmatpush.msra.mxu0 %v5888
    %6714 = vmatpush.msra.mxu0 %v5880
    %6715 = vmatpush.msra.mxu0 %v5872
    %6716 = vmatpush.msra.mxu0 %v5864
    %6717 = vmatpush.msra.mxu0 %v5856
    %6718 = vmatmul.f32.gmra.mxu0 %v5848
    %v6719 = vpop.f32.mrf.mxu0
    %v6720 = vadd.f32 %v6370, %v6719
    %6721 = vdwg.mxu0
    %6722 = vmatpush.msra.mxu0 %v6104
    %6723 = vmatpush.msra.mxu0 %v6096
    %6724 = vmatpush.msra.mxu0 %v6088
    %6725 = vmatpush.msra.mxu0 %v6080
    %6726 = vmatpush.msra.mxu0 %v6072
    %6727 = vmatpush.msra.mxu0 %v6064
    %6728 = vmatpush.msra.mxu0 %v6056
    %6729 = vmatpush.msra.mxu0 %v6048
    %6730 = vmatpush.msra.mxu0 %v6040
    %6731 = vmatpush.msra.mxu0 %v6032
    %6732 = vmatpush.msra.mxu0 %v6024
    %6733 = vmatpush.msra.mxu0 %v6016
    %6734 = vmatpush.msra.mxu0 %v6008
    %6735 = vmatpush.msra.mxu0 %v6000
    %6736 = vmatpush.msra.mxu0 %v5992
    %6737 = vmatpush.msra.mxu0 %v5984
    %6738 = vmatmul.f32.gmra.mxu0 %v5849
    %v6739 = vpop.f32.mrf.mxu0
    %v6740 = vadd.f32 %v6720, %v6739
    %6741 = vdwg.mxu0
    %6742 = vmatpush.msra.mxu0 %v6232
    %6743 = vmatpush.msra.mxu0 %v6224
    %6744 = vmatpush.msra.mxu0 %v6216
    %6745 = vmatpush.msra.mxu0 %v6208
    %6746 = vmatpush.msra.mxu0 %v6200
    %6747 = vmatpush.msra.mxu0 %v6192
    %6748 = vmatpush.msra.mxu0 %v6184
    %6749 = vmatpush.msra.mxu0 %v6176
    %6750 = vmatpush.msra.mxu0 %v6168
    %6751 = vmatpush.msra.mxu0 %v6160
    %6752 = vmatpush.msra.mxu0 %v6152
    %6753 = vmatpush.msra.mxu0 %v6144
    %6754 = vmatpush.msra.mxu0 %v6136
    %6755 = vmatpush.msra.mxu0 %v6128
    %6756 = vmatpush.msra.mxu0 %v6120
    %6757 = vmatpush.msra.mxu0 %v6112
    %6758 = vmatmul.f32.gmra.mxu0 %v5850
    %v6759 = vpop.f32.mrf.mxu0
    %v6760 = vadd.f32 %v6740, %v6759
    %6761 = vdwg.mxu0
    %6762 = vmatpush.msra.mxu0 %v6360
    %6763 = vmatpush.msra.mxu0 %v6352
    %6764 = vmatpush.msra.mxu0 %v6344
    %6765 = vmatpush.msra.mxu0 %v6336
    %6766 = vmatpush.msra.mxu0 %v6328
    %6767 = vmatpush.msra.mxu0 %v6320
    %6768 = vmatpush.msra.mxu0 %v6312
    %6769 = vmatpush.msra.mxu0 %v6304
    %6770 = vmatpush.msra.mxu0 %v6296
    %6771 = vmatpush.msra.mxu0 %v6288
    %6772 = vmatpush.msra.mxu0 %v6280
    %6773 = vmatpush.msra.mxu0 %v6272
    %6774 = vmatpush.msra.mxu0 %v6264
    %6775 = vmatpush.msra.mxu0 %v6256
    %6776 = vmatpush.msra.mxu0 %v6248
    %6777 = vmatpush.msra.mxu0 %v6240
    %6778 = vmatmul.f32.gmra.mxu0 %v5851
    %v6779 = vpop.f32.mrf.mxu0
    %v6780 = vadd.f32 %v6760, %v6779
    %6781 = vdwg.mxu0
    %6782 = vmatpush.msra.mxu0 %v5977
    %6783 = vmatpush.msra.mxu0 %v5969
    %6784 = vmatpush.msra.mxu0 %v5961
    %6785 = vmatpush.msra.mxu0 %v5953
    %6786 = vmatpush.msra.mxu0 %v5945
    %6787 = vmatpush.msra.mxu0 %v5937
    %6788 = vmatpush.msra.mxu0 %v5929
    %6789 = vmatpush.msra.mxu0 %v5921
    %6790 = vmatpush.msra.mxu0 %v5913
    %6791 = vmatpush.msra.mxu0 %v5905
    %6792 = vmatpush.msra.mxu0 %v5897
    %6793 = vmatpush.msra.mxu0 %v5889
    %6794 = vmatpush.msra.mxu0 %v5881
    %6795 = vmatpush.msra.mxu0 %v5873
    %6796 = vmatpush.msra.mxu0 %v5865
    %6797 = vmatpush.msra.mxu0 %v5857
    %6798 = vmatmul.f32.gmra.mxu0 %v5848
    %v6799 = vpop.f32.mrf.mxu0
    %v6800 = vadd.f32 %v6371, %v6799
    %6801 = vdwg.mxu0
    %6802 = vmatpush.msra.mxu0 %v6105
    %6803 = vmatpush.msra.mxu0 %v6097
    %6804 = vmatpush.msra.mxu0 %v6089
    %6805 = vmatpush.msra.mxu0 %v6081
    %6806 = vmatpush.msra.mxu0 %v6073
    %6807 = vmatpush.msra.mxu0 %v6065
    %6808 = vmatpush.msra.mxu0 %v6057
    %6809 = vmatpush.msra.mxu0 %v6049
    %6810 = vmatpush.msra.mxu0 %v6041
    %6811 = vmatpush.msra.mxu0 %v6033
    %6812 = vmatpush.msra.mxu0 %v6025
    %6813 = vmatpush.msra.mxu0 %v6017
    %6814 = vmatpush.msra.mxu0 %v6009
    %6815 = vmatpush.msra.mxu0 %v6001
    %6816 = vmatpush.msra.mxu0 %v5993
    %6817 = vmatpush.msra.mxu0 %v5985
    %6818 = vmatmul.f32.gmra.mxu0 %v5849
    %v6819 = vpop.f32.mrf.mxu0
    %v6820 = vadd.f32 %v6800, %v6819
    %6821 = vdwg.mxu0
    %6822 = vmatpush.msra.mxu0 %v6233
    %6823 = vmatpush.msra.mxu0 %v6225
    %6824 = vmatpush.msra.mxu0 %v6217
    %6825 = vmatpush.msra.mxu0 %v6209
    %6826 = vmatpush.msra.mxu0 %v6201
    %6827 = vmatpush.msra.mxu0 %v6193
    %6828 = vmatpush.msra.mxu0 %v6185
    %6829 = vmatpush.msra.mxu0 %v6177
    %6830 = vmatpush.msra.mxu0 %v6169
    %6831 = vmatpush.msra.mxu0 %v6161
    %6832 = vmatpush.msra.mxu0 %v6153
    %6833 = vmatpush.msra.mxu0 %v6145
    %6834 = vmatpush.msra.mxu0 %v6137
    %6835 = vmatpush.msra.mxu0 %v6129
    %6836 = vmatpush.msra.mxu0 %v6121
    %6837 = vmatpush.msra.mxu0 %v6113
    %6838 = vmatmul.f32.gmra.mxu0 %v5850
    %v6839 = vpop.f32.mrf.mxu0
    %v6840 = vadd.f32 %v6820, %v6839
    %6841 = vdwg.mxu0
    %6842 = vmatpush.msra.mxu0 %v6361
    %6843 = vmatpush.msra.mxu0 %v6353
    %6844 = vmatpush.msra.mxu0 %v6345
    %6845 = vmatpush.msra.mxu0 %v6337
    %6846 = vmatpush.msra.mxu0 %v6329
    %6847 = vmatpush.msra.mxu0 %v6321
    %6848 = vmatpush.msra.mxu0 %v6313
    %6849 = vmatpush.msra.mxu0 %v6305
    %6850 = vmatpush.msra.mxu0 %v6297
    %6851 = vmatpush.msra.mxu0 %v6289
    %6852 = vmatpush.msra.mxu0 %v6281
    %6853 = vmatpush.msra.mxu0 %v6273
    %6854 = vmatpush.msra.mxu0 %v6265
    %6855 = vmatpush.msra.mxu0 %v6257
    %6856 = vmatpush.msra.mxu0 %v6249
    %6857 = vmatpush.msra.mxu0 %v6241
    %6858 = vmatmul.f32.gmra.mxu0 %v5851
    %v6859 = vpop.f32.mrf.mxu0
    %v6860 = vadd.f32 %v6840, %v6859
    %6861 = vdwg.mxu0
    %6862 = vmatpush.msra.mxu0 %v5978
    %6863 = vmatpush.msra.mxu0 %v5970
    %6864 = vmatpush.msra.mxu0 %v5962
    %6865 = vmatpush.msra.mxu0 %v5954
    %6866 = vmatpush.msra.mxu0 %v5946
    %6867 = vmatpush.msra.mxu0 %v5938
    %6868 = vmatpush.msra.mxu0 %v5930
    %6869 = vmatpush.msra.mxu0 %v5922
    %6870 = vmatpush.msra.mxu0 %v5914
    %6871 = vmatpush.msra.mxu0 %v5906
    %6872 = vmatpush.msra.mxu0 %v5898
    %6873 = vmatpush.msra.mxu0 %v5890
    %6874 = vmatpush.msra.mxu0 %v5882
    %6875 = vmatpush.msra.mxu0 %v5874
    %6876 = vmatpush.msra.mxu0 %v5866
    %6877 = vmatpush.msra.mxu0 %v5858
    %6878 = vmatmul.f32.gmra.mxu0 %v5848
    %v6879 = vpop.f32.mrf.mxu0
    %v6880 = vadd.f32 %v6372, %v6879
    %6881 = vdwg.mxu0
    %6882 = vmatpush.msra.mxu0 %v6106
    %6883 = vmatpush.msra.mxu0 %v6098
    %6884 = vmatpush.msra.mxu0 %v6090
    %6885 = vmatpush.msra.mxu0 %v6082
    %6886 = vmatpush.msra.mxu0 %v6074
    %6887 = vmatpush.msra.mxu0 %v6066
    %6888 = vmatpush.msra.mxu0 %v6058
    %6889 = vmatpush.msra.mxu0 %v6050
    %6890 = vmatpush.msra.mxu0 %v6042
    %6891 = vmatpush.msra.mxu0 %v6034
    %6892 = vmatpush.msra.mxu0 %v6026
    %6893 = vmatpush.msra.mxu0 %v6018
    %6894 = vmatpush.msra.mxu0 %v6010
    %6895 = vmatpush.msra.mxu0 %v6002
    %6896 = vmatpush.msra.mxu0 %v5994
    %6897 = vmatpush.msra.mxu0 %v5986
    %6898 = vmatmul.f32.gmra.mxu0 %v5849
    %v6899 = vpop.f32.mrf.mxu0
    %v6900 = vadd.f32 %v6880, %v6899
    %6901 = vdwg.mxu0
    %6902 = vmatpush.msra.mxu0 %v6234
    %6903 = vmatpush.msra.mxu0 %v6226
    %6904 = vmatpush.msra.mxu0 %v6218
    %6905 = vmatpush.msra.mxu0 %v6210
    %6906 = vmatpush.msra.mxu0 %v6202
    %6907 = vmatpush.msra.mxu0 %v6194
    %6908 = vmatpush.msra.mxu0 %v6186
    %6909 = vmatpush.msra.mxu0 %v6178
    %6910 = vmatpush.msra.mxu0 %v6170
    %6911 = vmatpush.msra.mxu0 %v6162
    %6912 = vmatpush.msra.mxu0 %v6154
    %6913 = vmatpush.msra.mxu0 %v6146
    %6914 = vmatpush.msra.mxu0 %v6138
    %6915 = vmatpush.msra.mxu0 %v6130
    %6916 = vmatpush.msra.mxu0 %v6122
    %6917 = vmatpush.msra.mxu0 %v6114
    %6918 = vmatmul.f32.gmra.mxu0 %v5850
    %v6919 = vpop.f32.mrf.mxu0
    %v6920 = vadd.f32 %v6900, %v6919
    %6921 = vdwg.mxu0
    %6922 = vmatpush.msra.mxu0 %v6362
    %6923 = vmatpush.msra.mxu0 %v6354
    %6924 = vmatpush.msra.mxu0 %v6346
    %6925 = vmatpush.msra.mxu0 %v6338
    %6926 = vmatpush.msra.mxu0 %v6330
    %6927 = vmatpush.msra.mxu0 %v6322
    %6928 = vmatpush.msra.mxu0 %v6314
    %6929 = vmatpush.msra.mxu0 %v6306
    %6930 = vmatpush.msra.mxu0 %v6298
    %6931 = vmatpush.msra.mxu0 %v6290
    %6932 = vmatpush.msra.mxu0 %v6282
    %6933 = vmatpush.msra.mxu0 %v6274
    %6934 = vmatpush.msra.mxu0 %v6266
    %6935 = vmatpush.msra.mxu0 %v6258
    %6936 = vmatpush.msra.mxu0 %v6250
    %6937 = vmatpush.msra.mxu0 %v6242
    %6938 = vmatmul.f32.gmra.mxu0 %v5851
    %v6939 = vpop.f32.mrf.mxu0
    %v6940 = vadd.f32 %v6920, %v6939
    %6941 = vdwg.mxu0
    %6942 = vmatpush.msra.mxu0 %v5979
    %6943 = vmatpush.msra.mxu0 %v5971
    %6944 = vmatpush.msra.mxu0 %v5963
    %6945 = vmatpush.msra.mxu0 %v5955
    %6946 = vmatpush.msra.mxu0 %v5947
    %6947 = vmatpush.msra.mxu0 %v5939
    %6948 = vmatpush.msra.mxu0 %v5931
    %6949 = vmatpush.msra.mxu0 %v5923
    %6950 = vmatpush.msra.mxu0 %v5915
    %6951 = vmatpush.msra.mxu0 %v5907
    %6952 = vmatpush.msra.mxu0 %v5899
    %6953 = vmatpush.msra.mxu0 %v5891
    %6954 = vmatpush.msra.mxu0 %v5883
    %6955 = vmatpush.msra.mxu0 %v5875
    %6956 = vmatpush.msra.mxu0 %v5867
    %6957 = vmatpush.msra.mxu0 %v5859
    %6958 = vmatmul.f32.gmra.mxu0 %v5848
    %v6959 = vpop.f32.mrf.mxu0
    %v6960 = vadd.f32 %v6373, %v6959
    %6961 = vdwg.mxu0
    %6962 = vmatpush.msra.mxu0 %v6107
    %6963 = vmatpush.msra.mxu0 %v6099
    %6964 = vmatpush.msra.mxu0 %v6091
    %6965 = vmatpush.msra.mxu0 %v6083
    %6966 = vmatpush.msra.mxu0 %v6075
    %6967 = vmatpush.msra.mxu0 %v6067
    %6968 = vmatpush.msra.mxu0 %v6059
    %6969 = vmatpush.msra.mxu0 %v6051
    %6970 = vmatpush.msra.mxu0 %v6043
    %6971 = vmatpush.msra.mxu0 %v6035
    %6972 = vmatpush.msra.mxu0 %v6027
    %6973 = vmatpush.msra.mxu0 %v6019
    %6974 = vmatpush.msra.mxu0 %v6011
    %6975 = vmatpush.msra.mxu0 %v6003
    %6976 = vmatpush.msra.mxu0 %v5995
    %6977 = vmatpush.msra.mxu0 %v5987
    %6978 = vmatmul.f32.gmra.mxu0 %v5849
    %v6979 = vpop.f32.mrf.mxu0
    %v6980 = vadd.f32 %v6960, %v6979
    %6981 = vdwg.mxu0
    %6982 = vmatpush.msra.mxu0 %v6235
    %6983 = vmatpush.msra.mxu0 %v6227
    %6984 = vmatpush.msra.mxu0 %v6219
    %6985 = vmatpush.msra.mxu0 %v6211
    %6986 = vmatpush.msra.mxu0 %v6203
    %6987 = vmatpush.msra.mxu0 %v6195
    %6988 = vmatpush.msra.mxu0 %v6187
    %6989 = vmatpush.msra.mxu0 %v6179
    %6990 = vmatpush.msra.mxu0 %v6171
    %6991 = vmatpush.msra.mxu0 %v6163
    %6992 = vmatpush.msra.mxu0 %v6155
    %6993 = vmatpush.msra.mxu0 %v6147
    %6994 = vmatpush.msra.mxu0 %v6139
    %6995 = vmatpush.msra.mxu0 %v6131
    %6996 = vmatpush.msra.mxu0 %v6123
    %6997 = vmatpush.msra.mxu0 %v6115
    %6998 = vmatmul.f32.gmra.mxu0 %v5850
    %v6999 = vpop.f32.mrf.mxu0
    %v7000 = vadd.f32 %v6980, %v6999
    %7001 = vdwg.mxu0
    %7002 = vmatpush.msra.mxu0 %v6363
    %7003 = vmatpush.msra.mxu0 %v6355
    %7004 = vmatpush.msra.mxu0 %v6347
    %7005 = vmatpush.msra.mxu0 %v6339
    %7006 = vmatpush.msra.mxu0 %v6331
    %7007 = vmatpush.msra.mxu0 %v6323
    %7008 = vmatpush.msra.mxu0 %v6315
    %7009 = vmatpush.msra.mxu0 %v6307
    %7010 = vmatpush.msra.mxu0 %v6299
    %7011 = vmatpush.msra.mxu0 %v6291
    %7012 = vmatpush.msra.mxu0 %v6283
    %7013 = vmatpush.msra.mxu0 %v6275
    %7014 = vmatpush.msra.mxu0 %v6267
    %7015 = vmatpush.msra.mxu0 %v6259
    %7016 = vmatpush.msra.mxu0 %v6251
    %7017 = vmatpush.msra.mxu0 %v6243
    %7018 = vmatmul.f32.gmra.mxu0 %v5851
    %v7019 = vpop.f32.mrf.mxu0
    %v7020 = vadd.f32 %v7000, %v7019
    %7021 = vdwg.mxu0
    %v7022 = vxor.u32 %v6460, 2147483648
    %v7023 = vxor.u32 %v6540, 2147483648
    %v7024 = vxor.u32 %v6620, 2147483648
    %v7025 = vxor.u32 %v6700, 2147483648
    %v7026 = vxor.u32 %v6780, 2147483648
    %v7027 = vxor.u32 %v6860, 2147483648
    %v7028 = vxor.u32 %v6940, 2147483648
    %v7029 = vxor.u32 %v7020, 2147483648
    %v7030 = vmul.f32 %v7022, 1.442695
    %v7031 = vpow.pop %v7030
    %v7032 = vmul.f32 %v7023, 1.442695
    %v7033 = vpow.pop %v7032
    %v7034 = vmul.f32 %v7024, 1.442695
    %v7035 = vpow.pop %v7034
    %v7036 = vmul.f32 %v7025, 1.442695
    %v7037 = vpow.pop %v7036
    %v7038 = vmul.f32 %v7026, 1.442695
    %v7039 = vpow.pop %v7038
    %v7040 = vmul.f32 %v7027, 1.442695
    %v7041 = vpow.pop %v7040
    %v7042 = vmul.f32 %v7028, 1.442695
    %v7043 = vpow.pop %v7042
    %v7044 = vmul.f32 %v7029, 1.442695
    %v7045 = vpow.pop %v7044
    %v7046 = vadd.f32 %v7031, 1.0
    %v7047 = vadd.f32 %v7033, 1.0
    %v7048 = vadd.f32 %v7035, 1.0
    %v7049 = vadd.f32 %v7037, 1.0
    %v7050 = vadd.f32 %v7039, 1.0
    %v7051 = vadd.f32 %v7041, 1.0
    %v7052 = vadd.f32 %v7043, 1.0
    %v7053 = vadd.f32 %v7045, 1.0
    %v7054 = vrcp.pop %v7046
    %v7055 = vmul.f32 %v7046, %v7054
    %v7056 = vsub.f32 1.0, %v7055
    %v7057 = vmul.f32 %v7054, %v7056
    %v7058 = vadd.f32 %v7054, %v7057
    %vm7059 = vweird.f32 %v7046
    %vm7060 = vweird.f32 %v7054
    %vm7061 = vmor %vm7059, %vm7060
    %v7062 = vsel %vm7061, %v7054, %v7058
    %v7063 = vand.u32 2147483647, %v7046
    %vm7064 = vcmp.eq.f32.partialorder %v7063, 8.507059e+37
    %v7065 = vand.u32 %v7046, 2147483648
    %v7066 = vor.u32 1.1754944e-38, %v7065
    %v7067 = vsel %vm7064, %v7066, %v7062
    %v7068 = vmul.f32 1.0, %v7067
    %v7069 = vrcp.pop %v7047
    %v7070 = vmul.f32 %v7047, %v7069
    %v7071 = vsub.f32 1.0, %v7070
    %v7072 = vmul.f32 %v7069, %v7071
    %v7073 = vadd.f32 %v7069, %v7072
    %vm7074 = vweird.f32 %v7047
    %vm7075 = vweird.f32 %v7069
    %vm7076 = vmor %vm7074, %vm7075
    %v7077 = vsel %vm7076, %v7069, %v7073
    %v7078 = vand.u32 2147483647, %v7047
    %vm7079 = vcmp.eq.f32.partialorder %v7078, 8.507059e+37
    %v7080 = vand.u32 %v7047, 2147483648
    %v7081 = vor.u32 1.1754944e-38, %v7080
    %v7082 = vsel %vm7079, %v7081, %v7077
    %v7083 = vmul.f32 1.0, %v7082
    %v7084 = vrcp.pop %v7048
    %v7085 = vmul.f32 %v7048, %v7084
    %v7086 = vsub.f32 1.0, %v7085
    %v7087 = vmul.f32 %v7084, %v7086
    %v7088 = vadd.f32 %v7084, %v7087
    %vm7089 = vweird.f32 %v7048
    %vm7090 = vweird.f32 %v7084
    %vm7091 = vmor %vm7089, %vm7090
    %v7092 = vsel %vm7091, %v7084, %v7088
    %v7093 = vand.u32 2147483647, %v7048
    %vm7094 = vcmp.eq.f32.partialorder %v7093, 8.507059e+37
    %v7095 = vand.u32 %v7048, 2147483648
    %v7096 = vor.u32 1.1754944e-38, %v7095
    %v7097 = vsel %vm7094, %v7096, %v7092
    %v7098 = vmul.f32 1.0, %v7097
    %v7099 = vrcp.pop %v7049
    %v7100 = vmul.f32 %v7049, %v7099
    %v7101 = vsub.f32 1.0, %v7100
    %v7102 = vmul.f32 %v7099, %v7101
    %v7103 = vadd.f32 %v7099, %v7102
    %vm7104 = vweird.f32 %v7049
    %vm7105 = vweird.f32 %v7099
    %vm7106 = vmor %vm7104, %vm7105
    %v7107 = vsel %vm7106, %v7099, %v7103
    %v7108 = vand.u32 2147483647, %v7049
    %vm7109 = vcmp.eq.f32.partialorder %v7108, 8.507059e+37
    %v7110 = vand.u32 %v7049, 2147483648
    %v7111 = vor.u32 1.1754944e-38, %v7110
    %v7112 = vsel %vm7109, %v7111, %v7107
    %v7113 = vmul.f32 1.0, %v7112
    %v7114 = vrcp.pop %v7050
    %v7115 = vmul.f32 %v7050, %v7114
    %v7116 = vsub.f32 1.0, %v7115
    %v7117 = vmul.f32 %v7114, %v7116
    %v7118 = vadd.f32 %v7114, %v7117
    %vm7119 = vweird.f32 %v7050
    %vm7120 = vweird.f32 %v7114
    %vm7121 = vmor %vm7119, %vm7120
    %v7122 = vsel %vm7121, %v7114, %v7118
    %v7123 = vand.u32 2147483647, %v7050
    %vm7124 = vcmp.eq.f32.partialorder %v7123, 8.507059e+37
    %v7125 = vand.u32 %v7050, 2147483648
    %v7126 = vor.u32 1.1754944e-38, %v7125
    %v7127 = vsel %vm7124, %v7126, %v7122
    %v7128 = vmul.f32 1.0, %v7127
    %v7129 = vrcp.pop %v7051
    %v7130 = vmul.f32 %v7051, %v7129
    %v7131 = vsub.f32 1.0, %v7130
    %v7132 = vmul.f32 %v7129, %v7131
    %v7133 = vadd.f32 %v7129, %v7132
    %vm7134 = vweird.f32 %v7051
    %vm7135 = vweird.f32 %v7129
    %vm7136 = vmor %vm7134, %vm7135
    %v7137 = vsel %vm7136, %v7129, %v7133
    %v7138 = vand.u32 2147483647, %v7051
    %vm7139 = vcmp.eq.f32.partialorder %v7138, 8.507059e+37
    %v7140 = vand.u32 %v7051, 2147483648
    %v7141 = vor.u32 1.1754944e-38, %v7140
    %v7142 = vsel %vm7139, %v7141, %v7137
    %v7143 = vmul.f32 1.0, %v7142
    %v7144 = vrcp.pop %v7052
    %v7145 = vmul.f32 %v7052, %v7144
    %v7146 = vsub.f32 1.0, %v7145
    %v7147 = vmul.f32 %v7144, %v7146
    %v7148 = vadd.f32 %v7144, %v7147
    %vm7149 = vweird.f32 %v7052
    %vm7150 = vweird.f32 %v7144
    %vm7151 = vmor %vm7149, %vm7150
    %v7152 = vsel %vm7151, %v7144, %v7148
    %v7153 = vand.u32 2147483647, %v7052
    %vm7154 = vcmp.eq.f32.partialorder %v7153, 8.507059e+37
    %v7155 = vand.u32 %v7052, 2147483648
    %v7156 = vor.u32 1.1754944e-38, %v7155
    %v7157 = vsel %vm7154, %v7156, %v7152
    %v7158 = vmul.f32 1.0, %v7157
    %v7159 = vrcp.pop %v7053
    %v7160 = vmul.f32 %v7053, %v7159
    %v7161 = vsub.f32 1.0, %v7160
    %v7162 = vmul.f32 %v7159, %v7161
    %v7163 = vadd.f32 %v7159, %v7162
    %vm7164 = vweird.f32 %v7053
    %vm7165 = vweird.f32 %v7159
    %vm7166 = vmor %vm7164, %vm7165
    %v7167 = vsel %vm7166, %v7159, %v7163
    %v7168 = vand.u32 2147483647, %v7053
    %vm7169 = vcmp.eq.f32.partialorder %v7168, 8.507059e+37
    %v7170 = vand.u32 %v7053, 2147483648
    %v7171 = vor.u32 1.1754944e-38, %v7170
    %v7172 = vsel %vm7169, %v7171, %v7167
    %v7173 = vmul.f32 1.0, %v7172
    %7174 = vst [vmem:[#allocation14] sm:$0xff] %v7068
    %7175 = vst [vmem:[#allocation14 + $0x8] sm:$0xff] %v7083
    %7176 = vst [vmem:[#allocation14 + $0x10] sm:$0xff] %v7098
    %7177 = vst [vmem:[#allocation14 + $0x18] sm:$0xff] %v7113
    %7178 = vst [vmem:[#allocation15] sm:$0xff] %v7128
    %7179 = vst [vmem:[#allocation15 + $0x8] sm:$0xff] %v7143
    %7180 = vst [vmem:[#allocation15 + $0x10] sm:$0xff] %v7158
    %7181 = vst [vmem:[#allocation15 + $0x18] sm:$0xff] %v7173
    // Predicated region
    $region58: #{tpu_custom_call.1} parent=1 // pred_check
      _
    $region59: #{tpu_custom_call.1} parent=1 // pred_check_branch
      %7183 = sbr.rel (0) target = $region61
    $region60: #{tpu_custom_call.1} parent=1 // pred_region
      %7185 = vsyncadd [#allocation4], 0
      %s7187 = sshll.u32 [#allocation14], 4
      %s7188 = int_to_ptr.vmem [resolvable:$true] %s7187
      %s7189 = sshll.u32 %s7, 4
      %s7190 = int_to_ptr.hbm [resolvable:$true] %s7189
      %7192 = dma.vmem_to_hbm [thread:$0]  %s7188, 512, %s7190, [#allocation4]
    $region61: #{tpu_custom_call.1} parent=1 // pred_fallthru
      _
    // Predicated region
    $region62: #{tpu_custom_call.1} parent=1 // pred_check
      _
    $region63: #{tpu_custom_call.1} parent=1 // pred_check_branch
      %7194 = sbr.rel (0) target = $region65
    $region64: #{tpu_custom_call.1} parent=1 // pred_region
      %7196 = vsyncadd [#allocation16], 0
      %s7198 = sshll.u32 [#allocation15], 4
      %s7199 = int_to_ptr.vmem [resolvable:$true] %s7198
      %s7200 = sshll.u32 %s8, 4
      %s7201 = int_to_ptr.hbm [resolvable:$true] %s7200
      %7203 = dma.vmem_to_hbm [thread:$0]  %s7199, 512, %s7201, [#allocation16]
    $region65: #{tpu_custom_call.1} parent=1 // pred_fallthru
      _
    // Predicated region
    $region66: #{tpu_custom_call.1} parent=1 // pred_check
      _
    $region67: #{tpu_custom_call.1} parent=1 // pred_check_branch
      %7205 = sbr.rel (0) target = $region69
    $region68: #{tpu_custom_call.1} parent=1 // pred_region
      %7207 = dma.done [#allocation4], 512
    $region69: #{tpu_custom_call.1} parent=1 // pred_fallthru
      _
    // Predicated region
    $region70: #{tpu_custom_call.1} parent=1 // pred_check
      _
    $region71: #{tpu_custom_call.1} parent=1 // pred_check_branch
      %7209 = sbr.rel (0) target = $region73
    $region72: #{tpu_custom_call.1} parent=1 // pred_region
      %7211 = dma.done [#allocation16], 512
    $region73: #{tpu_custom_call.1} parent=1 // pred_fallthru
      _
    %7212 = vsyncpa [#allocation3], 1
    %7213 = vsyncpa [#allocation6], 1
    %7214 = vsyncpa [#allocation9], 1
    %7215 = vsyncpa [#allocation12], 1
    %7216 = vsyncpa [#allocation4], 1
    %7217 = vsyncpa [#allocation16], 1

</llo_original>
